<compile_context>
chip_gen: v6e
topology: v6e:2x2x1
jax: 0.10.0
libtpu: 0.0.40
codegen_flags: <defaults>
</compile_context>

<pallas_src>
import jax
import jax.numpy as jnp
from jax import lax
from jax.experimental import pallas as pl
from jax.experimental.pallas import tpu as pltpu

# ----------------------------- model dims (small, TPU-friendly) --------------
VOCAB_SIZE = 512
OUTPUT_SIZE = 512
EMBED_DIM = 128
HIDDEN_DIM = 128
N_LAYERS = 2
BATCH = 2
SEQ = 8


# ----------------------------- fused RNN kernel -------------------------------
def _rnn_fused_kernel(tok_ref, embed_ref,
                      wih0_ref, whh0_ref, b0_ref,
                      wih1_ref, whh1_ref, b1_ref,
                      h0_ref, c0_ref, fcw_ref, fcb_ref,
                      out_ref, hn_ref, cn_ref,
                      x_scratch, xg0_scratch):
    """tokens -> embeddings -> 2-layer LSTM -> FC(last hidden), one invocation."""
    B, T = tok_ref.shape
    H = HIDDEN_DIM

    # ---- 1. Embedding gather (tokens: SMEM scalars, table: VMEM (V,1,E)) ----
    for t in range(T):
        for b in range(B):
            x_scratch[pl.ds(t * B + b, 1), :] = embed_ref[tok_ref[b, t]]

    # ---- 2. Hoisted layer-0 input gates: one (T*B, E) @ (E, 4H) matmul ------
    wih0 = wih0_ref[...]                                        # (E, 4H) bf16
    xg_all = (jnp.dot(x_scratch[...].astype(jnp.bfloat16), wih0,
                      preferred_element_type=jnp.float32)
              + b0_ref[...])                                    # (T*B, 4H) f32
    for t in range(T):                    # static scatter -> time-major scratch
        xg0_scratch[t] = xg_all[t * B:(t + 1) * B, :]

    # ---- 3. Recurrence (wavefront-interleaved, fully unrolled) --------------
    whh0 = whh0_ref[...]                                        # (H, 4H) bf16
    wih1 = wih1_ref[...]                                        # (H, 4H) bf16
    whh1 = whh1_ref[...]                                        # (H, 4H) bf16
    b1 = jnp.broadcast_to(b1_ref[...], (B, 4 * H))              # hoisted

    def sig(x):                  # one EUP push (tanh) instead of exp + recip
        return 0.5 * jnp.tanh(0.5 * x) + 0.5

    def act(gates, c):           # gate order i, f, g, o (PyTorch)
        i_g = sig(gates[:, 0 * H:1 * H])
        f_g = sig(gates[:, 1 * H:2 * H])
        g_g = jnp.tanh(gates[:, 2 * H:3 * H])
        o_g = sig(gates[:, 3 * H:4 * H])
        c_new = f_g * c + i_g * g_g
        h_new = o_g * jnp.tanh(c_new)
        return h_new, c_new

    def l0_cell(t, h0, c0):      # only the recurrent K=128 dot per step
        g = xg0_scratch[t] + jnp.dot(h0.astype(jnp.bfloat16), whh0,
                                     preferred_element_type=jnp.float32)
        return act(g, c0)

    def l1_cell(h0, h1, c1):     # two K=128 dots, no concat
        g = (jnp.dot(h0.astype(jnp.bfloat16), wih1,
                     preferred_element_type=jnp.float32)
             + jnp.dot(h1.astype(jnp.bfloat16), whh1,
                       preferred_element_type=jnp.float32)
             + b1)
        return act(g, c1)

    h1, c1 = h0_ref[1], c0_ref[1]
    h0, c0 = l0_cell(0, h0_ref[0], c0_ref[0])        # prologue: layer0 @ t=0

    def step(t, carry):
        # layer1(t-1) and layer0(t) both depend only on h0(t-1) -> independent.
        h0p, c0p, h1p, c1p = carry
        h1n, c1n = l1_cell(h0p, h1p, c1p)            # layer1 @ t-1
        h0n, c0n = l0_cell(t, h0p, c0p)              # layer0 @ t
        return (h0n, c0n, h1n, c1n)

    h0, c0, h1, c1 = lax.fori_loop(1, T, step, (h0, c0, h1, c1), unroll=True)
    h1, c1 = l1_cell(h0, h1, c1)                     # epilogue: layer1 @ T-1

    # Final states written exactly once.
    hn_ref[0] = h0
    hn_ref[1] = h1
    cn_ref[0] = c0
    cn_ref[1] = c1

    # TODO(synk): nn.Dropout(0.5) treated as eval-mode identity (deterministic);
    # with identity dropout fc(last hidden) == select-last(fc(all steps)).
    out_ref[...] = (jnp.dot(h1.astype(jnp.bfloat16), fcw_ref[...],
                            preferred_element_type=jnp.float32) + fcb_ref[...])


def rnn_fused(tokens, embed, wih0, whh0, b0, wih1, whh1, b1, h0, c0, fcw, fcb):
    """tokens: (B, T) int32.  Returns (out (B,O), h_n (L,B,H), c_n (L,B,H))."""
    B, T = tokens.shape
    H = HIDDEN_DIM
    E = embed.shape[-1]
    O = fcw.shape[1]
    vmem = pl.BlockSpec(memory_space=pltpu.MemorySpace.VMEM)
    smem = pl.BlockSpec(memory_space=pltpu.MemorySpace.SMEM)
    return pl.pallas_call(
        _rnn_fused_kernel,
        out_shape=(jax.ShapeDtypeStruct((B, O), jnp.float32),
                   jax.ShapeDtypeStruct((N_LAYERS, B, H), jnp.float32),
                   jax.ShapeDtypeStruct((N_LAYERS, B, H), jnp.float32)),
        in_specs=[smem,                      # tokens
                  vmem,                      # embed table (V, 1, E)
                  vmem, vmem, vmem,          # wih0, whh0, b0
                  vmem, vmem, vmem,          # wih1, whh1, b1
                  vmem, vmem,                # h0, c0
                  vmem, vmem],               # fcw, fcb
        out_specs=(vmem, vmem, vmem),
        scratch_shapes=[pltpu.VMEM((T * B, E), jnp.float32),        # gathered x
                        pltpu.VMEM((T, B, 4 * H), jnp.float32)],    # input gates
    )(tokens, embed, wih0, whh0, b0, wih1, whh1, b1, h0, c0, fcw, fcb)


# ----------------------------- parameter init ---------------------------------
def init_params(key):
    ks = jax.random.split(key, 11)
    params = {}
    # Table stored (V, 1, E) so the in-kernel dynamic row index hits an untiled dim.
    params["embed"] = jax.random.normal(ks[0], (VOCAB_SIZE, 1, EMBED_DIM),
                                        jnp.float32)
    bound = float(HIDDEN_DIM) ** -0.5
    for l in range(N_LAYERS):
        in_dim = EMBED_DIM if l == 0 else HIDDEN_DIM
        k0, k1, k2, k3 = ks[1 + 4 * l:5 + 4 * l]
        # PyTorch gate order i, f, g, o; stored pre-transposed, bf16 for the MXU.
        wihT = jax.random.uniform(k0, (in_dim, 4 * HIDDEN_DIM), jnp.float32,
                                  -bound, bound)
        whhT = jax.random.uniform(k1, (HIDDEN_DIM, 4 * HIDDEN_DIM), jnp.float32,
                                  -bound, bound)
        b_ih = jax.random.uniform(k2, (4 * HIDDEN_DIM,), jnp.float32,
                                  -bound, bound)
        b_hh = jax.random.uniform(k3, (4 * HIDDEN_DIM,), jnp.float32,
                                  -bound, bound)
        params[f"wih_{l}"] = wihT.astype(jnp.bfloat16)
        params[f"whh_{l}"] = whhT.astype(jnp.bfloat16)
        params[f"b_{l}"] = (b_ih + b_hh).reshape(1, 4 * HIDDEN_DIM)  # f32
    params["fcT"] = jax.random.uniform(ks[9], (HIDDEN_DIM, OUTPUT_SIZE),
                                       jnp.float32, -bound,
                                       bound).astype(jnp.bfloat16)
    params["fcb"] = jax.random.uniform(ks[10], (1, OUTPUT_SIZE), jnp.float32,
                                       -bound, bound)
    return params


# ----------------------------- forward (mirrors RNN.forward) ------------------
@jax.jit
def rnn_forward(tokens, hidden, params):
    """tokens: (B, T) int32; hidden = (h0, c0), each (N_LAYERS, B, H)."""
    h0_all, c0_all = hidden
    out, h_n, c_n = rnn_fused(tokens, params["embed"],
                              params["wih_0"], params["whh_0"], params["b_0"],
                              params["wih_1"], params["whh_1"], params["b_1"],
                              h0_all, c0_all,
                              params["fcT"], params["fcb"])
    return out, (h_n, c_n)


# ----------------------------- pure-JAX reference (f32) -----------------------
def _ref_forward(tokens, hidden, params):
    h0_all, c0_all = hidden
    emb = params["embed"].reshape(VOCAB_SIZE, EMBED_DIM)
    x = jnp.take(emb, tokens, axis=0)                 # (B, T, E)
    H = HIDDEN_DIM
    h_fin, c_fin = [], []
    for l in range(N_LAYERS):
        wih = params[f"wih_{l}"].astype(jnp.float32)
        whh = params[f"whh_{l}"].astype(jnp.float32)
        b = params[f"b_{l}"]
        h, c = h0_all[l], c0_all[l]
        ys = []
        for t in range(x.shape[1]):
            gates = x[:, t] @ wih + h @ whh + b
            i = jax.nn.sigmoid(gates[:, :H])
            f = jax.nn.sigmoid(gates[:, H:2 * H])
            g = jnp.tanh(gates[:, 2 * H:3 * H])
            o = jax.nn.sigmoid(gates[:, 3 * H:])
            c = f * c + i * g
            h = o * jnp.tanh(c)
            ys.append(h)
        x = jnp.stack(ys, axis=1)
        h_fin.append(h)
        c_fin.append(c)
    out = x[:, -1] @ params["fcT"].astype(jnp.float32) + params["fcb"]
    return out, (jnp.stack(h_fin), jnp.stack(c_fin))


# ----------------------------- main --------------------------------------------
if __name__ == "__main__":
    key = jax.random.PRNGKey(0)
    k_param, k_tok = jax.random.split(key)
    params = init_params(k_param)

    tokens = jax.random.randint(k_tok, (BATCH, SEQ), 0, VOCAB_SIZE, jnp.int32)
    hidden = (jnp.zeros((N_LAYERS, BATCH, HIDDEN_DIM), jnp.float32),
              jnp.zeros((N_LAYERS, BATCH, HIDDEN_DIM), jnp.float32))

    out, (h_n, c_n) = rnn_forward(tokens, hidden, params)
    jax.block_until_ready((out, h_n, c_n))

    # Correctness check vs. pure-JAX f32 reference (bf16 matmuls -> loose tol).
    ref_out, (ref_h, ref_c) = _ref_forward(tokens, hidden, params)
    assert out.shape == (BATCH, OUTPUT_SIZE)
    assert h_n.shape == (N_LAYERS, BATCH, HIDDEN_DIM)
    assert c_n.shape == (N_LAYERS, BATCH, HIDDEN_DIM)
    assert jnp.allclose(out, ref_out, atol=5e-2, rtol=5e-2)
    assert jnp.allclose(h_n, ref_h, atol=5e-2, rtol=5e-2)
    assert jnp.allclose(c_n, ref_c, atol=5e-2, rtol=5e-2)

    print("KERNEL_OK")
</pallas_src>

<mosaic_0001>
module attributes {stable_mosaic.version = 11 : i64} {
  func.func @_rnn_fused_kernel(%arg0: memref<2x8xi32, #tpu.memory_space<smem>>, %arg1: memref<512x1x128xf32, #tpu.memory_space<vmem>>, %arg2: memref<128x512xbf16, #tpu.memory_space<vmem>>, %arg3: memref<128x512xbf16, #tpu.memory_space<vmem>>, %arg4: memref<1x512xf32, #tpu.memory_space<vmem>>, %arg5: memref<128x512xbf16, #tpu.memory_space<vmem>>, %arg6: memref<128x512xbf16, #tpu.memory_space<vmem>>, %arg7: memref<1x512xf32, #tpu.memory_space<vmem>>, %arg8: memref<2x2x128xf32, #tpu.memory_space<vmem>>, %arg9: memref<2x2x128xf32, #tpu.memory_space<vmem>>, %arg10: memref<128x512xbf16, #tpu.memory_space<vmem>>, %arg11: memref<1x512xf32, #tpu.memory_space<vmem>>, %arg12: memref<2x512xf32, #tpu.memory_space<vmem>>, %arg13: memref<2x2x128xf32, #tpu.memory_space<vmem>>, %arg14: memref<2x2x128xf32, #tpu.memory_space<vmem>>, %arg15: memref<16x128xf32, #tpu.memory_space<vmem>>, %arg16: memref<8x2x512xf32, #tpu.memory_space<vmem>>) attributes {dimension_semantics = [], scalar_prefetch = 0 : i64, scratch_operands = 2 : i64, tpu.core_type = #tpu.core_type<tc>} {
    %c0 = arith.constant 0 : index
    %c0_0 = arith.constant 0 : index
    %0 = memref.load %arg0[%c0, %c0_0] : memref<2x8xi32, #tpu.memory_space<smem>>
    %1 = arith.index_cast %0 : i32 to index
    %c0_1 = arith.constant 0 : index
    %c0_2 = arith.constant 0 : index
    %2 = vector.load %arg1[%1, %c0_1, %c0_2] : memref<512x1x128xf32, #tpu.memory_space<vmem>>, vector<1x1x128xf32>
    %3 = vector.shape_cast %2 : vector<1x1x128xf32> to vector<1x128xf32>
    %c0_3 = arith.constant 0 : index
    %c0_4 = arith.constant 0 : index
    %4 = vector.load %arg15[%c0_3, %c0_4] : memref<16x128xf32, #tpu.memory_space<vmem>>, vector<1x128xf32>
    tpu.vector_store %arg15[%c0_3, %c0_4], %3 {strides = array<i32>} : memref<16x128xf32, #tpu.memory_space<vmem>>, vector<1x128xf32>,
    %c1 = arith.constant 1 : index
    %c0_5 = arith.constant 0 : index
    %5 = memref.load %arg0[%c1, %c0_5] : memref<2x8xi32, #tpu.memory_space<smem>>
    %6 = arith.index_cast %5 : i32 to index
    %c0_6 = arith.constant 0 : index
    %c0_7 = arith.constant 0 : index
    %7 = vector.load %arg1[%6, %c0_6, %c0_7] : memref<512x1x128xf32, #tpu.memory_space<vmem>>, vector<1x1x128xf32>
    %8 = vector.shape_cast %7 : vector<1x1x128xf32> to vector<1x128xf32>
    %c1_8 = arith.constant 1 : index
    %c0_9 = arith.constant 0 : index
    %9 = vector.load %arg15[%c1_8, %c0_9] : memref<16x128xf32, #tpu.memory_space<vmem>>, vector<1x128xf32>
    tpu.vector_store %arg15[%c1_8, %c0_9], %8 {strides = array<i32>} : memref<16x128xf32, #tpu.memory_space<vmem>>, vector<1x128xf32>,
    %c0_10 = arith.constant 0 : index
    %c1_11 = arith.constant 1 : index
    %10 = memref.load %arg0[%c0_10, %c1_11] : memref<2x8xi32, #tpu.memory_space<smem>>
    %11 = arith.index_cast %10 : i32 to index
    %c0_12 = arith.constant 0 : index
    %c0_13 = arith.constant 0 : index
    %12 = vector.load %arg1[%11, %c0_12, %c0_13] : memref<512x1x128xf32, #tpu.memory_space<vmem>>, vector<1x1x128xf32>
    %13 = vector.shape_cast %12 : vector<1x1x128xf32> to vector<1x128xf32>
    %c2 = arith.constant 2 : index
    %c0_14 = arith.constant 0 : index
    %14 = vector.load %arg15[%c2, %c0_14] : memref<16x128xf32, #tpu.memory_space<vmem>>, vector<1x128xf32>
    tpu.vector_store %arg15[%c2, %c0_14], %13 {strides = array<i32>} : memref<16x128xf32, #tpu.memory_space<vmem>>, vector<1x128xf32>,
    %c1_15 = arith.constant 1 : index
    %c1_16 = arith.constant 1 : index
    %15 = memref.load %arg0[%c1_15, %c1_16] : memref<2x8xi32, #tpu.memory_space<smem>>
    %16 = arith.index_cast %15 : i32 to index
    %c0_17 = arith.constant 0 : index
    %c0_18 = arith.constant 0 : index
    %17 = vector.load %arg1[%16, %c0_17, %c0_18] : memref<512x1x128xf32, #tpu.memory_space<vmem>>, vector<1x1x128xf32>
    %18 = vector.shape_cast %17 : vector<1x1x128xf32> to vector<1x128xf32>
    %c3 = arith.constant 3 : index
    %c0_19 = arith.constant 0 : index
    %19 = vector.load %arg15[%c3, %c0_19] : memref<16x128xf32, #tpu.memory_space<vmem>>, vector<1x128xf32>
    tpu.vector_store %arg15[%c3, %c0_19], %18 {strides = array<i32>} : memref<16x128xf32, #tpu.memory_space<vmem>>, vector<1x128xf32>,
    %c0_20 = arith.constant 0 : index
    %c2_21 = arith.constant 2 : index
    %20 = memref.load %arg0[%c0_20, %c2_21] : memref<2x8xi32, #tpu.memory_space<smem>>
    %21 = arith.index_cast %20 : i32 to index
    %c0_22 = arith.constant 0 : index
    %c0_23 = arith.constant 0 : index
    %22 = vector.load %arg1[%21, %c0_22, %c0_23] : memref<512x1x128xf32, #tpu.memory_space<vmem>>, vector<1x1x128xf32>
    %23 = vector.shape_cast %22 : vector<1x1x128xf32> to vector<1x128xf32>
    %c4 = arith.constant 4 : index
    %c0_24 = arith.constant 0 : index
    %24 = vector.load %arg15[%c4, %c0_24] : memref<16x128xf32, #tpu.memory_space<vmem>>, vector<1x128xf32>
    tpu.vector_store %arg15[%c4, %c0_24], %23 {strides = array<i32>} : memref<16x128xf32, #tpu.memory_space<vmem>>, vector<1x128xf32>,
    %c1_25 = arith.constant 1 : index
    %c2_26 = arith.constant 2 : index
    %25 = memref.load %arg0[%c1_25, %c2_26] : memref<2x8xi32, #tpu.memory_space<smem>>
    %26 = arith.index_cast %25 : i32 to index
    %c0_27 = arith.constant 0 : index
    %c0_28 = arith.constant 0 : index
    %27 = vector.load %arg1[%26, %c0_27, %c0_28] : memref<512x1x128xf32, #tpu.memory_space<vmem>>, vector<1x1x128xf32>
    %28 = vector.shape_cast %27 : vector<1x1x128xf32> to vector<1x128xf32>
    %c5 = arith.constant 5 : index
    %c0_29 = arith.constant 0 : index
    %29 = vector.load %arg15[%c5, %c0_29] : memref<16x128xf32, #tpu.memory_space<vmem>>, vector<1x128xf32>
    tpu.vector_store %arg15[%c5, %c0_29], %28 {strides = array<i32>} : memref<16x128xf32, #tpu.memory_space<vmem>>, vector<1x128xf32>,
    %c0_30 = arith.constant 0 : index
    %c3_31 = arith.constant 3 : index
    %30 = memref.load %arg0[%c0_30, %c3_31] : memref<2x8xi32, #tpu.memory_space<smem>>
    %31 = arith.index_cast %30 : i32 to index
    %c0_32 = arith.constant 0 : index
    %c0_33 = arith.constant 0 : index
    %32 = vector.load %arg1[%31, %c0_32, %c0_33] : memref<512x1x128xf32, #tpu.memory_space<vmem>>, vector<1x1x128xf32>
    %33 = vector.shape_cast %32 : vector<1x1x128xf32> to vector<1x128xf32>
    %c6 = arith.constant 6 : index
    %c0_34 = arith.constant 0 : index
    %34 = vector.load %arg15[%c6, %c0_34] : memref<16x128xf32, #tpu.memory_space<vmem>>, vector<1x128xf32>
    tpu.vector_store %arg15[%c6, %c0_34], %33 {strides = array<i32>} : memref<16x128xf32, #tpu.memory_space<vmem>>, vector<1x128xf32>,
    %c1_35 = arith.constant 1 : index
    %c3_36 = arith.constant 3 : index
    %35 = memref.load %arg0[%c1_35, %c3_36] : memref<2x8xi32, #tpu.memory_space<smem>>
    %36 = arith.index_cast %35 : i32 to index
    %c0_37 = arith.constant 0 : index
    %c0_38 = arith.constant 0 : index
    %37 = vector.load %arg1[%36, %c0_37, %c0_38] : memref<512x1x128xf32, #tpu.memory_space<vmem>>, vector<1x1x128xf32>
    %38 = vector.shape_cast %37 : vector<1x1x128xf32> to vector<1x128xf32>
    %c7 = arith.constant 7 : index
    %c0_39 = arith.constant 0 : index
    %39 = vector.load %arg15[%c7, %c0_39] : memref<16x128xf32, #tpu.memory_space<vmem>>, vector<1x128xf32>
    tpu.vector_store %arg15[%c7, %c0_39], %38 {strides = array<i32>} : memref<16x128xf32, #tpu.memory_space<vmem>>, vector<1x128xf32>,
    %c0_40 = arith.constant 0 : index
    %c4_41 = arith.constant 4 : index
    %40 = memref.load %arg0[%c0_40, %c4_41] : memref<2x8xi32, #tpu.memory_space<smem>>
    %41 = arith.index_cast %40 : i32 to index
    %c0_42 = arith.constant 0 : index
    %c0_43 = arith.constant 0 : index
    %42 = vector.load %arg1[%41, %c0_42, %c0_43] : memref<512x1x128xf32, #tpu.memory_space<vmem>>, vector<1x1x128xf32>
    %43 = vector.shape_cast %42 : vector<1x1x128xf32> to vector<1x128xf32>
    %c8 = arith.constant 8 : index
    %c0_44 = arith.constant 0 : index
    %44 = vector.load %arg15[%c8, %c0_44] : memref<16x128xf32, #tpu.memory_space<vmem>>, vector<1x128xf32>
    tpu.vector_store %arg15[%c8, %c0_44], %43 {strides = array<i32>} : memref<16x128xf32, #tpu.memory_space<vmem>>, vector<1x128xf32>,
    %c1_45 = arith.constant 1 : index
    %c4_46 = arith.constant 4 : index
    %45 = memref.load %arg0[%c1_45, %c4_46] : memref<2x8xi32, #tpu.memory_space<smem>>
    %46 = arith.index_cast %45 : i32 to index
    %c0_47 = arith.constant 0 : index
    %c0_48 = arith.constant 0 : index
    %47 = vector.load %arg1[%46, %c0_47, %c0_48] : memref<512x1x128xf32, #tpu.memory_space<vmem>>, vector<1x1x128xf32>
    %48 = vector.shape_cast %47 : vector<1x1x128xf32> to vector<1x128xf32>
    %c9 = arith.constant 9 : index
    %c0_49 = arith.constant 0 : index
    %49 = vector.load %arg15[%c9, %c0_49] : memref<16x128xf32, #tpu.memory_space<vmem>>, vector<1x128xf32>
    tpu.vector_store %arg15[%c9, %c0_49], %48 {strides = array<i32>} : memref<16x128xf32, #tpu.memory_space<vmem>>, vector<1x128xf32>,
    %c0_50 = arith.constant 0 : index
    %c5_51 = arith.constant 5 : index
    %50 = memref.load %arg0[%c0_50, %c5_51] : memref<2x8xi32, #tpu.memory_space<smem>>
    %51 = arith.index_cast %50 : i32 to index
    %c0_52 = arith.constant 0 : index
    %c0_53 = arith.constant 0 : index
    %52 = vector.load %arg1[%51, %c0_52, %c0_53] : memref<512x1x128xf32, #tpu.memory_space<vmem>>, vector<1x1x128xf32>
    %53 = vector.shape_cast %52 : vector<1x1x128xf32> to vector<1x128xf32>
    %c10 = arith.constant 10 : index
    %c0_54 = arith.constant 0 : index
    %54 = vector.load %arg15[%c10, %c0_54] : memref<16x128xf32, #tpu.memory_space<vmem>>, vector<1x128xf32>
    tpu.vector_store %arg15[%c10, %c0_54], %53 {strides = array<i32>} : memref<16x128xf32, #tpu.memory_space<vmem>>, vector<1x128xf32>,
    %c1_55 = arith.constant 1 : index
    %c5_56 = arith.constant 5 : index
    %55 = memref.load %arg0[%c1_55, %c5_56] : memref<2x8xi32, #tpu.memory_space<smem>>
    %56 = arith.index_cast %55 : i32 to index
    %c0_57 = arith.constant 0 : index
    %c0_58 = arith.constant 0 : index
    %57 = vector.load %arg1[%56, %c0_57, %c0_58] : memref<512x1x128xf32, #tpu.memory_space<vmem>>, vector<1x1x128xf32>
    %58 = vector.shape_cast %57 : vector<1x1x128xf32> to vector<1x128xf32>
    %c11 = arith.constant 11 : index
    %c0_59 = arith.constant 0 : index
    %59 = vector.load %arg15[%c11, %c0_59] : memref<16x128xf32, #tpu.memory_space<vmem>>, vector<1x128xf32>
    tpu.vector_store %arg15[%c11, %c0_59], %58 {strides = array<i32>} : memref<16x128xf32, #tpu.memory_space<vmem>>, vector<1x128xf32>,
    %c0_60 = arith.constant 0 : index
    %c6_61 = arith.constant 6 : index
    %60 = memref.load %arg0[%c0_60, %c6_61] : memref<2x8xi32, #tpu.memory_space<smem>>
    %61 = arith.index_cast %60 : i32 to index
    %c0_62 = arith.constant 0 : index
    %c0_63 = arith.constant 0 : index
    %62 = vector.load %arg1[%61, %c0_62, %c0_63] : memref<512x1x128xf32, #tpu.memory_space<vmem>>, vector<1x1x128xf32>
    %63 = vector.shape_cast %62 : vector<1x1x128xf32> to vector<1x128xf32>
    %c12 = arith.constant 12 : index
    %c0_64 = arith.constant 0 : index
    %64 = vector.load %arg15[%c12, %c0_64] : memref<16x128xf32, #tpu.memory_space<vmem>>, vector<1x128xf32>
    tpu.vector_store %arg15[%c12, %c0_64], %63 {strides = array<i32>} : memref<16x128xf32, #tpu.memory_space<vmem>>, vector<1x128xf32>,
    %c1_65 = arith.constant 1 : index
    %c6_66 = arith.constant 6 : index
    %65 = memref.load %arg0[%c1_65, %c6_66] : memref<2x8xi32, #tpu.memory_space<smem>>
    %66 = arith.index_cast %65 : i32 to index
    %c0_67 = arith.constant 0 : index
    %c0_68 = arith.constant 0 : index
    %67 = vector.load %arg1[%66, %c0_67, %c0_68] : memref<512x1x128xf32, #tpu.memory_space<vmem>>, vector<1x1x128xf32>
    %68 = vector.shape_cast %67 : vector<1x1x128xf32> to vector<1x128xf32>
    %c13 = arith.constant 13 : index
    %c0_69 = arith.constant 0 : index
    %69 = vector.load %arg15[%c13, %c0_69] : memref<16x128xf32, #tpu.memory_space<vmem>>, vector<1x128xf32>
    tpu.vector_store %arg15[%c13, %c0_69], %68 {strides = array<i32>} : memref<16x128xf32, #tpu.memory_space<vmem>>, vector<1x128xf32>,
    %c0_70 = arith.constant 0 : index
    %c7_71 = arith.constant 7 : index
    %70 = memref.load %arg0[%c0_70, %c7_71] : memref<2x8xi32, #tpu.memory_space<smem>>
    %71 = arith.index_cast %70 : i32 to index
    %c0_72 = arith.constant 0 : index
    %c0_73 = arith.constant 0 : index
    %72 = vector.load %arg1[%71, %c0_72, %c0_73] : memref<512x1x128xf32, #tpu.memory_space<vmem>>, vector<1x1x128xf32>
    %73 = vector.shape_cast %72 : vector<1x1x128xf32> to vector<1x128xf32>
    %c14 = arith.constant 14 : index
    %c0_74 = arith.constant 0 : index
    %74 = vector.load %arg15[%c14, %c0_74] : memref<16x128xf32, #tpu.memory_space<vmem>>, vector<1x128xf32>
    tpu.vector_store %arg15[%c14, %c0_74], %73 {strides = array<i32>} : memref<16x128xf32, #tpu.memory_space<vmem>>, vector<1x128xf32>,
    %c1_75 = arith.constant 1 : index
    %c7_76 = arith.constant 7 : index
    %75 = memref.load %arg0[%c1_75, %c7_76] : memref<2x8xi32, #tpu.memory_space<smem>>
    %76 = arith.index_cast %75 : i32 to index
    %c0_77 = arith.constant 0 : index
    %c0_78 = arith.constant 0 : index
    %77 = vector.load %arg1[%76, %c0_77, %c0_78] : memref<512x1x128xf32, #tpu.memory_space<vmem>>, vector<1x1x128xf32>
    %78 = vector.shape_cast %77 : vector<1x1x128xf32> to vector<1x128xf32>
    %c15 = arith.constant 15 : index
    %c0_79 = arith.constant 0 : index
    %79 = vector.load %arg15[%c15, %c0_79] : memref<16x128xf32, #tpu.memory_space<vmem>>, vector<1x128xf32>
    tpu.vector_store %arg15[%c15, %c0_79], %78 {strides = array<i32>} : memref<16x128xf32, #tpu.memory_space<vmem>>, vector<1x128xf32>,
    %c0_80 = arith.constant 0 : index
    %c0_81 = arith.constant 0 : index
    %80 = vector.load %arg2[%c0_80, %c0_81] : memref<128x512xbf16, #tpu.memory_space<vmem>>, vector<128x512xbf16>
    %c0_82 = arith.constant 0 : index
    %c0_83 = arith.constant 0 : index
    %81 = vector.load %arg15[%c0_82, %c0_83] : memref<16x128xf32, #tpu.memory_space<vmem>>, vector<16x128xf32>
    %82 = arith.truncf %81 : vector<16x128xf32> to vector<16x128xbf16>
    %cst = arith.constant dense<0.000000e+00> : vector<16x512xf32>
    %83 = tpu.matmul %82, %80, %cst {dimension_numbers = #tpu.dot_dimension_numbers<[1], [0], [0], [1], [0, 0, 1, 1], [], []>} : vector<16x128xbf16>, vector<128x512xbf16>, vector<16x512xf32> -> vector<16x512xf32>
    %c0_84 = arith.constant 0 : index
    %c0_85 = arith.constant 0 : index
    %84 = vector.load %arg4[%c0_84, %c0_85] : memref<1x512xf32, #tpu.memory_space<vmem>>, vector<1x512xf32>
    %85 = vector.broadcast %84 : vector<1x512xf32> to vector<16x512xf32>
    %86 = arith.addf %83, %85 : vector<16x512xf32>
    %87 = vector.extract_strided_slice %86 {offsets = [0, 0], sizes = [2, 512], strides = [1, 1]} : vector<16x512xf32> to vector<2x512xf32>
    %c0_86 = arith.constant 0 : index
    %c0_87 = arith.constant 0 : index
    %c0_88 = arith.constant 0 : index
    %88 = vector.load %arg16[%c0_86, %c0_87, %c0_88] : memref<8x2x512xf32, #tpu.memory_space<vmem>>, vector<1x2x512xf32>
    %89 = vector.shape_cast %88 : vector<1x2x512xf32> to vector<2x512xf32>
    %90 = vector.shape_cast %87 : vector<2x512xf32> to vector<1x2x512xf32>
    tpu.vector_store %arg16[%c0_86, %c0_87, %c0_88], %90 {strides = array<i32>} : memref<8x2x512xf32, #tpu.memory_space<vmem>>, vector<1x2x512xf32>,
    %91 = vector.extract_strided_slice %86 {offsets = [2, 0], sizes = [2, 512], strides = [1, 1]} : vector<16x512xf32> to vector<2x512xf32>
    %c1_89 = arith.constant 1 : index
    %c0_90 = arith.constant 0 : index
    %c0_91 = arith.constant 0 : index
    %92 = vector.load %arg16[%c1_89, %c0_90, %c0_91] : memref<8x2x512xf32, #tpu.memory_space<vmem>>, vector<1x2x512xf32>
    %93 = vector.shape_cast %92 : vector<1x2x512xf32> to vector<2x512xf32>
    %94 = vector.shape_cast %91 : vector<2x512xf32> to vector<1x2x512xf32>
    tpu.vector_store %arg16[%c1_89, %c0_90, %c0_91], %94 {strides = array<i32>} : memref<8x2x512xf32, #tpu.memory_space<vmem>>, vector<1x2x512xf32>,
    %95 = vector.extract_strided_slice %86 {offsets = [4, 0], sizes = [2, 512], strides = [1, 1]} : vector<16x512xf32> to vector<2x512xf32>
    %c2_92 = arith.constant 2 : index
    %c0_93 = arith.constant 0 : index
    %c0_94 = arith.constant 0 : index
    %96 = vector.load %arg16[%c2_92, %c0_93, %c0_94] : memref<8x2x512xf32, #tpu.memory_space<vmem>>, vector<1x2x512xf32>
    %97 = vector.shape_cast %96 : vector<1x2x512xf32> to vector<2x512xf32>
    %98 = vector.shape_cast %95 : vector<2x512xf32> to vector<1x2x512xf32>
    tpu.vector_store %arg16[%c2_92, %c0_93, %c0_94], %98 {strides = array<i32>} : memref<8x2x512xf32, #tpu.memory_space<vmem>>, vector<1x2x512xf32>,
    %99 = vector.extract_strided_slice %86 {offsets = [6, 0], sizes = [2, 512], strides = [1, 1]} : vector<16x512xf32> to vector<2x512xf32>
    %c3_95 = arith.constant 3 : index
    %c0_96 = arith.constant 0 : index
    %c0_97 = arith.constant 0 : index
    %100 = vector.load %arg16[%c3_95, %c0_96, %c0_97] : memref<8x2x512xf32, #tpu.memory_space<vmem>>, vector<1x2x512xf32>
    %101 = vector.shape_cast %100 : vector<1x2x512xf32> to vector<2x512xf32>
    %102 = vector.shape_cast %99 : vector<2x512xf32> to vector<1x2x512xf32>
    tpu.vector_store %arg16[%c3_95, %c0_96, %c0_97], %102 {strides = array<i32>} : memref<8x2x512xf32, #tpu.memory_space<vmem>>, vector<1x2x512xf32>,
    %103 = vector.extract_strided_slice %86 {offsets = [8, 0], sizes = [2, 512], strides = [1, 1]} : vector<16x512xf32> to vector<2x512xf32>
    %c4_98 = arith.constant 4 : index
    %c0_99 = arith.constant 0 : index
    %c0_100 = arith.constant 0 : index
    %104 = vector.load %arg16[%c4_98, %c0_99, %c0_100] : memref<8x2x512xf32, #tpu.memory_space<vmem>>, vector<1x2x512xf32>
    %105 = vector.shape_cast %104 : vector<1x2x512xf32> to vector<2x512xf32>
    %106 = vector.shape_cast %103 : vector<2x512xf32> to vector<1x2x512xf32>
    tpu.vector_store %arg16[%c4_98, %c0_99, %c0_100], %106 {strides = array<i32>} : memref<8x2x512xf32, #tpu.memory_space<vmem>>, vector<1x2x512xf32>,
    %107 = vector.extract_strided_slice %86 {offsets = [10, 0], sizes = [2, 512], strides = [1, 1]} : vector<16x512xf32> to vector<2x512xf32>
    %c5_101 = arith.constant 5 : index
    %c0_102 = arith.constant 0 : index
    %c0_103 = arith.constant 0 : index
    %108 = vector.load %arg16[%c5_101, %c0_102, %c0_103] : memref<8x2x512xf32, #tpu.memory_space<vmem>>, vector<1x2x512xf32>
    %109 = vector.shape_cast %108 : vector<1x2x512xf32> to vector<2x512xf32>
    %110 = vector.shape_cast %107 : vector<2x512xf32> to vector<1x2x512xf32>
    tpu.vector_store %arg16[%c5_101, %c0_102, %c0_103], %110 {strides = array<i32>} : memref<8x2x512xf32, #tpu.memory_space<vmem>>, vector<1x2x512xf32>,
    %111 = vector.extract_strided_slice %86 {offsets = [12, 0], sizes = [2, 512], strides = [1, 1]} : vector<16x512xf32> to vector<2x512xf32>
    %c6_104 = arith.constant 6 : index
    %c0_105 = arith.constant 0 : index
    %c0_106 = arith.constant 0 : index
    %112 = vector.load %arg16[%c6_104, %c0_105, %c0_106] : memref<8x2x512xf32, #tpu.memory_space<vmem>>, vector<1x2x512xf32>
    %113 = vector.shape_cast %112 : vector<1x2x512xf32> to vector<2x512xf32>
    %114 = vector.shape_cast %111 : vector<2x512xf32> to vector<1x2x512xf32>
    tpu.vector_store %arg16[%c6_104, %c0_105, %c0_106], %114 {strides = array<i32>} : memref<8x2x512xf32, #tpu.memory_space<vmem>>, vector<1x2x512xf32>,
    %115 = vector.extract_strided_slice %86 {offsets = [14, 0], sizes = [2, 512], strides = [1, 1]} : vector<16x512xf32> to vector<2x512xf32>
    %c7_107 = arith.constant 7 : index
    %c0_108 = arith.constant 0 : index
    %c0_109 = arith.constant 0 : index
    %116 = vector.load %arg16[%c7_107, %c0_108, %c0_109] : memref<8x2x512xf32, #tpu.memory_space<vmem>>, vector<1x2x512xf32>
    %117 = vector.shape_cast %116 : vector<1x2x512xf32> to vector<2x512xf32>
    %118 = vector.shape_cast %115 : vector<2x512xf32> to vector<1x2x512xf32>
    tpu.vector_store %arg16[%c7_107, %c0_108, %c0_109], %118 {strides = array<i32>} : memref<8x2x512xf32, #tpu.memory_space<vmem>>, vector<1x2x512xf32>,
    %c0_110 = arith.constant 0 : index
    %c0_111 = arith.constant 0 : index
    %119 = vector.load %arg3[%c0_110, %c0_111] : memref<128x512xbf16, #tpu.memory_space<vmem>>, vector<128x512xbf16>
    %c0_112 = arith.constant 0 : index
    %c0_113 = arith.constant 0 : index
    %120 = vector.load %arg5[%c0_112, %c0_113] : memref<128x512xbf16, #tpu.memory_space<vmem>>, vector<128x512xbf16>
    %c0_114 = arith.constant 0 : index
    %c0_115 = arith.constant 0 : index
    %121 = vector.load %arg6[%c0_114, %c0_115] : memref<128x512xbf16, #tpu.memory_space<vmem>>, vector<128x512xbf16>
    %c0_116 = arith.constant 0 : index
    %c0_117 = arith.constant 0 : index
    %122 = vector.load %arg7[%c0_116, %c0_117] : memref<1x512xf32, #tpu.memory_space<vmem>>, vector<1x512xf32>
    %123 = vector.shape_cast %122 : vector<1x512xf32> to vector<1x512xf32>
    %124 = vector.broadcast %123 : vector<1x512xf32> to vector<2x512xf32>
    %c1_118 = arith.constant 1 : index
    %c0_119 = arith.constant 0 : index
    %c0_120 = arith.constant 0 : index
    %125 = vector.load %arg8[%c1_118, %c0_119, %c0_120] : memref<2x2x128xf32, #tpu.memory_space<vmem>>, vector<1x2x128xf32>
    %126 = vector.shape_cast %125 : vector<1x2x128xf32> to vector<2x128xf32>
    %c1_121 = arith.constant 1 : index
    %c0_122 = arith.constant 0 : index
    %c0_123 = arith.constant 0 : index
    %127 = vector.load %arg9[%c1_121, %c0_122, %c0_123] : memref<2x2x128xf32, #tpu.memory_space<vmem>>, vector<1x2x128xf32>
    %128 = vector.shape_cast %127 : vector<1x2x128xf32> to vector<2x128xf32>
    %c0_124 = arith.constant 0 : index
    %c0_125 = arith.constant 0 : index
    %c0_126 = arith.constant 0 : index
    %129 = vector.load %arg8[%c0_124, %c0_125, %c0_126] : memref<2x2x128xf32, #tpu.memory_space<vmem>>, vector<1x2x128xf32>
    %130 = vector.shape_cast %129 : vector<1x2x128xf32> to vector<2x128xf32>
    %c0_127 = arith.constant 0 : index
    %c0_128 = arith.constant 0 : index
    %c0_129 = arith.constant 0 : index
    %131 = vector.load %arg9[%c0_127, %c0_128, %c0_129] : memref<2x2x128xf32, #tpu.memory_space<vmem>>, vector<1x2x128xf32>
    %132 = vector.shape_cast %131 : vector<1x2x128xf32> to vector<2x128xf32>
    %c0_130 = arith.constant 0 : index
    %c0_131 = arith.constant 0 : index
    %c0_132 = arith.constant 0 : index
    %133 = vector.load %arg16[%c0_130, %c0_131, %c0_132] : memref<8x2x512xf32, #tpu.memory_space<vmem>>, vector<1x2x512xf32>
    %134 = vector.shape_cast %133 : vector<1x2x512xf32> to vector<2x512xf32>
    %135 = arith.truncf %130 : vector<2x128xf32> to vector<2x128xbf16>
    %cst_133 = arith.constant dense<0.000000e+00> : vector<2x512xf32>
    %136 = tpu.matmul %135, %119, %cst_133 {dimension_numbers = #tpu.dot_dimension_numbers<[1], [0], [0], [1], [0, 0, 1, 1], [], []>} : vector<2x128xbf16>, vector<128x512xbf16>, vector<2x512xf32> -> vector<2x512xf32>
    %137 = arith.addf %134, %136 : vector<2x512xf32>
    %138 = vector.extract_strided_slice %137 {offsets = [0, 0], sizes = [2, 128], strides = [1, 1]} : vector<2x512xf32> to vector<2x128xf32>
    %cst_134 = arith.constant 5.000000e-01 : f32
    %139 = vector.broadcast %cst_134 : f32 to vector<2x128xf32>
    %140 = arith.mulf %139, %138 : vector<2x128xf32>
    %141 = math.tanh %140 : vector<2x128xf32>
    %cst_135 = arith.constant 5.000000e-01 : f32
    %142 = vector.broadcast %cst_135 : f32 to vector<2x128xf32>
    %143 = arith.mulf %142, %141 : vector<2x128xf32>
    %cst_136 = arith.constant 5.000000e-01 : f32
    %144 = vector.broadcast %cst_136 : f32 to vector<2x128xf32>
    %145 = arith.addf %143, %144 : vector<2x128xf32>
    %146 = vector.extract_strided_slice %137 {offsets = [0, 128], sizes = [2, 128], strides = [1, 1]} : vector<2x512xf32> to vector<2x128xf32>
    %cst_137 = arith.constant 5.000000e-01 : f32
    %147 = vector.broadcast %cst_137 : f32 to vector<2x128xf32>
    %148 = arith.mulf %147, %146 : vector<2x128xf32>
    %149 = math.tanh %148 : vector<2x128xf32>
    %cst_138 = arith.constant 5.000000e-01 : f32
    %150 = vector.broadcast %cst_138 : f32 to vector<2x128xf32>
    %151 = arith.mulf %150, %149 : vector<2x128xf32>
    %cst_139 = arith.constant 5.000000e-01 : f32
    %152 = vector.broadcast %cst_139 : f32 to vector<2x128xf32>
    %153 = arith.addf %151, %152 : vector<2x128xf32>
    %154 = vector.extract_strided_slice %137 {offsets = [0, 256], sizes = [2, 128], strides = [1, 1]} : vector<2x512xf32> to vector<2x128xf32>
    %155 = math.tanh %154 : vector<2x128xf32>
    %156 = vector.extract_strided_slice %137 {offsets = [0, 384], sizes = [2, 128], strides = [1, 1]} : vector<2x512xf32> to vector<2x128xf32>
    %cst_140 = arith.constant 5.000000e-01 : f32
    %157 = vector.broadcast %cst_140 : f32 to vector<2x128xf32>
    %158 = arith.mulf %157, %156 : vector<2x128xf32>
    %159 = math.tanh %158 : vector<2x128xf32>
    %cst_141 = arith.constant 5.000000e-01 : f32
    %160 = vector.broadcast %cst_141 : f32 to vector<2x128xf32>
    %161 = arith.mulf %160, %159 : vector<2x128xf32>
    %cst_142 = arith.constant 5.000000e-01 : f32
    %162 = vector.broadcast %cst_142 : f32 to vector<2x128xf32>
    %163 = arith.addf %161, %162 : vector<2x128xf32>
    %164 = arith.mulf %153, %132 : vector<2x128xf32>
    %165 = arith.mulf %145, %155 : vector<2x128xf32>
    %166 = arith.addf %164, %165 : vector<2x128xf32>
    %167 = math.tanh %166 : vector<2x128xf32>
    %168 = arith.mulf %163, %167 : vector<2x128xf32>
    %c1_i32 = arith.constant 1 : i32
    %169 = arith.truncf %168 : vector<2x128xf32> to vector<2x128xbf16>
    %cst_143 = arith.constant dense<0.000000e+00> : vector<2x512xf32>
    %170 = tpu.matmul %169, %120, %cst_143 {dimension_numbers = #tpu.dot_dimension_numbers<[1], [0], [0], [1], [0, 0, 1, 1], [], []>} : vector<2x128xbf16>, vector<128x512xbf16>, vector<2x512xf32> -> vector<2x512xf32>
    %171 = arith.truncf %126 : vector<2x128xf32> to vector<2x128xbf16>
    %cst_144 = arith.constant dense<0.000000e+00> : vector<2x512xf32>
    %172 = tpu.matmul %171, %121, %cst_144 {dimension_numbers = #tpu.dot_dimension_numbers<[1], [0], [0], [1], [0, 0, 1, 1], [], []>} : vector<2x128xbf16>, vector<128x512xbf16>, vector<2x512xf32> -> vector<2x512xf32>
    %173 = arith.addf %170, %172 : vector<2x512xf32>
    %174 = arith.addf %173, %124 : vector<2x512xf32>
    %175 = vector.extract_strided_slice %174 {offsets = [0, 0], sizes = [2, 128], strides = [1, 1]} : vector<2x512xf32> to vector<2x128xf32>
    %cst_145 = arith.constant 5.000000e-01 : f32
    %176 = vector.broadcast %cst_145 : f32 to vector<2x128xf32>
    %177 = arith.mulf %176, %175 : vector<2x128xf32>
    %178 = math.tanh %177 : vector<2x128xf32>
    %cst_146 = arith.constant 5.000000e-01 : f32
    %179 = vector.broadcast %cst_146 : f32 to vector<2x128xf32>
    %180 = arith.mulf %179, %178 : vector<2x128xf32>
    %cst_147 = arith.constant 5.000000e-01 : f32
    %181 = vector.broadcast %cst_147 : f32 to vector<2x128xf32>
    %182 = arith.addf %180, %181 : vector<2x128xf32>
    %183 = vector.extract_strided_slice %174 {offsets = [0, 128], sizes = [2, 128], strides = [1, 1]} : vector<2x512xf32> to vector<2x128xf32>
    %cst_148 = arith.constant 5.000000e-01 : f32
    %184 = vector.broadcast %cst_148 : f32 to vector<2x128xf32>
    %185 = arith.mulf %184, %183 : vector<2x128xf32>
    %186 = math.tanh %185 : vector<2x128xf32>
    %cst_149 = arith.constant 5.000000e-01 : f32
    %187 = vector.broadcast %cst_149 : f32 to vector<2x128xf32>
    %188 = arith.mulf %187, %186 : vector<2x128xf32>
    %cst_150 = arith.constant 5.000000e-01 : f32
    %189 = vector.broadcast %cst_150 : f32 to vector<2x128xf32>
    %190 = arith.addf %188, %189 : vector<2x128xf32>
    %191 = vector.extract_strided_slice %174 {offsets = [0, 256], sizes = [2, 128], strides = [1, 1]} : vector<2x512xf32> to vector<2x128xf32>
    %192 = math.tanh %191 : vector<2x128xf32>
    %193 = vector.extract_strided_slice %174 {offsets = [0, 384], sizes = [2, 128], strides = [1, 1]} : vector<2x512xf32> to vector<2x128xf32>
    %cst_151 = arith.constant 5.000000e-01 : f32
    %194 = vector.broadcast %cst_151 : f32 to vector<2x128xf32>
    %195 = arith.mulf %194, %193 : vector<2x128xf32>
    %196 = math.tanh %195 : vector<2x128xf32>
    %cst_152 = arith.constant 5.000000e-01 : f32
    %197 = vector.broadcast %cst_152 : f32 to vector<2x128xf32>
    %198 = arith.mulf %197, %196 : vector<2x128xf32>
    %cst_153 = arith.constant 5.000000e-01 : f32
    %199 = vector.broadcast %cst_153 : f32 to vector<2x128xf32>
    %200 = arith.addf %198, %199 : vector<2x128xf32>
    %201 = arith.mulf %190, %128 : vector<2x128xf32>
    %202 = arith.mulf %182, %192 : vector<2x128xf32>
    %203 = arith.addf %201, %202 : vector<2x128xf32>
    %204 = math.tanh %203 : vector<2x128xf32>
    %205 = arith.mulf %200, %204 : vector<2x128xf32>
    %206 = arith.index_cast %c1_i32 : i32 to index
    %c0_154 = arith.constant 0 : index
    %c0_155 = arith.constant 0 : index
    %207 = vector.load %arg16[%206, %c0_154, %c0_155] : memref<8x2x512xf32, #tpu.memory_space<vmem>>, vector<1x2x512xf32>
    %208 = vector.shape_cast %207 : vector<1x2x512xf32> to vector<2x512xf32>
    %209 = arith.truncf %168 : vector<2x128xf32> to vector<2x128xbf16>
    %cst_156 = arith.constant dense<0.000000e+00> : vector<2x512xf32>
    %210 = tpu.matmul %209, %119, %cst_156 {dimension_numbers = #tpu.dot_dimension_numbers<[1], [0], [0], [1], [0, 0, 1, 1], [], []>} : vector<2x128xbf16>, vector<128x512xbf16>, vector<2x512xf32> -> vector<2x512xf32>
    %211 = arith.addf %208, %210 : vector<2x512xf32>
    %212 = vector.extract_strided_slice %211 {offsets = [0, 0], sizes = [2, 128], strides = [1, 1]} : vector<2x512xf32> to vector<2x128xf32>
    %cst_157 = arith.constant 5.000000e-01 : f32
    %213 = vector.broadcast %cst_157 : f32 to vector<2x128xf32>
    %214 = arith.mulf %213, %212 : vector<2x128xf32>
    %215 = math.tanh %214 : vector<2x128xf32>
    %cst_158 = arith.constant 5.000000e-01 : f32
    %216 = vector.broadcast %cst_158 : f32 to vector<2x128xf32>
    %217 = arith.mulf %216, %215 : vector<2x128xf32>
    %cst_159 = arith.constant 5.000000e-01 : f32
    %218 = vector.broadcast %cst_159 : f32 to vector<2x128xf32>
    %219 = arith.addf %217, %218 : vector<2x128xf32>
    %220 = vector.extract_strided_slice %211 {offsets = [0, 128], sizes = [2, 128], strides = [1, 1]} : vector<2x512xf32> to vector<2x128xf32>
    %cst_160 = arith.constant 5.000000e-01 : f32
    %221 = vector.broadcast %cst_160 : f32 to vector<2x128xf32>
    %222 = arith.mulf %221, %220 : vector<2x128xf32>
    %223 = math.tanh %222 : vector<2x128xf32>
    %cst_161 = arith.constant 5.000000e-01 : f32
    %224 = vector.broadcast %cst_161 : f32 to vector<2x128xf32>
    %225 = arith.mulf %224, %223 : vector<2x128xf32>
    %cst_162 = arith.constant 5.000000e-01 : f32
    %226 = vector.broadcast %cst_162 : f32 to vector<2x128xf32>
    %227 = arith.addf %225, %226 : vector<2x128xf32>
    %228 = vector.extract_strided_slice %211 {offsets = [0, 256], sizes = [2, 128], strides = [1, 1]} : vector<2x512xf32> to vector<2x128xf32>
    %229 = math.tanh %228 : vector<2x128xf32>
    %230 = vector.extract_strided_slice %211 {offsets = [0, 384], sizes = [2, 128], strides = [1, 1]} : vector<2x512xf32> to vector<2x128xf32>
    %cst_163 = arith.constant 5.000000e-01 : f32
    %231 = vector.broadcast %cst_163 : f32 to vector<2x128xf32>
    %232 = arith.mulf %231, %230 : vector<2x128xf32>
    %233 = math.tanh %232 : vector<2x128xf32>
    %cst_164 = arith.constant 5.000000e-01 : f32
    %234 = vector.broadcast %cst_164 : f32 to vector<2x128xf32>
    %235 = arith.mulf %234, %233 : vector<2x128xf32>
    %cst_165 = arith.constant 5.000000e-01 : f32
    %236 = vector.broadcast %cst_165 : f32 to vector<2x128xf32>
    %237 = arith.addf %235, %236 : vector<2x128xf32>
    %238 = arith.mulf %227, %166 : vector<2x128xf32>
    %239 = arith.mulf %219, %229 : vector<2x128xf32>
    %240 = arith.addf %238, %239 : vector<2x128xf32>
    %241 = math.tanh %240 : vector<2x128xf32>
    %242 = arith.mulf %237, %241 : vector<2x128xf32>
    %c2_i32 = arith.constant 2 : i32
    %243 = arith.truncf %242 : vector<2x128xf32> to vector<2x128xbf16>
    %cst_166 = arith.constant dense<0.000000e+00> : vector<2x512xf32>
    %244 = tpu.matmul %243, %120, %cst_166 {dimension_numbers = #tpu.dot_dimension_numbers<[1], [0], [0], [1], [0, 0, 1, 1], [], []>} : vector<2x128xbf16>, vector<128x512xbf16>, vector<2x512xf32> -> vector<2x512xf32>
    %245 = arith.truncf %205 : vector<2x128xf32> to vector<2x128xbf16>
    %cst_167 = arith.constant dense<0.000000e+00> : vector<2x512xf32>
    %246 = tpu.matmul %245, %121, %cst_167 {dimension_numbers = #tpu.dot_dimension_numbers<[1], [0], [0], [1], [0, 0, 1, 1], [], []>} : vector<2x128xbf16>, vector<128x512xbf16>, vector<2x512xf32> -> vector<2x512xf32>
    %247 = arith.addf %244, %246 : vector<2x512xf32>
    %248 = arith.addf %247, %124 : vector<2x512xf32>
    %249 = vector.extract_strided_slice %248 {offsets = [0, 0], sizes = [2, 128], strides = [1, 1]} : vector<2x512xf32> to vector<2x128xf32>
    %cst_168 = arith.constant 5.000000e-01 : f32
    %250 = vector.broadcast %cst_168 : f32 to vector<2x128xf32>
    %251 = arith.mulf %250, %249 : vector<2x128xf32>
    %252 = math.tanh %251 : vector<2x128xf32>
    %cst_169 = arith.constant 5.000000e-01 : f32
    %253 = vector.broadcast %cst_169 : f32 to vector<2x128xf32>
    %254 = arith.mulf %253, %252 : vector<2x128xf32>
    %cst_170 = arith.constant 5.000000e-01 : f32
    %255 = vector.broadcast %cst_170 : f32 to vector<2x128xf32>
    %256 = arith.addf %254, %255 : vector<2x128xf32>
    %257 = vector.extract_strided_slice %248 {offsets = [0, 128], sizes = [2, 128], strides = [1, 1]} : vector<2x512xf32> to vector<2x128xf32>
    %cst_171 = arith.constant 5.000000e-01 : f32
    %258 = vector.broadcast %cst_171 : f32 to vector<2x128xf32>
    %259 = arith.mulf %258, %257 : vector<2x128xf32>
    %260 = math.tanh %259 : vector<2x128xf32>
    %cst_172 = arith.constant 5.000000e-01 : f32
    %261 = vector.broadcast %cst_172 : f32 to vector<2x128xf32>
    %262 = arith.mulf %261, %260 : vector<2x128xf32>
    %cst_173 = arith.constant 5.000000e-01 : f32
    %263 = vector.broadcast %cst_173 : f32 to vector<2x128xf32>
    %264 = arith.addf %262, %263 : vector<2x128xf32>
    %265 = vector.extract_strided_slice %248 {offsets = [0, 256], sizes = [2, 128], strides = [1, 1]} : vector<2x512xf32> to vector<2x128xf32>
    %266 = math.tanh %265 : vector<2x128xf32>
    %267 = vector.extract_strided_slice %248 {offsets = [0, 384], sizes = [2, 128], strides = [1, 1]} : vector<2x512xf32> to vector<2x128xf32>
    %cst_174 = arith.constant 5.000000e-01 : f32
    %268 = vector.broadcast %cst_174 : f32 to vector<2x128xf32>
    %269 = arith.mulf %268, %267 : vector<2x128xf32>
    %270 = math.tanh %269 : vector<2x128xf32>
    %cst_175 = arith.constant 5.000000e-01 : f32
    %271 = vector.broadcast %cst_175 : f32 to vector<2x128xf32>
    %272 = arith.mulf %271, %270 : vector<2x128xf32>
    %cst_176 = arith.constant 5.000000e-01 : f32
    %273 = vector.broadcast %cst_176 : f32 to vector<2x128xf32>
    %274 = arith.addf %272, %273 : vector<2x128xf32>
    %275 = arith.mulf %264, %203 : vector<2x128xf32>
    %276 = arith.mulf %256, %266 : vector<2x128xf32>
    %277 = arith.addf %275, %276 : vector<2x128xf32>
    %278 = math.tanh %277 : vector<2x128xf32>
    %279 = arith.mulf %274, %278 : vector<2x128xf32>
    %280 = arith.index_cast %c2_i32 : i32 to index
    %c0_177 = arith.constant 0 : index
    %c0_178 = arith.constant 0 : index
    %281 = vector.load %arg16[%280, %c0_177, %c0_178] : memref<8x2x512xf32, #tpu.memory_space<vmem>>, vector<1x2x512xf32>
    %282 = vector.shape_cast %281 : vector<1x2x512xf32> to vector<2x512xf32>
    %283 = arith.truncf %242 : vector<2x128xf32> to vector<2x128xbf16>
    %cst_179 = arith.constant dense<0.000000e+00> : vector<2x512xf32>
    %284 = tpu.matmul %283, %119, %cst_179 {dimension_numbers = #tpu.dot_dimension_numbers<[1], [0], [0], [1], [0, 0, 1, 1], [], []>} : vector<2x128xbf16>, vector<128x512xbf16>, vector<2x512xf32> -> vector<2x512xf32>
    %285 = arith.addf %282, %284 : vector<2x512xf32>
    %286 = vector.extract_strided_slice %285 {offsets = [0, 0], sizes = [2, 128], strides = [1, 1]} : vector<2x512xf32> to vector<2x128xf32>
    %cst_180 = arith.constant 5.000000e-01 : f32
    %287 = vector.broadcast %cst_180 : f32 to vector<2x128xf32>
    %288 = arith.mulf %287, %286 : vector<2x128xf32>
    %289 = math.tanh %288 : vector<2x128xf32>
    %cst_181 = arith.constant 5.000000e-01 : f32
    %290 = vector.broadcast %cst_181 : f32 to vector<2x128xf32>
    %291 = arith.mulf %290, %289 : vector<2x128xf32>
    %cst_182 = arith.constant 5.000000e-01 : f32
    %292 = vector.broadcast %cst_182 : f32 to vector<2x128xf32>
    %293 = arith.addf %291, %292 : vector<2x128xf32>
    %294 = vector.extract_strided_slice %285 {offsets = [0, 128], sizes = [2, 128], strides = [1, 1]} : vector<2x512xf32> to vector<2x128xf32>
    %cst_183 = arith.constant 5.000000e-01 : f32
    %295 = vector.broadcast %cst_183 : f32 to vector<2x128xf32>
    %296 = arith.mulf %295, %294 : vector<2x128xf32>
    %297 = math.tanh %296 : vector<2x128xf32>
    %cst_184 = arith.constant 5.000000e-01 : f32
    %298 = vector.broadcast %cst_184 : f32 to vector<2x128xf32>
    %299 = arith.mulf %298, %297 : vector<2x128xf32>
    %cst_185 = arith.constant 5.000000e-01 : f32
    %300 = vector.broadcast %cst_185 : f32 to vector<2x128xf32>
    %301 = arith.addf %299, %300 : vector<2x128xf32>
    %302 = vector.extract_strided_slice %285 {offsets = [0, 256], sizes = [2, 128], strides = [1, 1]} : vector<2x512xf32> to vector<2x128xf32>
    %303 = math.tanh %302 : vector<2x128xf32>
    %304 = vector.extract_strided_slice %285 {offsets = [0, 384], sizes = [2, 128], strides = [1, 1]} : vector<2x512xf32> to vector<2x128xf32>
    %cst_186 = arith.constant 5.000000e-01 : f32
    %305 = vector.broadcast %cst_186 : f32 to vector<2x128xf32>
    %306 = arith.mulf %305, %304 : vector<2x128xf32>
    %307 = math.tanh %306 : vector<2x128xf32>
    %cst_187 = arith.constant 5.000000e-01 : f32
    %308 = vector.broadcast %cst_187 : f32 to vector<2x128xf32>
    %309 = arith.mulf %308, %307 : vector<2x128xf32>
    %cst_188 = arith.constant 5.000000e-01 : f32
    %310 = vector.broadcast %cst_188 : f32 to vector<2x128xf32>
    %311 = arith.addf %309, %310 : vector<2x128xf32>
    %312 = arith.mulf %301, %240 : vector<2x128xf32>
    %313 = arith.mulf %293, %303 : vector<2x128xf32>
    %314 = arith.addf %312, %313 : vector<2x128xf32>
    %315 = math.tanh %314 : vector<2x128xf32>
    %316 = arith.mulf %311, %315 : vector<2x128xf32>
    %c3_i32 = arith.constant 3 : i32
    %317 = arith.truncf %316 : vector<2x128xf32> to vector<2x128xbf16>
    %cst_189 = arith.constant dense<0.000000e+00> : vector<2x512xf32>
    %318 = tpu.matmul %317, %120, %cst_189 {dimension_numbers = #tpu.dot_dimension_numbers<[1], [0], [0], [1], [0, 0, 1, 1], [], []>} : vector<2x128xbf16>, vector<128x512xbf16>, vector<2x512xf32> -> vector<2x512xf32>
    %319 = arith.truncf %279 : vector<2x128xf32> to vector<2x128xbf16>
    %cst_190 = arith.constant dense<0.000000e+00> : vector<2x512xf32>
    %320 = tpu.matmul %319, %121, %cst_190 {dimension_numbers = #tpu.dot_dimension_numbers<[1], [0], [0], [1], [0, 0, 1, 1], [], []>} : vector<2x128xbf16>, vector<128x512xbf16>, vector<2x512xf32> -> vector<2x512xf32>
    %321 = arith.addf %318, %320 : vector<2x512xf32>
    %322 = arith.addf %321, %124 : vector<2x512xf32>
    %323 = vector.extract_strided_slice %322 {offsets = [0, 0], sizes = [2, 128], strides = [1, 1]} : vector<2x512xf32> to vector<2x128xf32>
    %cst_191 = arith.constant 5.000000e-01 : f32
    %324 = vector.broadcast %cst_191 : f32 to vector<2x128xf32>
    %325 = arith.mulf %324, %323 : vector<2x128xf32>
    %326 = math.tanh %325 : vector<2x128xf32>
    %cst_192 = arith.constant 5.000000e-01 : f32
    %327 = vector.broadcast %cst_192 : f32 to vector<2x128xf32>
    %328 = arith.mulf %327, %326 : vector<2x128xf32>
    %cst_193 = arith.constant 5.000000e-01 : f32
    %329 = vector.broadcast %cst_193 : f32 to vector<2x128xf32>
    %330 = arith.addf %328, %329 : vector<2x128xf32>
    %331 = vector.extract_strided_slice %322 {offsets = [0, 128], sizes = [2, 128], strides = [1, 1]} : vector<2x512xf32> to vector<2x128xf32>
    %cst_194 = arith.constant 5.000000e-01 : f32
    %332 = vector.broadcast %cst_194 : f32 to vector<2x128xf32>
    %333 = arith.mulf %332, %331 : vector<2x128xf32>
    %334 = math.tanh %333 : vector<2x128xf32>
    %cst_195 = arith.constant 5.000000e-01 : f32
    %335 = vector.broadcast %cst_195 : f32 to vector<2x128xf32>
    %336 = arith.mulf %335, %334 : vector<2x128xf32>
    %cst_196 = arith.constant 5.000000e-01 : f32
    %337 = vector.broadcast %cst_196 : f32 to vector<2x128xf32>
    %338 = arith.addf %336, %337 : vector<2x128xf32>
    %339 = vector.extract_strided_slice %322 {offsets = [0, 256], sizes = [2, 128], strides = [1, 1]} : vector<2x512xf32> to vector<2x128xf32>
    %340 = math.tanh %339 : vector<2x128xf32>
    %341 = vector.extract_strided_slice %322 {offsets = [0, 384], sizes = [2, 128], strides = [1, 1]} : vector<2x512xf32> to vector<2x128xf32>
    %cst_197 = arith.constant 5.000000e-01 : f32
    %342 = vector.broadcast %cst_197 : f32 to vector<2x128xf32>
    %343 = arith.mulf %342, %341 : vector<2x128xf32>
    %344 = math.tanh %343 : vector<2x128xf32>
    %cst_198 = arith.constant 5.000000e-01 : f32
    %345 = vector.broadcast %cst_198 : f32 to vector<2x128xf32>
    %346 = arith.mulf %345, %344 : vector<2x128xf32>
    %cst_199 = arith.constant 5.000000e-01 : f32
    %347 = vector.broadcast %cst_199 : f32 to vector<2x128xf32>
    %348 = arith.addf %346, %347 : vector<2x128xf32>
    %349 = arith.mulf %338, %277 : vector<2x128xf32>
    %350 = arith.mulf %330, %340 : vector<2x128xf32>
    %351 = arith.addf %349, %350 : vector<2x128xf32>
    %352 = math.tanh %351 : vector<2x128xf32>
    %353 = arith.mulf %348, %352 : vector<2x128xf32>
    %354 = arith.index_cast %c3_i32 : i32 to index
    %c0_200 = arith.constant 0 : index
    %c0_201 = arith.constant 0 : index
    %355 = vector.load %arg16[%354, %c0_200, %c0_201] : memref<8x2x512xf32, #tpu.memory_space<vmem>>, vector<1x2x512xf32>
    %356 = vector.shape_cast %355 : vector<1x2x512xf32> to vector<2x512xf32>
    %357 = arith.truncf %316 : vector<2x128xf32> to vector<2x128xbf16>
    %cst_202 = arith.constant dense<0.000000e+00> : vector<2x512xf32>
    %358 = tpu.matmul %357, %119, %cst_202 {dimension_numbers = #tpu.dot_dimension_numbers<[1], [0], [0], [1], [0, 0, 1, 1], [], []>} : vector<2x128xbf16>, vector<128x512xbf16>, vector<2x512xf32> -> vector<2x512xf32>
    %359 = arith.addf %356, %358 : vector<2x512xf32>
    %360 = vector.extract_strided_slice %359 {offsets = [0, 0], sizes = [2, 128], strides = [1, 1]} : vector<2x512xf32> to vector<2x128xf32>
    %cst_203 = arith.constant 5.000000e-01 : f32
    %361 = vector.broadcast %cst_203 : f32 to vector<2x128xf32>
    %362 = arith.mulf %361, %360 : vector<2x128xf32>
    %363 = math.tanh %362 : vector<2x128xf32>
    %cst_204 = arith.constant 5.000000e-01 : f32
    %364 = vector.broadcast %cst_204 : f32 to vector<2x128xf32>
    %365 = arith.mulf %364, %363 : vector<2x128xf32>
    %cst_205 = arith.constant 5.000000e-01 : f32
    %366 = vector.broadcast %cst_205 : f32 to vector<2x128xf32>
    %367 = arith.addf %365, %366 : vector<2x128xf32>
    %368 = vector.extract_strided_slice %359 {offsets = [0, 128], sizes = [2, 128], strides = [1, 1]} : vector<2x512xf32> to vector<2x128xf32>
    %cst_206 = arith.constant 5.000000e-01 : f32
    %369 = vector.broadcast %cst_206 : f32 to vector<2x128xf32>
    %370 = arith.mulf %369, %368 : vector<2x128xf32>
    %371 = math.tanh %370 : vector<2x128xf32>
    %cst_207 = arith.constant 5.000000e-01 : f32
    %372 = vector.broadcast %cst_207 : f32 to vector<2x128xf32>
    %373 = arith.mulf %372, %371 : vector<2x128xf32>
    %cst_208 = arith.constant 5.000000e-01 : f32
    %374 = vector.broadcast %cst_208 : f32 to vector<2x128xf32>
    %375 = arith.addf %373, %374 : vector<2x128xf32>
    %376 = vector.extract_strided_slice %359 {offsets = [0, 256], sizes = [2, 128], strides = [1, 1]} : vector<2x512xf32> to vector<2x128xf32>
    %377 = math.tanh %376 : vector<2x128xf32>
    %378 = vector.extract_strided_slice %359 {offsets = [0, 384], sizes = [2, 128], strides = [1, 1]} : vector<2x512xf32> to vector<2x128xf32>
    %cst_209 = arith.constant 5.000000e-01 : f32
    %379 = vector.broadcast %cst_209 : f32 to vector<2x128xf32>
    %380 = arith.mulf %379, %378 : vector<2x128xf32>
    %381 = math.tanh %380 : vector<2x128xf32>
    %cst_210 = arith.constant 5.000000e-01 : f32
    %382 = vector.broadcast %cst_210 : f32 to vector<2x128xf32>
    %383 = arith.mulf %382, %381 : vector<2x128xf32>
    %cst_211 = arith.constant 5.000000e-01 : f32
    %384 = vector.broadcast %cst_211 : f32 to vector<2x128xf32>
    %385 = arith.addf %383, %384 : vector<2x128xf32>
    %386 = arith.mulf %375, %314 : vector<2x128xf32>
    %387 = arith.mulf %367, %377 : vector<2x128xf32>
    %388 = arith.addf %386, %387 : vector<2x128xf32>
    %389 = math.tanh %388 : vector<2x128xf32>
    %390 = arith.mulf %385, %389 : vector<2x128xf32>
    %c4_i32 = arith.constant 4 : i32
    %391 = arith.truncf %390 : vector<2x128xf32> to vector<2x128xbf16>
    %cst_212 = arith.constant dense<0.000000e+00> : vector<2x512xf32>
    %392 = tpu.matmul %391, %120, %cst_212 {dimension_numbers = #tpu.dot_dimension_numbers<[1], [0], [0], [1], [0, 0, 1, 1], [], []>} : vector<2x128xbf16>, vector<128x512xbf16>, vector<2x512xf32> -> vector<2x512xf32>
    %393 = arith.truncf %353 : vector<2x128xf32> to vector<2x128xbf16>
    %cst_213 = arith.constant dense<0.000000e+00> : vector<2x512xf32>
    %394 = tpu.matmul %393, %121, %cst_213 {dimension_numbers = #tpu.dot_dimension_numbers<[1], [0], [0], [1], [0, 0, 1, 1], [], []>} : vector<2x128xbf16>, vector<128x512xbf16>, vector<2x512xf32> -> vector<2x512xf32>
    %395 = arith.addf %392, %394 : vector<2x512xf32>
    %396 = arith.addf %395, %124 : vector<2x512xf32>
    %397 = vector.extract_strided_slice %396 {offsets = [0, 0], sizes = [2, 128], strides = [1, 1]} : vector<2x512xf32> to vector<2x128xf32>
    %cst_214 = arith.constant 5.000000e-01 : f32
    %398 = vector.broadcast %cst_214 : f32 to vector<2x128xf32>
    %399 = arith.mulf %398, %397 : vector<2x128xf32>
    %400 = math.tanh %399 : vector<2x128xf32>
    %cst_215 = arith.constant 5.000000e-01 : f32
    %401 = vector.broadcast %cst_215 : f32 to vector<2x128xf32>
    %402 = arith.mulf %401, %400 : vector<2x128xf32>
    %cst_216 = arith.constant 5.000000e-01 : f32
    %403 = vector.broadcast %cst_216 : f32 to vector<2x128xf32>
    %404 = arith.addf %402, %403 : vector<2x128xf32>
    %405 = vector.extract_strided_slice %396 {offsets = [0, 128], sizes = [2, 128], strides = [1, 1]} : vector<2x512xf32> to vector<2x128xf32>
    %cst_217 = arith.constant 5.000000e-01 : f32
    %406 = vector.broadcast %cst_217 : f32 to vector<2x128xf32>
    %407 = arith.mulf %406, %405 : vector<2x128xf32>
    %408 = math.tanh %407 : vector<2x128xf32>
    %cst_218 = arith.constant 5.000000e-01 : f32
    %409 = vector.broadcast %cst_218 : f32 to vector<2x128xf32>
    %410 = arith.mulf %409, %408 : vector<2x128xf32>
    %cst_219 = arith.constant 5.000000e-01 : f32
    %411 = vector.broadcast %cst_219 : f32 to vector<2x128xf32>
    %412 = arith.addf %410, %411 : vector<2x128xf32>
    %413 = vector.extract_strided_slice %396 {offsets = [0, 256], sizes = [2, 128], strides = [1, 1]} : vector<2x512xf32> to vector<2x128xf32>
    %414 = math.tanh %413 : vector<2x128xf32>
    %415 = vector.extract_strided_slice %396 {offsets = [0, 384], sizes = [2, 128], strides = [1, 1]} : vector<2x512xf32> to vector<2x128xf32>
    %cst_220 = arith.constant 5.000000e-01 : f32
    %416 = vector.broadcast %cst_220 : f32 to vector<2x128xf32>
    %417 = arith.mulf %416, %415 : vector<2x128xf32>
    %418 = math.tanh %417 : vector<2x128xf32>
    %cst_221 = arith.constant 5.000000e-01 : f32
    %419 = vector.broadcast %cst_221 : f32 to vector<2x128xf32>
    %420 = arith.mulf %419, %418 : vector<2x128xf32>
    %cst_222 = arith.constant 5.000000e-01 : f32
    %421 = vector.broadcast %cst_222 : f32 to vector<2x128xf32>
    %422 = arith.addf %420, %421 : vector<2x128xf32>
    %423 = arith.mulf %412, %351 : vector<2x128xf32>
    %424 = arith.mulf %404, %414 : vector<2x128xf32>
    %425 = arith.addf %423, %424 : vector<2x128xf32>
    %426 = math.tanh %425 : vector<2x128xf32>
    %427 = arith.mulf %422, %426 : vector<2x128xf32>
    %428 = arith.index_cast %c4_i32 : i32 to index
    %c0_223 = arith.constant 0 : index
    %c0_224 = arith.constant 0 : index
    %429 = vector.load %arg16[%428, %c0_223, %c0_224] : memref<8x2x512xf32, #tpu.memory_space<vmem>>, vector<1x2x512xf32>
    %430 = vector.shape_cast %429 : vector<1x2x512xf32> to vector<2x512xf32>
    %431 = arith.truncf %390 : vector<2x128xf32> to vector<2x128xbf16>
    %cst_225 = arith.constant dense<0.000000e+00> : vector<2x512xf32>
    %432 = tpu.matmul %431, %119, %cst_225 {dimension_numbers = #tpu.dot_dimension_numbers<[1], [0], [0], [1], [0, 0, 1, 1], [], []>} : vector<2x128xbf16>, vector<128x512xbf16>, vector<2x512xf32> -> vector<2x512xf32>
    %433 = arith.addf %430, %432 : vector<2x512xf32>
    %434 = vector.extract_strided_slice %433 {offsets = [0, 0], sizes = [2, 128], strides = [1, 1]} : vector<2x512xf32> to vector<2x128xf32>
    %cst_226 = arith.constant 5.000000e-01 : f32
    %435 = vector.broadcast %cst_226 : f32 to vector<2x128xf32>
    %436 = arith.mulf %435, %434 : vector<2x128xf32>
    %437 = math.tanh %436 : vector<2x128xf32>
    %cst_227 = arith.constant 5.000000e-01 : f32
    %438 = vector.broadcast %cst_227 : f32 to vector<2x128xf32>
    %439 = arith.mulf %438, %437 : vector<2x128xf32>
    %cst_228 = arith.constant 5.000000e-01 : f32
    %440 = vector.broadcast %cst_228 : f32 to vector<2x128xf32>
    %441 = arith.addf %439, %440 : vector<2x128xf32>
    %442 = vector.extract_strided_slice %433 {offsets = [0, 128], sizes = [2, 128], strides = [1, 1]} : vector<2x512xf32> to vector<2x128xf32>
    %cst_229 = arith.constant 5.000000e-01 : f32
    %443 = vector.broadcast %cst_229 : f32 to vector<2x128xf32>
    %444 = arith.mulf %443, %442 : vector<2x128xf32>
    %445 = math.tanh %444 : vector<2x128xf32>
    %cst_230 = arith.constant 5.000000e-01 : f32
    %446 = vector.broadcast %cst_230 : f32 to vector<2x128xf32>
    %447 = arith.mulf %446, %445 : vector<2x128xf32>
    %cst_231 = arith.constant 5.000000e-01 : f32
    %448 = vector.broadcast %cst_231 : f32 to vector<2x128xf32>
    %449 = arith.addf %447, %448 : vector<2x128xf32>
    %450 = vector.extract_strided_slice %433 {offsets = [0, 256], sizes = [2, 128], strides = [1, 1]} : vector<2x512xf32> to vector<2x128xf32>
    %451 = math.tanh %450 : vector<2x128xf32>
    %452 = vector.extract_strided_slice %433 {offsets = [0, 384], sizes = [2, 128], strides = [1, 1]} : vector<2x512xf32> to vector<2x128xf32>
    %cst_232 = arith.constant 5.000000e-01 : f32
    %453 = vector.broadcast %cst_232 : f32 to vector<2x128xf32>
    %454 = arith.mulf %453, %452 : vector<2x128xf32>
    %455 = math.tanh %454 : vector<2x128xf32>
    %cst_233 = arith.constant 5.000000e-01 : f32
    %456 = vector.broadcast %cst_233 : f32 to vector<2x128xf32>
    %457 = arith.mulf %456, %455 : vector<2x128xf32>
    %cst_234 = arith.constant 5.000000e-01 : f32
    %458 = vector.broadcast %cst_234 : f32 to vector<2x128xf32>
    %459 = arith.addf %457, %458 : vector<2x128xf32>
    %460 = arith.mulf %449, %388 : vector<2x128xf32>
    %461 = arith.mulf %441, %451 : vector<2x128xf32>
    %462 = arith.addf %460, %461 : vector<2x128xf32>
    %463 = math.tanh %462 : vector<2x128xf32>
    %464 = arith.mulf %459, %463 : vector<2x128xf32>
    %c5_i32 = arith.constant 5 : i32
    %465 = arith.truncf %464 : vector<2x128xf32> to vector<2x128xbf16>
    %cst_235 = arith.constant dense<0.000000e+00> : vector<2x512xf32>
    %466 = tpu.matmul %465, %120, %cst_235 {dimension_numbers = #tpu.dot_dimension_numbers<[1], [0], [0], [1], [0, 0, 1, 1], [], []>} : vector<2x128xbf16>, vector<128x512xbf16>, vector<2x512xf32> -> vector<2x512xf32>
    %467 = arith.truncf %427 : vector<2x128xf32> to vector<2x128xbf16>
    %cst_236 = arith.constant dense<0.000000e+00> : vector<2x512xf32>
    %468 = tpu.matmul %467, %121, %cst_236 {dimension_numbers = #tpu.dot_dimension_numbers<[1], [0], [0], [1], [0, 0, 1, 1], [], []>} : vector<2x128xbf16>, vector<128x512xbf16>, vector<2x512xf32> -> vector<2x512xf32>
    %469 = arith.addf %466, %468 : vector<2x512xf32>
    %470 = arith.addf %469, %124 : vector<2x512xf32>
    %471 = vector.extract_strided_slice %470 {offsets = [0, 0], sizes = [2, 128], strides = [1, 1]} : vector<2x512xf32> to vector<2x128xf32>
    %cst_237 = arith.constant 5.000000e-01 : f32
    %472 = vector.broadcast %cst_237 : f32 to vector<2x128xf32>
    %473 = arith.mulf %472, %471 : vector<2x128xf32>
    %474 = math.tanh %473 : vector<2x128xf32>
    %cst_238 = arith.constant 5.000000e-01 : f32
    %475 = vector.broadcast %cst_238 : f32 to vector<2x128xf32>
    %476 = arith.mulf %475, %474 : vector<2x128xf32>
    %cst_239 = arith.constant 5.000000e-01 : f32
    %477 = vector.broadcast %cst_239 : f32 to vector<2x128xf32>
    %478 = arith.addf %476, %477 : vector<2x128xf32>
    %479 = vector.extract_strided_slice %470 {offsets = [0, 128], sizes = [2, 128], strides = [1, 1]} : vector<2x512xf32> to vector<2x128xf32>
    %cst_240 = arith.constant 5.000000e-01 : f32
    %480 = vector.broadcast %cst_240 : f32 to vector<2x128xf32>
    %481 = arith.mulf %480, %479 : vector<2x128xf32>
    %482 = math.tanh %481 : vector<2x128xf32>
    %cst_241 = arith.constant 5.000000e-01 : f32
    %483 = vector.broadcast %cst_241 : f32 to vector<2x128xf32>
    %484 = arith.mulf %483, %482 : vector<2x128xf32>
    %cst_242 = arith.constant 5.000000e-01 : f32
    %485 = vector.broadcast %cst_242 : f32 to vector<2x128xf32>
    %486 = arith.addf %484, %485 : vector<2x128xf32>
    %487 = vector.extract_strided_slice %470 {offsets = [0, 256], sizes = [2, 128], strides = [1, 1]} : vector<2x512xf32> to vector<2x128xf32>
    %488 = math.tanh %487 : vector<2x128xf32>
    %489 = vector.extract_strided_slice %470 {offsets = [0, 384], sizes = [2, 128], strides = [1, 1]} : vector<2x512xf32> to vector<2x128xf32>
    %cst_243 = arith.constant 5.000000e-01 : f32
    %490 = vector.broadcast %cst_243 : f32 to vector<2x128xf32>
    %491 = arith.mulf %490, %489 : vector<2x128xf32>
    %492 = math.tanh %491 : vector<2x128xf32>
    %cst_244 = arith.constant 5.000000e-01 : f32
    %493 = vector.broadcast %cst_244 : f32 to vector<2x128xf32>
    %494 = arith.mulf %493, %492 : vector<2x128xf32>
    %cst_245 = arith.constant 5.000000e-01 : f32
    %495 = vector.broadcast %cst_245 : f32 to vector<2x128xf32>
    %496 = arith.addf %494, %495 : vector<2x128xf32>
    %497 = arith.mulf %486, %425 : vector<2x128xf32>
    %498 = arith.mulf %478, %488 : vector<2x128xf32>
    %499 = arith.addf %497, %498 : vector<2x128xf32>
    %500 = math.tanh %499 : vector<2x128xf32>
    %501 = arith.mulf %496, %500 : vector<2x128xf32>
    %502 = arith.index_cast %c5_i32 : i32 to index
    %c0_246 = arith.constant 0 : index
    %c0_247 = arith.constant 0 : index
    %503 = vector.load %arg16[%502, %c0_246, %c0_247] : memref<8x2x512xf32, #tpu.memory_space<vmem>>, vector<1x2x512xf32>
    %504 = vector.shape_cast %503 : vector<1x2x512xf32> to vector<2x512xf32>
    %505 = arith.truncf %464 : vector<2x128xf32> to vector<2x128xbf16>
    %cst_248 = arith.constant dense<0.000000e+00> : vector<2x512xf32>
    %506 = tpu.matmul %505, %119, %cst_248 {dimension_numbers = #tpu.dot_dimension_numbers<[1], [0], [0], [1], [0, 0, 1, 1], [], []>} : vector<2x128xbf16>, vector<128x512xbf16>, vector<2x512xf32> -> vector<2x512xf32>
    %507 = arith.addf %504, %506 : vector<2x512xf32>
    %508 = vector.extract_strided_slice %507 {offsets = [0, 0], sizes = [2, 128], strides = [1, 1]} : vector<2x512xf32> to vector<2x128xf32>
    %cst_249 = arith.constant 5.000000e-01 : f32
    %509 = vector.broadcast %cst_249 : f32 to vector<2x128xf32>
    %510 = arith.mulf %509, %508 : vector<2x128xf32>
    %511 = math.tanh %510 : vector<2x128xf32>
    %cst_250 = arith.constant 5.000000e-01 : f32
    %512 = vector.broadcast %cst_250 : f32 to vector<2x128xf32>
    %513 = arith.mulf %512, %511 : vector<2x128xf32>
    %cst_251 = arith.constant 5.000000e-01 : f32
    %514 = vector.broadcast %cst_251 : f32 to vector<2x128xf32>
    %515 = arith.addf %513, %514 : vector<2x128xf32>
    %516 = vector.extract_strided_slice %507 {offsets = [0, 128], sizes = [2, 128], strides = [1, 1]} : vector<2x512xf32> to vector<2x128xf32>
    %cst_252 = arith.constant 5.000000e-01 : f32
    %517 = vector.broadcast %cst_252 : f32 to vector<2x128xf32>
    %518 = arith.mulf %517, %516 : vector<2x128xf32>
    %519 = math.tanh %518 : vector<2x128xf32>
    %cst_253 = arith.constant 5.000000e-01 : f32
    %520 = vector.broadcast %cst_253 : f32 to vector<2x128xf32>
    %521 = arith.mulf %520, %519 : vector<2x128xf32>
    %cst_254 = arith.constant 5.000000e-01 : f32
    %522 = vector.broadcast %cst_254 : f32 to vector<2x128xf32>
    %523 = arith.addf %521, %522 : vector<2x128xf32>
    %524 = vector.extract_strided_slice %507 {offsets = [0, 256], sizes = [2, 128], strides = [1, 1]} : vector<2x512xf32> to vector<2x128xf32>
    %525 = math.tanh %524 : vector<2x128xf32>
    %526 = vector.extract_strided_slice %507 {offsets = [0, 384], sizes = [2, 128], strides = [1, 1]} : vector<2x512xf32> to vector<2x128xf32>
    %cst_255 = arith.constant 5.000000e-01 : f32
    %527 = vector.broadcast %cst_255 : f32 to vector<2x128xf32>
    %528 = arith.mulf %527, %526 : vector<2x128xf32>
    %529 = math.tanh %528 : vector<2x128xf32>
    %cst_256 = arith.constant 5.000000e-01 : f32
    %530 = vector.broadcast %cst_256 : f32 to vector<2x128xf32>
    %531 = arith.mulf %530, %529 : vector<2x128xf32>
    %cst_257 = arith.constant 5.000000e-01 : f32
    %532 = vector.broadcast %cst_257 : f32 to vector<2x128xf32>
    %533 = arith.addf %531, %532 : vector<2x128xf32>
    %534 = arith.mulf %523, %462 : vector<2x128xf32>
    %535 = arith.mulf %515, %525 : vector<2x128xf32>
    %536 = arith.addf %534, %535 : vector<2x128xf32>
    %537 = math.tanh %536 : vector<2x128xf32>
    %538 = arith.mulf %533, %537 : vector<2x128xf32>
    %c6_i32 = arith.constant 6 : i32
    %539 = arith.truncf %538 : vector<2x128xf32> to vector<2x128xbf16>
    %cst_258 = arith.constant dense<0.000000e+00> : vector<2x512xf32>
    %540 = tpu.matmul %539, %120, %cst_258 {dimension_numbers = #tpu.dot_dimension_numbers<[1], [0], [0], [1], [0, 0, 1, 1], [], []>} : vector<2x128xbf16>, vector<128x512xbf16>, vector<2x512xf32> -> vector<2x512xf32>
    %541 = arith.truncf %501 : vector<2x128xf32> to vector<2x128xbf16>
    %cst_259 = arith.constant dense<0.000000e+00> : vector<2x512xf32>
    %542 = tpu.matmul %541, %121, %cst_259 {dimension_numbers = #tpu.dot_dimension_numbers<[1], [0], [0], [1], [0, 0, 1, 1], [], []>} : vector<2x128xbf16>, vector<128x512xbf16>, vector<2x512xf32> -> vector<2x512xf32>
    %543 = arith.addf %540, %542 : vector<2x512xf32>
    %544 = arith.addf %543, %124 : vector<2x512xf32>
    %545 = vector.extract_strided_slice %544 {offsets = [0, 0], sizes = [2, 128], strides = [1, 1]} : vector<2x512xf32> to vector<2x128xf32>
    %cst_260 = arith.constant 5.000000e-01 : f32
    %546 = vector.broadcast %cst_260 : f32 to vector<2x128xf32>
    %547 = arith.mulf %546, %545 : vector<2x128xf32>
    %548 = math.tanh %547 : vector<2x128xf32>
    %cst_261 = arith.constant 5.000000e-01 : f32
    %549 = vector.broadcast %cst_261 : f32 to vector<2x128xf32>
    %550 = arith.mulf %549, %548 : vector<2x128xf32>
    %cst_262 = arith.constant 5.000000e-01 : f32
    %551 = vector.broadcast %cst_262 : f32 to vector<2x128xf32>
    %552 = arith.addf %550, %551 : vector<2x128xf32>
    %553 = vector.extract_strided_slice %544 {offsets = [0, 128], sizes = [2, 128], strides = [1, 1]} : vector<2x512xf32> to vector<2x128xf32>
    %cst_263 = arith.constant 5.000000e-01 : f32
    %554 = vector.broadcast %cst_263 : f32 to vector<2x128xf32>
    %555 = arith.mulf %554, %553 : vector<2x128xf32>
    %556 = math.tanh %555 : vector<2x128xf32>
    %cst_264 = arith.constant 5.000000e-01 : f32
    %557 = vector.broadcast %cst_264 : f32 to vector<2x128xf32>
    %558 = arith.mulf %557, %556 : vector<2x128xf32>
    %cst_265 = arith.constant 5.000000e-01 : f32
    %559 = vector.broadcast %cst_265 : f32 to vector<2x128xf32>
    %560 = arith.addf %558, %559 : vector<2x128xf32>
    %561 = vector.extract_strided_slice %544 {offsets = [0, 256], sizes = [2, 128], strides = [1, 1]} : vector<2x512xf32> to vector<2x128xf32>
    %562 = math.tanh %561 : vector<2x128xf32>
    %563 = vector.extract_strided_slice %544 {offsets = [0, 384], sizes = [2, 128], strides = [1, 1]} : vector<2x512xf32> to vector<2x128xf32>
    %cst_266 = arith.constant 5.000000e-01 : f32
    %564 = vector.broadcast %cst_266 : f32 to vector<2x128xf32>
    %565 = arith.mulf %564, %563 : vector<2x128xf32>
    %566 = math.tanh %565 : vector<2x128xf32>
    %cst_267 = arith.constant 5.000000e-01 : f32
    %567 = vector.broadcast %cst_267 : f32 to vector<2x128xf32>
    %568 = arith.mulf %567, %566 : vector<2x128xf32>
    %cst_268 = arith.constant 5.000000e-01 : f32
    %569 = vector.broadcast %cst_268 : f32 to vector<2x128xf32>
    %570 = arith.addf %568, %569 : vector<2x128xf32>
    %571 = arith.mulf %560, %499 : vector<2x128xf32>
    %572 = arith.mulf %552, %562 : vector<2x128xf32>
    %573 = arith.addf %571, %572 : vector<2x128xf32>
    %574 = math.tanh %573 : vector<2x128xf32>
    %575 = arith.mulf %570, %574 : vector<2x128xf32>
    %576 = arith.index_cast %c6_i32 : i32 to index
    %c0_269 = arith.constant 0 : index
    %c0_270 = arith.constant 0 : index
    %577 = vector.load %arg16[%576, %c0_269, %c0_270] : memref<8x2x512xf32, #tpu.memory_space<vmem>>, vector<1x2x512xf32>
    %578 = vector.shape_cast %577 : vector<1x2x512xf32> to vector<2x512xf32>
    %579 = arith.truncf %538 : vector<2x128xf32> to vector<2x128xbf16>
    %cst_271 = arith.constant dense<0.000000e+00> : vector<2x512xf32>
    %580 = tpu.matmul %579, %119, %cst_271 {dimension_numbers = #tpu.dot_dimension_numbers<[1], [0], [0], [1], [0, 0, 1, 1], [], []>} : vector<2x128xbf16>, vector<128x512xbf16>, vector<2x512xf32> -> vector<2x512xf32>
    %581 = arith.addf %578, %580 : vector<2x512xf32>
    %582 = vector.extract_strided_slice %581 {offsets = [0, 0], sizes = [2, 128], strides = [1, 1]} : vector<2x512xf32> to vector<2x128xf32>
    %cst_272 = arith.constant 5.000000e-01 : f32
    %583 = vector.broadcast %cst_272 : f32 to vector<2x128xf32>
    %584 = arith.mulf %583, %582 : vector<2x128xf32>
    %585 = math.tanh %584 : vector<2x128xf32>
    %cst_273 = arith.constant 5.000000e-01 : f32
    %586 = vector.broadcast %cst_273 : f32 to vector<2x128xf32>
    %587 = arith.mulf %586, %585 : vector<2x128xf32>
    %cst_274 = arith.constant 5.000000e-01 : f32
    %588 = vector.broadcast %cst_274 : f32 to vector<2x128xf32>
    %589 = arith.addf %587, %588 : vector<2x128xf32>
    %590 = vector.extract_strided_slice %581 {offsets = [0, 128], sizes = [2, 128], strides = [1, 1]} : vector<2x512xf32> to vector<2x128xf32>
    %cst_275 = arith.constant 5.000000e-01 : f32
    %591 = vector.broadcast %cst_275 : f32 to vector<2x128xf32>
    %592 = arith.mulf %591, %590 : vector<2x128xf32>
    %593 = math.tanh %592 : vector<2x128xf32>
    %cst_276 = arith.constant 5.000000e-01 : f32
    %594 = vector.broadcast %cst_276 : f32 to vector<2x128xf32>
    %595 = arith.mulf %594, %593 : vector<2x128xf32>
    %cst_277 = arith.constant 5.000000e-01 : f32
    %596 = vector.broadcast %cst_277 : f32 to vector<2x128xf32>
    %597 = arith.addf %595, %596 : vector<2x128xf32>
    %598 = vector.extract_strided_slice %581 {offsets = [0, 256], sizes = [2, 128], strides = [1, 1]} : vector<2x512xf32> to vector<2x128xf32>
    %599 = math.tanh %598 : vector<2x128xf32>
    %600 = vector.extract_strided_slice %581 {offsets = [0, 384], sizes = [2, 128], strides = [1, 1]} : vector<2x512xf32> to vector<2x128xf32>
    %cst_278 = arith.constant 5.000000e-01 : f32
    %601 = vector.broadcast %cst_278 : f32 to vector<2x128xf32>
    %602 = arith.mulf %601, %600 : vector<2x128xf32>
    %603 = math.tanh %602 : vector<2x128xf32>
    %cst_279 = arith.constant 5.000000e-01 : f32
    %604 = vector.broadcast %cst_279 : f32 to vector<2x128xf32>
    %605 = arith.mulf %604, %603 : vector<2x128xf32>
    %cst_280 = arith.constant 5.000000e-01 : f32
    %606 = vector.broadcast %cst_280 : f32 to vector<2x128xf32>
    %607 = arith.addf %605, %606 : vector<2x128xf32>
    %608 = arith.mulf %597, %536 : vector<2x128xf32>
    %609 = arith.mulf %589, %599 : vector<2x128xf32>
    %610 = arith.addf %608, %609 : vector<2x128xf32>
    %611 = math.tanh %610 : vector<2x128xf32>
    %612 = arith.mulf %607, %611 : vector<2x128xf32>
    %c7_i32 = arith.constant 7 : i32
    %613 = arith.truncf %612 : vector<2x128xf32> to vector<2x128xbf16>
    %cst_281 = arith.constant dense<0.000000e+00> : vector<2x512xf32>
    %614 = tpu.matmul %613, %120, %cst_281 {dimension_numbers = #tpu.dot_dimension_numbers<[1], [0], [0], [1], [0, 0, 1, 1], [], []>} : vector<2x128xbf16>, vector<128x512xbf16>, vector<2x512xf32> -> vector<2x512xf32>
    %615 = arith.truncf %575 : vector<2x128xf32> to vector<2x128xbf16>
    %cst_282 = arith.constant dense<0.000000e+00> : vector<2x512xf32>
    %616 = tpu.matmul %615, %121, %cst_282 {dimension_numbers = #tpu.dot_dimension_numbers<[1], [0], [0], [1], [0, 0, 1, 1], [], []>} : vector<2x128xbf16>, vector<128x512xbf16>, vector<2x512xf32> -> vector<2x512xf32>
    %617 = arith.addf %614, %616 : vector<2x512xf32>
    %618 = arith.addf %617, %124 : vector<2x512xf32>
    %619 = vector.extract_strided_slice %618 {offsets = [0, 0], sizes = [2, 128], strides = [1, 1]} : vector<2x512xf32> to vector<2x128xf32>
    %cst_283 = arith.constant 5.000000e-01 : f32
    %620 = vector.broadcast %cst_283 : f32 to vector<2x128xf32>
    %621 = arith.mulf %620, %619 : vector<2x128xf32>
    %622 = math.tanh %621 : vector<2x128xf32>
    %cst_284 = arith.constant 5.000000e-01 : f32
    %623 = vector.broadcast %cst_284 : f32 to vector<2x128xf32>
    %624 = arith.mulf %623, %622 : vector<2x128xf32>
    %cst_285 = arith.constant 5.000000e-01 : f32
    %625 = vector.broadcast %cst_285 : f32 to vector<2x128xf32>
    %626 = arith.addf %624, %625 : vector<2x128xf32>
    %627 = vector.extract_strided_slice %618 {offsets = [0, 128], sizes = [2, 128], strides = [1, 1]} : vector<2x512xf32> to vector<2x128xf32>
    %cst_286 = arith.constant 5.000000e-01 : f32
    %628 = vector.broadcast %cst_286 : f32 to vector<2x128xf32>
    %629 = arith.mulf %628, %627 : vector<2x128xf32>
    %630 = math.tanh %629 : vector<2x128xf32>
    %cst_287 = arith.constant 5.000000e-01 : f32
    %631 = vector.broadcast %cst_287 : f32 to vector<2x128xf32>
    %632 = arith.mulf %631, %630 : vector<2x128xf32>
    %cst_288 = arith.constant 5.000000e-01 : f32
    %633 = vector.broadcast %cst_288 : f32 to vector<2x128xf32>
    %634 = arith.addf %632, %633 : vector<2x128xf32>
    %635 = vector.extract_strided_slice %618 {offsets = [0, 256], sizes = [2, 128], strides = [1, 1]} : vector<2x512xf32> to vector<2x128xf32>
    %636 = math.tanh %635 : vector<2x128xf32>
    %637 = vector.extract_strided_slice %618 {offsets = [0, 384], sizes = [2, 128], strides = [1, 1]} : vector<2x512xf32> to vector<2x128xf32>
    %cst_289 = arith.constant 5.000000e-01 : f32
    %638 = vector.broadcast %cst_289 : f32 to vector<2x128xf32>
    %639 = arith.mulf %638, %637 : vector<2x128xf32>
    %640 = math.tanh %639 : vector<2x128xf32>
    %cst_290 = arith.constant 5.000000e-01 : f32
    %641 = vector.broadcast %cst_290 : f32 to vector<2x128xf32>
    %642 = arith.mulf %641, %640 : vector<2x128xf32>
    %cst_291 = arith.constant 5.000000e-01 : f32
    %643 = vector.broadcast %cst_291 : f32 to vector<2x128xf32>
    %644 = arith.addf %642, %643 : vector<2x128xf32>
    %645 = arith.mulf %634, %573 : vector<2x128xf32>
    %646 = arith.mulf %626, %636 : vector<2x128xf32>
    %647 = arith.addf %645, %646 : vector<2x128xf32>
    %648 = math.tanh %647 : vector<2x128xf32>
    %649 = arith.mulf %644, %648 : vector<2x128xf32>
    %650 = arith.index_cast %c7_i32 : i32 to index
    %c0_292 = arith.constant 0 : index
    %c0_293 = arith.constant 0 : index
    %651 = vector.load %arg16[%650, %c0_292, %c0_293] : memref<8x2x512xf32, #tpu.memory_space<vmem>>, vector<1x2x512xf32>
    %652 = vector.shape_cast %651 : vector<1x2x512xf32> to vector<2x512xf32>
    %653 = arith.truncf %612 : vector<2x128xf32> to vector<2x128xbf16>
    %cst_294 = arith.constant dense<0.000000e+00> : vector<2x512xf32>
    %654 = tpu.matmul %653, %119, %cst_294 {dimension_numbers = #tpu.dot_dimension_numbers<[1], [0], [0], [1], [0, 0, 1, 1], [], []>} : vector<2x128xbf16>, vector<128x512xbf16>, vector<2x512xf32> -> vector<2x512xf32>
    %655 = arith.addf %652, %654 : vector<2x512xf32>
    %656 = vector.extract_strided_slice %655 {offsets = [0, 0], sizes = [2, 128], strides = [1, 1]} : vector<2x512xf32> to vector<2x128xf32>
    %cst_295 = arith.constant 5.000000e-01 : f32
    %657 = vector.broadcast %cst_295 : f32 to vector<2x128xf32>
    %658 = arith.mulf %657, %656 : vector<2x128xf32>
    %659 = math.tanh %658 : vector<2x128xf32>
    %cst_296 = arith.constant 5.000000e-01 : f32
    %660 = vector.broadcast %cst_296 : f32 to vector<2x128xf32>
    %661 = arith.mulf %660, %659 : vector<2x128xf32>
    %cst_297 = arith.constant 5.000000e-01 : f32
    %662 = vector.broadcast %cst_297 : f32 to vector<2x128xf32>
    %663 = arith.addf %661, %662 : vector<2x128xf32>
    %664 = vector.extract_strided_slice %655 {offsets = [0, 128], sizes = [2, 128], strides = [1, 1]} : vector<2x512xf32> to vector<2x128xf32>
    %cst_298 = arith.constant 5.000000e-01 : f32
    %665 = vector.broadcast %cst_298 : f32 to vector<2x128xf32>
    %666 = arith.mulf %665, %664 : vector<2x128xf32>
    %667 = math.tanh %666 : vector<2x128xf32>
    %cst_299 = arith.constant 5.000000e-01 : f32
    %668 = vector.broadcast %cst_299 : f32 to vector<2x128xf32>
    %669 = arith.mulf %668, %667 : vector<2x128xf32>
    %cst_300 = arith.constant 5.000000e-01 : f32
    %670 = vector.broadcast %cst_300 : f32 to vector<2x128xf32>
    %671 = arith.addf %669, %670 : vector<2x128xf32>
    %672 = vector.extract_strided_slice %655 {offsets = [0, 256], sizes = [2, 128], strides = [1, 1]} : vector<2x512xf32> to vector<2x128xf32>
    %673 = math.tanh %672 : vector<2x128xf32>
    %674 = vector.extract_strided_slice %655 {offsets = [0, 384], sizes = [2, 128], strides = [1, 1]} : vector<2x512xf32> to vector<2x128xf32>
    %cst_301 = arith.constant 5.000000e-01 : f32
    %675 = vector.broadcast %cst_301 : f32 to vector<2x128xf32>
    %676 = arith.mulf %675, %674 : vector<2x128xf32>
    %677 = math.tanh %676 : vector<2x128xf32>
    %cst_302 = arith.constant 5.000000e-01 : f32
    %678 = vector.broadcast %cst_302 : f32 to vector<2x128xf32>
    %679 = arith.mulf %678, %677 : vector<2x128xf32>
    %cst_303 = arith.constant 5.000000e-01 : f32
    %680 = vector.broadcast %cst_303 : f32 to vector<2x128xf32>
    %681 = arith.addf %679, %680 : vector<2x128xf32>
    %682 = arith.mulf %671, %610 : vector<2x128xf32>
    %683 = arith.mulf %663, %673 : vector<2x128xf32>
    %684 = arith.addf %682, %683 : vector<2x128xf32>
    %685 = math.tanh %684 : vector<2x128xf32>
    %686 = arith.mulf %681, %685 : vector<2x128xf32>
    %c7_i32_304 = arith.constant 7 : i32
    %687 = arith.truncf %686 : vector<2x128xf32> to vector<2x128xbf16>
    %cst_305 = arith.constant dense<0.000000e+00> : vector<2x512xf32>
    %688 = tpu.matmul %687, %120, %cst_305 {dimension_numbers = #tpu.dot_dimension_numbers<[1], [0], [0], [1], [0, 0, 1, 1], [], []>} : vector<2x128xbf16>, vector<128x512xbf16>, vector<2x512xf32> -> vector<2x512xf32>
    %689 = arith.truncf %649 : vector<2x128xf32> to vector<2x128xbf16>
    %cst_306 = arith.constant dense<0.000000e+00> : vector<2x512xf32>
    %690 = tpu.matmul %689, %121, %cst_306 {dimension_numbers = #tpu.dot_dimension_numbers<[1], [0], [0], [1], [0, 0, 1, 1], [], []>} : vector<2x128xbf16>, vector<128x512xbf16>, vector<2x512xf32> -> vector<2x512xf32>
    %691 = arith.addf %688, %690 : vector<2x512xf32>
    %692 = arith.addf %691, %124 : vector<2x512xf32>
    %693 = vector.extract_strided_slice %692 {offsets = [0, 0], sizes = [2, 128], strides = [1, 1]} : vector<2x512xf32> to vector<2x128xf32>
    %cst_307 = arith.constant 5.000000e-01 : f32
    %694 = vector.broadcast %cst_307 : f32 to vector<2x128xf32>
    %695 = arith.mulf %694, %693 : vector<2x128xf32>
    %696 = math.tanh %695 : vector<2x128xf32>
    %cst_308 = arith.constant 5.000000e-01 : f32
    %697 = vector.broadcast %cst_308 : f32 to vector<2x128xf32>
    %698 = arith.mulf %697, %696 : vector<2x128xf32>
    %cst_309 = arith.constant 5.000000e-01 : f32
    %699 = vector.broadcast %cst_309 : f32 to vector<2x128xf32>
    %700 = arith.addf %698, %699 : vector<2x128xf32>
    %701 = vector.extract_strided_slice %692 {offsets = [0, 128], sizes = [2, 128], strides = [1, 1]} : vector<2x512xf32> to vector<2x128xf32>
    %cst_310 = arith.constant 5.000000e-01 : f32
    %702 = vector.broadcast %cst_310 : f32 to vector<2x128xf32>
    %703 = arith.mulf %702, %701 : vector<2x128xf32>
    %704 = math.tanh %703 : vector<2x128xf32>
    %cst_311 = arith.constant 5.000000e-01 : f32
    %705 = vector.broadcast %cst_311 : f32 to vector<2x128xf32>
    %706 = arith.mulf %705, %704 : vector<2x128xf32>
    %cst_312 = arith.constant 5.000000e-01 : f32
    %707 = vector.broadcast %cst_312 : f32 to vector<2x128xf32>
    %708 = arith.addf %706, %707 : vector<2x128xf32>
    %709 = vector.extract_strided_slice %692 {offsets = [0, 256], sizes = [2, 128], strides = [1, 1]} : vector<2x512xf32> to vector<2x128xf32>
    %710 = math.tanh %709 : vector<2x128xf32>
    %711 = vector.extract_strided_slice %692 {offsets = [0, 384], sizes = [2, 128], strides = [1, 1]} : vector<2x512xf32> to vector<2x128xf32>
    %cst_313 = arith.constant 5.000000e-01 : f32
    %712 = vector.broadcast %cst_313 : f32 to vector<2x128xf32>
    %713 = arith.mulf %712, %711 : vector<2x128xf32>
    %714 = math.tanh %713 : vector<2x128xf32>
    %cst_314 = arith.constant 5.000000e-01 : f32
    %715 = vector.broadcast %cst_314 : f32 to vector<2x128xf32>
    %716 = arith.mulf %715, %714 : vector<2x128xf32>
    %cst_315 = arith.constant 5.000000e-01 : f32
    %717 = vector.broadcast %cst_315 : f32 to vector<2x128xf32>
    %718 = arith.addf %716, %717 : vector<2x128xf32>
    %719 = arith.mulf %708, %647 : vector<2x128xf32>
    %720 = arith.mulf %700, %710 : vector<2x128xf32>
    %721 = arith.addf %719, %720 : vector<2x128xf32>
    %722 = math.tanh %721 : vector<2x128xf32>
    %723 = arith.mulf %718, %722 : vector<2x128xf32>
    %c0_316 = arith.constant 0 : index
    %c0_317 = arith.constant 0 : index
    %c0_318 = arith.constant 0 : index
    %724 = vector.load %arg13[%c0_316, %c0_317, %c0_318] : memref<2x2x128xf32, #tpu.memory_space<vmem>>, vector<1x2x128xf32>
    %725 = vector.shape_cast %724 : vector<1x2x128xf32> to vector<2x128xf32>
    %726 = vector.shape_cast %686 : vector<2x128xf32> to vector<1x2x128xf32>
    tpu.vector_store %arg13[%c0_316, %c0_317, %c0_318], %726 {strides = array<i32>} : memref<2x2x128xf32, #tpu.memory_space<vmem>>, vector<1x2x128xf32>,
    %c1_319 = arith.constant 1 : index
    %c0_320 = arith.constant 0 : index
    %c0_321 = arith.constant 0 : index
    %727 = vector.load %arg13[%c1_319, %c0_320, %c0_321] : memref<2x2x128xf32, #tpu.memory_space<vmem>>, vector<1x2x128xf32>
    %728 = vector.shape_cast %727 : vector<1x2x128xf32> to vector<2x128xf32>
    %729 = vector.shape_cast %723 : vector<2x128xf32> to vector<1x2x128xf32>
    tpu.vector_store %arg13[%c1_319, %c0_320, %c0_321], %729 {strides = array<i32>} : memref<2x2x128xf32, #tpu.memory_space<vmem>>, vector<1x2x128xf32>,
    %c0_322 = arith.constant 0 : index
    %c0_323 = arith.constant 0 : index
    %c0_324 = arith.constant 0 : index
    %730 = vector.load %arg14[%c0_322, %c0_323, %c0_324] : memref<2x2x128xf32, #tpu.memory_space<vmem>>, vector<1x2x128xf32>
    %731 = vector.shape_cast %730 : vector<1x2x128xf32> to vector<2x128xf32>
    %732 = vector.shape_cast %684 : vector<2x128xf32> to vector<1x2x128xf32>
    tpu.vector_store %arg14[%c0_322, %c0_323, %c0_324], %732 {strides = array<i32>} : memref<2x2x128xf32, #tpu.memory_space<vmem>>, vector<1x2x128xf32>,
    %c1_325 = arith.constant 1 : index
    %c0_326 = arith.constant 0 : index
    %c0_327 = arith.constant 0 : index
    %733 = vector.load %arg14[%c1_325, %c0_326, %c0_327] : memref<2x2x128xf32, #tpu.memory_space<vmem>>, vector<1x2x128xf32>
    %734 = vector.shape_cast %733 : vector<1x2x128xf32> to vector<2x128xf32>
    %735 = vector.shape_cast %721 : vector<2x128xf32> to vector<1x2x128xf32>
    tpu.vector_store %arg14[%c1_325, %c0_326, %c0_327], %735 {strides = array<i32>} : memref<2x2x128xf32, #tpu.memory_space<vmem>>, vector<1x2x128xf32>,
    %736 = arith.truncf %723 : vector<2x128xf32> to vector<2x128xbf16>
    %c0_328 = arith.constant 0 : index
    %c0_329 = arith.constant 0 : index
    %737 = vector.load %arg10[%c0_328, %c0_329] : memref<128x512xbf16, #tpu.memory_space<vmem>>, vector<128x512xbf16>
    %cst_330 = arith.constant dense<0.000000e+00> : vector<2x512xf32>
    %738 = tpu.matmul %736, %737, %cst_330 {dimension_numbers = #tpu.dot_dimension_numbers<[1], [0], [0], [1], [0, 0, 1, 1], [], []>} : vector<2x128xbf16>, vector<128x512xbf16>, vector<2x512xf32> -> vector<2x512xf32>
    %c0_331 = arith.constant 0 : index
    %c0_332 = arith.constant 0 : index
    %739 = vector.load %arg11[%c0_331, %c0_332] : memref<1x512xf32, #tpu.memory_space<vmem>>, vector<1x512xf32>
    %740 = vector.broadcast %739 : vector<1x512xf32> to vector<2x512xf32>
    %741 = arith.addf %738, %740 : vector<2x512xf32>
    %c0_333 = arith.constant 0 : index
    %c0_334 = arith.constant 0 : index
    %742 = vector.load %arg12[%c0_333, %c0_334] : memref<2x512xf32, #tpu.memory_space<vmem>>, vector<2x512xf32>
    tpu.vector_store %arg12[%c0_333, %c0_334], %741 {strides = array<i32>} : memref<2x512xf32, #tpu.memory_space<vmem>>, vector<2x512xf32>,
    return
  }
}

</mosaic_0001>

<llo_original>
// kernel: rnn_forward.1
$region0: #{rnn_forward.1}
  #allocation0 [shape = 'u32[]', space=smem, size = 0x4, offset = 0x4, fixed_abs, tag = 'smem constant byte address 0x4 - core index']
  #allocation1 [shape = 'u32[144,128]{1,0:T(1,128)}', space=vmem, size = 0x12000, scoped, tag = 'internal scratch']
  #allocation2 [shape = 'f32[16,128]{1,0:T(8,128)}', space=vmem, size = 0x2000, scoped, tag = 'scratch operand']
  #allocation3 [shape = 'f32[8,2,512]{2,1,0:T(2,128)}', space=vmem, size = 0x8000, scoped, tag = 'scratch operand']
  %s0 = inlined_call_operand.hbm [shape: s32[2,8], index: 0, kind: input, shape index: {}]
  %s1 = inlined_call_operand.hbm [shape: f32[512,1,128], index: 1, kind: input, shape index: {}]
  %s2 = inlined_call_operand.hbm [shape: bf16[128,512], index: 2, kind: input, shape index: {}]
  %s3 = inlined_call_operand.hbm [shape: bf16[128,512], index: 3, kind: input, shape index: {}]
  %s4 = inlined_call_operand.vmem [shape: f32[1,512], index: 4, kind: input, shape index: {}]
  %s5 = inlined_call_operand.hbm [shape: bf16[128,512], index: 5, kind: input, shape index: {}]
  %s6 = inlined_call_operand.hbm [shape: bf16[128,512], index: 6, kind: input, shape index: {}]
  %s7 = inlined_call_operand.hbm [shape: f32[1,512], index: 7, kind: input, shape index: {}]
  %s8 = inlined_call_operand.hbm [shape: f32[2,2,128], index: 8, kind: input, shape index: {}]
  %s9 = inlined_call_operand.hbm [shape: f32[2,2,128], index: 9, kind: input, shape index: {}]
  %s10 = inlined_call_operand.hbm [shape: bf16[128,512], index: 10, kind: input, shape index: {}]
  %s11 = inlined_call_operand.vmem [shape: f32[1,512], index: 11, kind: input, shape index: {}]
  %s12 = inlined_call_operand.hbm [shape: f32[2,512], index: 12, kind: output, shape index: {0}]
  %s13 = inlined_call_operand.hbm [shape: f32[2,2,128], index: 13, kind: output, shape index: {1}]
  %s14 = inlined_call_operand.hbm [shape: f32[2,2,128], index: 14, kind: output, shape index: {2}]
  %15 = xla_tuple %s12, %s13, %s14
  %s16 = sld [smem:[#allocation0]]
  $region114: #{rnn_forward.1} parent=0
    _
  %s18 = ssub.s32 1, %s16
  %s19 = scalar_select 0, %s18, %s16
  $region1: #{rnn_forward.1} parent=0
    #allocation4 [shape = 'u8[1024]{0}', space=smem, size = 0x400, scoped, tag = 'input window, operand 0, single buffered']
    #allocation5 [shape = 's32[1]{0}', space=sflag, size = 0x4, scoped, tag = 'scoped memory for rnn_forward.1']
    #allocation6 [shape = 's32[1]{0}', space=sflag, size = 0x4, scoped, tag = 'scoped memory for rnn_forward.1']
    #allocation7 [shape = 's32[1]{0}', space=sflag, size = 0x4, scoped, tag = 'scoped memory for rnn_forward.1']
    #allocation8 [shape = 'u8[262144]{0}', space=vmem, size = 0x40000, scoped, tag = 'input window, operand 1, single buffered']
    #allocation9 [shape = 'u8[131072]{0}', space=vmem, size = 0x20000, scoped, tag = 'input window, operand 2, single buffered']
    #allocation10 [shape = 's32[1]{0}', space=sflag, size = 0x4, scoped, tag = 'scoped memory for rnn_forward.1']
    #allocation11 [shape = 'u8[131072]{0}', space=vmem, size = 0x20000, scoped, tag = 'input window, operand 3, single buffered']
    #allocation12 [shape = 'u8[131072]{0}', space=vmem, size = 0x20000, scoped, tag = 'input window, operand 5, single buffered']
    #allocation13 [shape = 's32[1]{0}', space=sflag, size = 0x4, scoped, tag = 'scoped memory for rnn_forward.1']
    #allocation14 [shape = 'u8[131072]{0}', space=vmem, size = 0x20000, scoped, tag = 'input window, operand 6, single buffered']
    #allocation15 [shape = 'u8[2048]{0}', space=vmem, size = 0x800, scoped, tag = 'input window, operand 7, single buffered']
    #allocation16 [shape = 's32[1]{0}', space=sflag, size = 0x4, scoped, tag = 'scoped memory for rnn_forward.1']
    #allocation17 [shape = 'u8[2048]{0}', space=vmem, size = 0x800, scoped, tag = 'input window, operand 8, single buffered']
    #allocation18 [shape = 'u8[2048]{0}', space=vmem, size = 0x800, scoped, tag = 'input window, operand 9, single buffered']
    #allocation19 [shape = 's32[1]{0}', space=sflag, size = 0x4, scoped, tag = 'scoped memory for rnn_forward.1']
    #allocation20 [shape = 'u8[131072]{0}', space=vmem, size = 0x20000, scoped, tag = 'input window, operand 10, single buffered']
    #allocation21 [shape = 'u8[4096]{0}', space=vmem, size = 0x1000, scoped, tag = 'output window, operand 0, single buffered']
    #allocation22 [shape = 'u8[2048]{0}', space=vmem, size = 0x800, scoped, tag = 'output window, operand 1, single buffered']
    #allocation23 [shape = 's32[1]{0}', space=sflag, size = 0x4, scoped, tag = 'scoped memory for rnn_forward.1']
    #allocation24 [shape = 'u8[2048]{0}', space=vmem, size = 0x800, scoped, tag = 'output window, operand 2, single buffered']
    %20 = vsyncpa [#allocation7], 0
    %21 = vsyncpa [#allocation5], 0
    %22 = vsyncpa [#allocation10], 0
    %23 = vsyncpa [#allocation13], 0
    %24 = vsyncpa [#allocation16], 0
    %25 = vsyncpa [#allocation19], 0
    %26 = vsyncpa [#allocation6], 0
    %27 = vsyncpa [#allocation23], 0
    // Predicated region
    $region2: #{rnn_forward.1} parent=1 // pred_check
      _
    $region3: #{rnn_forward.1} parent=1 // pred_check_branch
      %29 = sbr.rel (0) target = $region5
    $region4: #{rnn_forward.1} parent=1 // pred_region
      %s31 = ssub.s32 32, 32
      %32 = vsyncadd [#allocation7], %s31
      %35 = dma.hbm_to_smem %s0, 32, [#allocation4], [#allocation7]
    $region5: #{rnn_forward.1} parent=1 // pred_fallthru
      _
    // Predicated region
    $region6: #{rnn_forward.1} parent=1 // pred_check
      _
    $region7: #{rnn_forward.1} parent=1 // pred_check_branch
      %37 = sbr.rel (0) target = $region9
    $region8: #{rnn_forward.1} parent=1 // pred_region
      %s39 = ssub.s32 8192, 8192
      %40 = vsyncadd [#allocation5], %s39
      %s41 = sshll.u32 [#allocation8], 4
      %s42 = int_to_ptr.vmem [resolvable:$true] %s41
      %47 = dma.hbm_to_vmem [thread:$0]  %s1, 8192, %s42, [#allocation5], 16, 16, 1
    $region9: #{rnn_forward.1} parent=1 // pred_fallthru
      _
    // Predicated region
    $region10: #{rnn_forward.1} parent=1 // pred_check
      _
    $region11: #{rnn_forward.1} parent=1 // pred_check_branch
      %49 = sbr.rel (0) target = $region13
    $region12: #{rnn_forward.1} parent=1 // pred_region
      %s51 = ssub.s32 4096, 4096
      %52 = vsyncadd [#allocation10], %s51
      %s53 = sshll.u32 [#allocation9], 4
      %s54 = int_to_ptr.vmem [resolvable:$true] %s53
      %59 = dma.hbm_to_vmem [thread:$0]  %s2, 4096, %s54, [#allocation10], 256, 256, 16
    $region13: #{rnn_forward.1} parent=1 // pred_fallthru
      _
    // Predicated region
    $region14: #{rnn_forward.1} parent=1 // pred_check
      _
    $region15: #{rnn_forward.1} parent=1 // pred_check_branch
      %61 = sbr.rel (0) target = $region17
    $region16: #{rnn_forward.1} parent=1 // pred_region
      %s63 = ssub.s32 4096, 4096
      %64 = vsyncadd [#allocation10], %s63
      %s65 = sshll.u32 [#allocation11], 4
      %s66 = int_to_ptr.vmem [resolvable:$true] %s65
      %71 = dma.hbm_to_vmem [thread:$0]  %s3, 4096, %s66, [#allocation10], 256, 256, 16
    $region17: #{rnn_forward.1} parent=1 // pred_fallthru
      _
    // Predicated region
    $region18: #{rnn_forward.1} parent=1 // pred_check
      _
    $region19: #{rnn_forward.1} parent=1 // pred_check_branch
      %73 = sbr.rel (0) target = $region21
    $region20: #{rnn_forward.1} parent=1 // pred_region
      _
    $region21: #{rnn_forward.1} parent=1 // pred_fallthru
      _
    // Predicated region
    $region22: #{rnn_forward.1} parent=1 // pred_check
      _
    $region23: #{rnn_forward.1} parent=1 // pred_check_branch
      %75 = sbr.rel (0) target = $region25
    $region24: #{rnn_forward.1} parent=1 // pred_region
      %s77 = ssub.s32 4096, 4096
      %78 = vsyncadd [#allocation13], %s77
      %s79 = sshll.u32 [#allocation12], 4
      %s80 = int_to_ptr.vmem [resolvable:$true] %s79
      %85 = dma.hbm_to_vmem [thread:$0]  %s5, 4096, %s80, [#allocation13], 256, 256, 16
    $region25: #{rnn_forward.1} parent=1 // pred_fallthru
      _
    // Predicated region
    $region26: #{rnn_forward.1} parent=1 // pred_check
      _
    $region27: #{rnn_forward.1} parent=1 // pred_check_branch
      %87 = sbr.rel (0) target = $region29
    $region28: #{rnn_forward.1} parent=1 // pred_region
      %s89 = ssub.s32 4096, 4096
      %90 = vsyncadd [#allocation13], %s89
      %s91 = sshll.u32 [#allocation14], 4
      %s92 = int_to_ptr.vmem [resolvable:$true] %s91
      %97 = dma.hbm_to_vmem [thread:$0]  %s6, 4096, %s92, [#allocation13], 256, 256, 16
    $region29: #{rnn_forward.1} parent=1 // pred_fallthru
      _
    // Predicated region
    $region30: #{rnn_forward.1} parent=1 // pred_check
      _
    $region31: #{rnn_forward.1} parent=1 // pred_check_branch
      %99 = sbr.rel (0) target = $region33
    $region32: #{rnn_forward.1} parent=1 // pred_region
      %s101 = ssub.s32 64, 64
      %102 = vsyncadd [#allocation16], %s101
      %s104 = sshll.u32 [#allocation15], 4
      %s105 = int_to_ptr.vmem [resolvable:$true] %s104
      %107 = dma.hbm_to_vmem [thread:$0]  %s7, 64, %s105, [#allocation16]
    $region33: #{rnn_forward.1} parent=1 // pred_fallthru
      _
    // Predicated region
    $region34: #{rnn_forward.1} parent=1 // pred_check
      _
    $region35: #{rnn_forward.1} parent=1 // pred_check_branch
      %109 = sbr.rel (0) target = $region37
    $region36: #{rnn_forward.1} parent=1 // pred_region
      %s111 = ssub.s32 64, 64
      %112 = vsyncadd [#allocation16], %s111
      %s113 = sshll.u32 [#allocation17], 4
      %s114 = int_to_ptr.vmem [resolvable:$true] %s113
      %119 = dma.hbm_to_vmem [thread:$0]  %s8, 64, %s114, [#allocation16], 32, 32, 2
    $region37: #{rnn_forward.1} parent=1 // pred_fallthru
      _
    // Predicated region
    $region38: #{rnn_forward.1} parent=1 // pred_check
      _
    $region39: #{rnn_forward.1} parent=1 // pred_check_branch
      %121 = sbr.rel (0) target = $region41
    $region40: #{rnn_forward.1} parent=1 // pred_region
      %s123 = ssub.s32 64, 64
      %124 = vsyncadd [#allocation19], %s123
      %s125 = sshll.u32 [#allocation18], 4
      %s126 = int_to_ptr.vmem [resolvable:$true] %s125
      %131 = dma.hbm_to_vmem [thread:$0]  %s9, 64, %s126, [#allocation19], 32, 32, 2
    $region41: #{rnn_forward.1} parent=1 // pred_fallthru
      _
    // Predicated region
    $region42: #{rnn_forward.1} parent=1 // pred_check
      _
    $region43: #{rnn_forward.1} parent=1 // pred_check_branch
      %133 = sbr.rel (0) target = $region45
    $region44: #{rnn_forward.1} parent=1 // pred_region
      %s135 = ssub.s32 4096, 4096
      %136 = vsyncadd [#allocation19], %s135
      %s137 = sshll.u32 [#allocation20], 4
      %s138 = int_to_ptr.vmem [resolvable:$true] %s137
      %143 = dma.hbm_to_vmem [thread:$0]  %s10, 4096, %s138, [#allocation19], 256, 256, 16
    $region45: #{rnn_forward.1} parent=1 // pred_fallthru
      _
    // Predicated region
    $region46: #{rnn_forward.1} parent=1 // pred_check
      _
    $region47: #{rnn_forward.1} parent=1 // pred_check_branch
      %145 = sbr.rel (0) target = $region49
    $region48: #{rnn_forward.1} parent=1 // pred_region
      _
    $region49: #{rnn_forward.1} parent=1 // pred_fallthru
      _
    // Predicated region
    $region50: #{rnn_forward.1} parent=1 // pred_check
      _
    $region51: #{rnn_forward.1} parent=1 // pred_check_branch
      %147 = sbr.rel (0) target = $region53
    $region52: #{rnn_forward.1} parent=1 // pred_region
      %148 = dma.done [#allocation7], 32
    $region53: #{rnn_forward.1} parent=1 // pred_fallthru
      _
    // Predicated region
    $region54: #{rnn_forward.1} parent=1 // pred_check
      _
    $region55: #{rnn_forward.1} parent=1 // pred_check_branch
      %150 = sbr.rel (0) target = $region57
    $region56: #{rnn_forward.1} parent=1 // pred_region
      %151 = dma.done [#allocation5], 8192
    $region57: #{rnn_forward.1} parent=1 // pred_fallthru
      _
    // Predicated region
    $region58: #{rnn_forward.1} parent=1 // pred_check
      _
    $region59: #{rnn_forward.1} parent=1 // pred_check_branch
      %153 = sbr.rel (0) target = $region61
    $region60: #{rnn_forward.1} parent=1 // pred_region
      %154 = dma.done [#allocation10], 4096
    $region61: #{rnn_forward.1} parent=1 // pred_fallthru
      _
    // Predicated region
    $region62: #{rnn_forward.1} parent=1 // pred_check
      _
    $region63: #{rnn_forward.1} parent=1 // pred_check_branch
      %156 = sbr.rel (0) target = $region65
    $region64: #{rnn_forward.1} parent=1 // pred_region
      %157 = dma.done [#allocation10], 4096
    $region65: #{rnn_forward.1} parent=1 // pred_fallthru
      _
    // Predicated region
    $region66: #{rnn_forward.1} parent=1 // pred_check
      _
    $region67: #{rnn_forward.1} parent=1 // pred_check_branch
      %159 = sbr.rel (0) target = $region69
    $region68: #{rnn_forward.1} parent=1 // pred_region
      %160 = dma.done [#allocation13], 4096
    $region69: #{rnn_forward.1} parent=1 // pred_fallthru
      _
    // Predicated region
    $region70: #{rnn_forward.1} parent=1 // pred_check
      _
    $region71: #{rnn_forward.1} parent=1 // pred_check_branch
      %162 = sbr.rel (0) target = $region73
    $region72: #{rnn_forward.1} parent=1 // pred_region
      %163 = dma.done [#allocation13], 4096
    $region73: #{rnn_forward.1} parent=1 // pred_fallthru
      _
    // Predicated region
    $region74: #{rnn_forward.1} parent=1 // pred_check
      _
    $region75: #{rnn_forward.1} parent=1 // pred_check_branch
      %165 = sbr.rel (0) target = $region77
    $region76: #{rnn_forward.1} parent=1 // pred_region
      %166 = dma.done [#allocation16], 64
    $region77: #{rnn_forward.1} parent=1 // pred_fallthru
      _
    // Predicated region
    $region78: #{rnn_forward.1} parent=1 // pred_check
      _
    $region79: #{rnn_forward.1} parent=1 // pred_check_branch
      %168 = sbr.rel (0) target = $region81
    $region80: #{rnn_forward.1} parent=1 // pred_region
      %169 = dma.done [#allocation16], 64
    $region81: #{rnn_forward.1} parent=1 // pred_fallthru
      _
    // Predicated region
    $region82: #{rnn_forward.1} parent=1 // pred_check
      _
    $region83: #{rnn_forward.1} parent=1 // pred_check_branch
      %171 = sbr.rel (0) target = $region85
    $region84: #{rnn_forward.1} parent=1 // pred_region
      %172 = dma.done [#allocation19], 64
    $region85: #{rnn_forward.1} parent=1 // pred_fallthru
      _
    // Predicated region
    $region86: #{rnn_forward.1} parent=1 // pred_check
      _
    $region87: #{rnn_forward.1} parent=1 // pred_check_branch
      %174 = sbr.rel (0) target = $region89
    $region88: #{rnn_forward.1} parent=1 // pred_region
      %175 = dma.done [#allocation19], 4096
    $region89: #{rnn_forward.1} parent=1 // pred_fallthru
      _
    %176 = sfence
    %s178 = sld [smem:[#allocation4]]
    %s179 = scalar_lea.vmem [#allocation8], %s178
    %v180 = vld [vmem:[%s179] sm:$0x1]
    %181 = vst [vmem:[#allocation2] sm:$0x1] %v180
    %s182 = sld [smem:[#allocation4 + $0x80]]
    %s183 = scalar_lea.vmem [#allocation8], %s182
    %v184 = vld [vmem:[%s183] sm:$0x1]
    %185 = vst [vmem:[#allocation2 + $0x1] sm:$0x1] %v184
    %s186 = sld [smem:[#allocation4 + $0x1]]
    %s187 = scalar_lea.vmem [#allocation8], %s186
    %v188 = vld [vmem:[%s187] sm:$0x1]
    %189 = vst [vmem:[#allocation2 + $0x2] sm:$0x1] %v188
    %s190 = sld [smem:[#allocation4 + $0x81]]
    %s191 = scalar_lea.vmem [#allocation8], %s190
    %v192 = vld [vmem:[%s191] sm:$0x1]
    %193 = vst [vmem:[#allocation2 + $0x3] sm:$0x1] %v192
    %s194 = sld [smem:[#allocation4 + $0x2]]
    %s195 = scalar_lea.vmem [#allocation8], %s194
    %v196 = vld [vmem:[%s195] sm:$0x1]
    %197 = vst [vmem:[#allocation2 + $0x4] sm:$0x1] %v196
    %s198 = sld [smem:[#allocation4 + $0x82]]
    %s199 = scalar_lea.vmem [#allocation8], %s198
    %v200 = vld [vmem:[%s199] sm:$0x1]
    %201 = vst [vmem:[#allocation2 + $0x5] sm:$0x1] %v200
    %s202 = sld [smem:[#allocation4 + $0x3]]
    %s203 = scalar_lea.vmem [#allocation8], %s202
    %v204 = vld [vmem:[%s203] sm:$0x1]
    %205 = vst [vmem:[#allocation2 + $0x6] sm:$0x1] %v204
    %s206 = sld [smem:[#allocation4 + $0x83]]
    %s207 = scalar_lea.vmem [#allocation8], %s206
    %v208 = vld [vmem:[%s207] sm:$0x1]
    %209 = vst [vmem:[#allocation2 + $0x7] sm:$0x1] %v208
    %s210 = sld [smem:[#allocation4 + $0x4]]
    %s211 = scalar_lea.vmem [#allocation8], %s210
    %v212 = vld [vmem:[%s211] sm:$0x1]
    %213 = vst [vmem:[#allocation2 + $0x8] sm:$0x1] %v212
    %s214 = sld [smem:[#allocation4 + $0x84]]
    %s215 = scalar_lea.vmem [#allocation8], %s214
    %v216 = vld [vmem:[%s215] sm:$0x1]
    %217 = vst [vmem:[#allocation2 + $0x9] sm:$0x1] %v216
    %s218 = sld [smem:[#allocation4 + $0x5]]
    %s219 = scalar_lea.vmem [#allocation8], %s218
    %v220 = vld [vmem:[%s219] sm:$0x1]
    %221 = vst [vmem:[#allocation2 + $0xa] sm:$0x1] %v220
    %s222 = sld [smem:[#allocation4 + $0x85]]
    %s223 = scalar_lea.vmem [#allocation8], %s222
    %v224 = vld [vmem:[%s223] sm:$0x1]
    %225 = vst [vmem:[#allocation2 + $0xb] sm:$0x1] %v224
    %s226 = sld [smem:[#allocation4 + $0x6]]
    %s227 = scalar_lea.vmem [#allocation8], %s226
    %v228 = vld [vmem:[%s227] sm:$0x1]
    %229 = vst [vmem:[#allocation2 + $0xc] sm:$0x1] %v228
    %s230 = sld [smem:[#allocation4 + $0x86]]
    %s231 = scalar_lea.vmem [#allocation8], %s230
    %v232 = vld [vmem:[%s231] sm:$0x1]
    %233 = vst [vmem:[#allocation2 + $0xd] sm:$0x1] %v232
    %s234 = sld [smem:[#allocation4 + $0x7]]
    %s235 = scalar_lea.vmem [#allocation8], %s234
    %v236 = vld [vmem:[%s235] sm:$0x1]
    %237 = vst [vmem:[#allocation2 + $0xe] sm:$0x1] %v236
    %s238 = sld [smem:[#allocation4 + $0x87]]
    %s239 = scalar_lea.vmem [#allocation8], %s238
    %v240 = vld [vmem:[%s239] sm:$0x1]
    %241 = vst [vmem:[#allocation2 + $0xf] sm:$0x1] %v240
    %v242 = vld [vmem:[#allocation9] sm:$0xff]
    %v243 = vld [vmem:[#allocation9 + $0x8] sm:$0xff]
    %v244 = vld [vmem:[#allocation9 + $0x10] sm:$0xff]
    %v245 = vld [vmem:[#allocation9 + $0x18] sm:$0xff]
    %v246 = vld [vmem:[#allocation9 + $0x20] sm:$0xff]
    %v247 = vld [vmem:[#allocation9 + $0x28] sm:$0xff]
    %v248 = vld [vmem:[#allocation9 + $0x30] sm:$0xff]
    %v249 = vld [vmem:[#allocation9 + $0x38] sm:$0xff]
    %v250 = vld [vmem:[#allocation9 + $0x40] sm:$0xff]
    %v251 = vld [vmem:[#allocation9 + $0x48] sm:$0xff]
    %v252 = vld [vmem:[#allocation9 + $0x50] sm:$0xff]
    %v253 = vld [vmem:[#allocation9 + $0x58] sm:$0xff]
    %v254 = vld [vmem:[#allocation9 + $0x60] sm:$0xff]
    %v255 = vld [vmem:[#allocation9 + $0x68] sm:$0xff]
    %v256 = vld [vmem:[#allocation9 + $0x70] sm:$0xff]
    %v257 = vld [vmem:[#allocation9 + $0x78] sm:$0xff]
    %v258 = vld [vmem:[#allocation9 + $0x80] sm:$0xff]
    %v259 = vld [vmem:[#allocation9 + $0x88] sm:$0xff]
    %v260 = vld [vmem:[#allocation9 + $0x90] sm:$0xff]
    %v261 = vld [vmem:[#allocation9 + $0x98] sm:$0xff]
    %v262 = vld [vmem:[#allocation9 + $0xa0] sm:$0xff]
    %v263 = vld [vmem:[#allocation9 + $0xa8] sm:$0xff]
    %v264 = vld [vmem:[#allocation9 + $0xb0] sm:$0xff]
    %v265 = vld [vmem:[#allocation9 + $0xb8] sm:$0xff]
    %v266 = vld [vmem:[#allocation9 + $0xc0] sm:$0xff]
    %v267 = vld [vmem:[#allocation9 + $0xc8] sm:$0xff]
    %v268 = vld [vmem:[#allocation9 + $0xd0] sm:$0xff]
    %v269 = vld [vmem:[#allocation9 + $0xd8] sm:$0xff]
    %v270 = vld [vmem:[#allocation9 + $0xe0] sm:$0xff]
    %v271 = vld [vmem:[#allocation9 + $0xe8] sm:$0xff]
    %v272 = vld [vmem:[#allocation9 + $0xf0] sm:$0xff]
    %v273 = vld [vmem:[#allocation9 + $0xf8] sm:$0xff]
    %v274 = vld [vmem:[#allocation2] sm:$0xff]
    %v275 = vld [vmem:[#allocation2 + $0x8] sm:$0xff]
    %v276 = vpack.c.bf16 %v275, %v274
    %v277 = vld [vmem:[%s4] sm:$0xf]
    %v279 = vlaneseq
    %v280 = vshrl.u32 %v279, 7
    %v281 = vsub.s32 0, %v280
    %v282 = vrot.slane %v277, %v281
    %v283 = vlaneseq
    %v284 = vshrl.u32 %v283, 7
    %v285 = vsub.s32 1, %v284
    %v286 = vrot.slane %v277, %v285
    %v287 = vlaneseq
    %v288 = vshrl.u32 %v287, 7
    %v289 = vsub.s32 2, %v288
    %v290 = vrot.slane %v277, %v289
    %v291 = vlaneseq
    %v292 = vshrl.u32 %v291, 7
    %v293 = vsub.s32 3, %v292
    %v294 = vrot.slane %v277, %v293
    %v331 = vunpack.c.l.b16 %v242
    %v332 = vunpack.c.h.b16 %v242
    %v333 = vunpack.c.l.b16 %v243
    %v334 = vunpack.c.h.b16 %v243
    %v335 = vunpack.c.l.b16 %v244
    %v336 = vunpack.c.h.b16 %v244
    %v337 = vunpack.c.l.b16 %v245
    %v338 = vunpack.c.h.b16 %v245
    %v339 = vunpack.c.l.b16 %v246
    %v340 = vunpack.c.h.b16 %v246
    %v341 = vunpack.c.l.b16 %v247
    %v342 = vunpack.c.h.b16 %v247
    %v343 = vunpack.c.l.b16 %v248
    %v344 = vunpack.c.h.b16 %v248
    %v345 = vunpack.c.l.b16 %v249
    %v346 = vunpack.c.h.b16 %v249
    %v347 = vunpack.c.l.b16 %v250
    %v348 = vunpack.c.h.b16 %v250
    %v349 = vunpack.c.l.b16 %v251
    %v350 = vunpack.c.h.b16 %v251
    %v351 = vunpack.c.l.b16 %v252
    %v352 = vunpack.c.h.b16 %v252
    %v353 = vunpack.c.l.b16 %v253
    %v354 = vunpack.c.h.b16 %v253
    %v355 = vunpack.c.l.b16 %v254
    %v356 = vunpack.c.h.b16 %v254
    %v357 = vunpack.c.l.b16 %v255
    %v358 = vunpack.c.h.b16 %v255
    %v359 = vunpack.c.l.b16 %v256
    %v360 = vunpack.c.h.b16 %v256
    %v361 = vunpack.c.l.b16 %v257
    %v362 = vunpack.c.h.b16 %v257
    %v363 = vunpack.c.l.b16 %v258
    %v364 = vunpack.c.h.b16 %v258
    %v365 = vunpack.c.l.b16 %v259
    %v366 = vunpack.c.h.b16 %v259
    %v367 = vunpack.c.l.b16 %v260
    %v368 = vunpack.c.h.b16 %v260
    %v369 = vunpack.c.l.b16 %v261
    %v370 = vunpack.c.h.b16 %v261
    %v371 = vunpack.c.l.b16 %v262
    %v372 = vunpack.c.h.b16 %v262
    %v373 = vunpack.c.l.b16 %v263
    %v374 = vunpack.c.h.b16 %v263
    %v375 = vunpack.c.l.b16 %v264
    %v376 = vunpack.c.h.b16 %v264
    %v377 = vunpack.c.l.b16 %v265
    %v378 = vunpack.c.h.b16 %v265
    %v379 = vunpack.c.l.b16 %v266
    %v380 = vunpack.c.h.b16 %v266
    %v381 = vunpack.c.l.b16 %v267
    %v382 = vunpack.c.h.b16 %v267
    %v383 = vunpack.c.l.b16 %v268
    %v384 = vunpack.c.h.b16 %v268
    %v385 = vunpack.c.l.b16 %v269
    %v386 = vunpack.c.h.b16 %v269
    %v387 = vunpack.c.l.b16 %v270
    %v388 = vunpack.c.h.b16 %v270
    %v389 = vunpack.c.l.b16 %v271
    %v390 = vunpack.c.h.b16 %v271
    %v391 = vunpack.c.l.b16 %v272
    %v392 = vunpack.c.h.b16 %v272
    %v393 = vunpack.c.l.b16 %v273
    %v394 = vunpack.c.h.b16 %v273
    %v395 = vpack.c.b16 %v335, %v331
    %v396 = vpack.c.b16 %v336, %v332
    %v397 = vpack.c.b16 %v337, %v333
    %v398 = vpack.c.b16 %v338, %v334
    %v399 = vpack.c.b16 %v343, %v339
    %v400 = vpack.c.b16 %v344, %v340
    %v401 = vpack.c.b16 %v345, %v341
    %v402 = vpack.c.b16 %v346, %v342
    %v403 = vpack.c.b16 %v351, %v347
    %v404 = vpack.c.b16 %v352, %v348
    %v405 = vpack.c.b16 %v353, %v349
    %v406 = vpack.c.b16 %v354, %v350
    %v407 = vpack.c.b16 %v359, %v355
    %v408 = vpack.c.b16 %v360, %v356
    %v409 = vpack.c.b16 %v361, %v357
    %v410 = vpack.c.b16 %v362, %v358
    %v411 = vpack.c.b16 %v367, %v363
    %v412 = vpack.c.b16 %v368, %v364
    %v413 = vpack.c.b16 %v369, %v365
    %v414 = vpack.c.b16 %v370, %v366
    %v415 = vpack.c.b16 %v375, %v371
    %v416 = vpack.c.b16 %v376, %v372
    %v417 = vpack.c.b16 %v377, %v373
    %v418 = vpack.c.b16 %v378, %v374
    %v419 = vpack.c.b16 %v383, %v379
    %v420 = vpack.c.b16 %v384, %v380
    %v421 = vpack.c.b16 %v385, %v381
    %v422 = vpack.c.b16 %v386, %v382
    %v423 = vpack.c.b16 %v391, %v387
    %v424 = vpack.c.b16 %v392, %v388
    %v425 = vpack.c.b16 %v393, %v389
    %v426 = vpack.c.b16 %v394, %v390
    %459 = vmatprep.subr.bf16.mxu0 %v424
    %460 = vmatpush1.bf16.msra.mxu0 %v423
    %461 = vmatprep.subr.bf16.mxu0 %v420
    %462 = vmatpush1.bf16.msra.mxu0 %v419
    %463 = vmatprep.subr.bf16.mxu0 %v416
    %464 = vmatpush1.bf16.msra.mxu0 %v415
    %465 = vmatprep.subr.bf16.mxu0 %v412
    %466 = vmatpush1.bf16.msra.mxu0 %v411
    %467 = vmatprep.subr.bf16.mxu0 %v408
    %468 = vmatpush1.bf16.msra.mxu0 %v407
    %469 = vmatprep.subr.bf16.mxu0 %v404
    %470 = vmatpush1.bf16.msra.mxu0 %v403
    %471 = vmatprep.subr.bf16.mxu0 %v400
    %472 = vmatpush1.bf16.msra.mxu0 %v399
    %473 = vmatprep.subr.bf16.mxu0 %v396
    %474 = vmatpush1.bf16.msra.mxu0 %v395
    %475 = vmatprep.subr.bf16.mxu0 0
    %476 = vmatpush2.bf16.msra.mxu0 0
    %477 = vmatprep.subr.bf16.mxu0 0
    %478 = vmatpush2.bf16.msra.mxu0 0
    %479 = vmatprep.subr.bf16.mxu0 0
    %480 = vmatpush2.bf16.msra.mxu0 0
    %481 = vmatprep.subr.bf16.mxu0 0
    %482 = vmatpush2.bf16.msra.mxu0 0
    %483 = vmatprep.subr.bf16.mxu0 0
    %484 = vmatpush2.bf16.msra.mxu0 0
    %485 = vmatprep.subr.bf16.mxu0 0
    %486 = vmatpush2.bf16.msra.mxu0 0
    %487 = vmatprep.subr.bf16.mxu0 0
    %488 = vmatpush2.bf16.msra.mxu0 0
    %489 = vmatprep.subr.bf16.mxu0 0
    %490 = vmatpush2.bf16.msra.mxu0 0
    %491 = vmatprep.mubr.bf16.mxu0 0
    %492 = vmatmul.mubr.bf16.gmra.mxu0 %v276
    %v493 = vpop.f32.mrf.mxu0
    %v494 = vadd.f32 %v282, %v493
    %v495 = vpop.f32.mrf.mxu0
    %v496 = vadd.f32 %v286, %v495
    %v497 = vpop.f32.mrf.mxu0
    %v498 = vadd.f32 %v282, %v497
    %v499 = vpop.f32.mrf.mxu0
    %v500 = vadd.f32 %v286, %v499
    %501 = vdwg.mxu0
    %502 = vmatprep.subr.bf16.mxu0 %v426
    %503 = vmatpush1.bf16.msra.mxu0 %v425
    %504 = vmatprep.subr.bf16.mxu0 %v422
    %505 = vmatpush1.bf16.msra.mxu0 %v421
    %506 = vmatprep.subr.bf16.mxu0 %v418
    %507 = vmatpush1.bf16.msra.mxu0 %v417
    %508 = vmatprep.subr.bf16.mxu0 %v414
    %509 = vmatpush1.bf16.msra.mxu0 %v413
    %510 = vmatprep.subr.bf16.mxu0 %v410
    %511 = vmatpush1.bf16.msra.mxu0 %v409
    %512 = vmatprep.subr.bf16.mxu0 %v406
    %513 = vmatpush1.bf16.msra.mxu0 %v405
    %514 = vmatprep.subr.bf16.mxu0 %v402
    %515 = vmatpush1.bf16.msra.mxu0 %v401
    %516 = vmatprep.subr.bf16.mxu0 %v398
    %517 = vmatpush1.bf16.msra.mxu0 %v397
    %518 = vmatprep.subr.bf16.mxu0 0
    %519 = vmatpush2.bf16.msra.mxu0 0
    %520 = vmatprep.subr.bf16.mxu0 0
    %521 = vmatpush2.bf16.msra.mxu0 0
    %522 = vmatprep.subr.bf16.mxu0 0
    %523 = vmatpush2.bf16.msra.mxu0 0
    %524 = vmatprep.subr.bf16.mxu0 0
    %525 = vmatpush2.bf16.msra.mxu0 0
    %526 = vmatprep.subr.bf16.mxu0 0
    %527 = vmatpush2.bf16.msra.mxu0 0
    %528 = vmatprep.subr.bf16.mxu0 0
    %529 = vmatpush2.bf16.msra.mxu0 0
    %530 = vmatprep.subr.bf16.mxu0 0
    %531 = vmatpush2.bf16.msra.mxu0 0
    %532 = vmatprep.subr.bf16.mxu0 0
    %533 = vmatpush2.bf16.msra.mxu0 0
    %534 = vmatprep.mubr.bf16.mxu0 0
    %535 = vmatmul.mubr.bf16.gmra.mxu0 %v276
    %v536 = vpop.f32.mrf.mxu0
    %v537 = vadd.f32 %v290, %v536
    %v538 = vpop.f32.mrf.mxu0
    %v539 = vadd.f32 %v294, %v538
    %v540 = vpop.f32.mrf.mxu0
    %v541 = vadd.f32 %v290, %v540
    %v542 = vpop.f32.mrf.mxu0
    %v543 = vadd.f32 %v294, %v542
    %544 = vdwg.mxu0
    %v549 = vcombine.low %v494, %v496
    %v550 = vcombine.low %v537, %v539
    %v552 = vunpack.c.l.s4 1983009808
    %v553 = vunpack.c.0.s8 %v552
    %v554 = vlaneseq
    %v555 = vshrl.u32 %v554, 7
    %v556 = vsub.s32 %v553, %v555
    %v557 = vrot.slane %v549, %v556
    %v559 = vunpack.c.l.s4 1983009808
    %v560 = vunpack.c.0.s8 %v559
    %v561 = vlaneseq
    %v562 = vshrl.u32 %v561, 7
    %v563 = vsub.s32 %v560, %v562
    %v564 = vrot.slane %v550, %v563
    %v565 = vcombine.low %v557, %v564
    %567 = vst [vmem:[#allocation3] sm:$0xff] %v565
    %v568 = vcombine.high %v557, %v564
    %s570 = scalar_lea.vmem [#allocation3], 8
    %571 = vst [vmem:[%s570] sm:$0xff] %v568
    %v572 = vcombine.high %v494, %v496
    %v573 = vcombine.high %v537, %v539
    %v575 = vunpack.c.l.s4 1983009808
    %v576 = vunpack.c.0.s8 %v575
    %v577 = vlaneseq
    %v578 = vshrl.u32 %v577, 7
    %v579 = vsub.s32 %v576, %v578
    %v580 = vrot.slane %v572, %v579
    %v582 = vunpack.c.l.s4 1983009808
    %v583 = vunpack.c.0.s8 %v582
    %v584 = vlaneseq
    %v585 = vshrl.u32 %v584, 7
    %v586 = vsub.s32 %v583, %v585
    %v587 = vrot.slane %v573, %v586
    %v588 = vcombine.low %v580, %v587
    %s590 = scalar_lea.vmem [#allocation3], 16
    %591 = vst [vmem:[%s590] sm:$0xff] %v588
    %v592 = vcombine.high %v580, %v587
    %s594 = scalar_lea.vmem [#allocation3], 24
    %595 = vst [vmem:[%s594] sm:$0xff] %v592
    %v600 = vcombine.low %v498, %v500
    %v601 = vcombine.low %v541, %v543
    %v603 = vunpack.c.l.s4 1983009808
    %v604 = vunpack.c.0.s8 %v603
    %v605 = vlaneseq
    %v606 = vshrl.u32 %v605, 7
    %v607 = vsub.s32 %v604, %v606
    %v608 = vrot.slane %v600, %v607
    %v610 = vunpack.c.l.s4 1983009808
    %v611 = vunpack.c.0.s8 %v610
    %v612 = vlaneseq
    %v613 = vshrl.u32 %v612, 7
    %v614 = vsub.s32 %v611, %v613
    %v615 = vrot.slane %v601, %v614
    %v616 = vcombine.low %v608, %v615
    %s618 = scalar_lea.vmem [#allocation3], 32
    %619 = vst [vmem:[%s618] sm:$0xff] %v616
    %v620 = vcombine.high %v608, %v615
    %s622 = scalar_lea.vmem [#allocation3], 40
    %623 = vst [vmem:[%s622] sm:$0xff] %v620
    %v624 = vcombine.high %v498, %v500
    %v625 = vcombine.high %v541, %v543
    %v627 = vunpack.c.l.s4 1983009808
    %v628 = vunpack.c.0.s8 %v627
    %v629 = vlaneseq
    %v630 = vshrl.u32 %v629, 7
    %v631 = vsub.s32 %v628, %v630
    %v632 = vrot.slane %v624, %v631
    %v634 = vunpack.c.l.s4 1983009808
    %v635 = vunpack.c.0.s8 %v634
    %v636 = vlaneseq
    %v637 = vshrl.u32 %v636, 7
    %v638 = vsub.s32 %v635, %v637
    %v639 = vrot.slane %v625, %v638
    %v640 = vcombine.low %v632, %v639
    %s642 = scalar_lea.vmem [#allocation3], 48
    %643 = vst [vmem:[%s642] sm:$0xff] %v640
    %v644 = vcombine.high %v632, %v639
    %s646 = scalar_lea.vmem [#allocation3], 56
    %647 = vst [vmem:[%s646] sm:$0xff] %v644
    %v648 = vld [vmem:[#allocation11] sm:$0xff]
    %v649 = vld [vmem:[#allocation11 + $0x8] sm:$0xff]
    %v650 = vld [vmem:[#allocation11 + $0x10] sm:$0xff]
    %v651 = vld [vmem:[#allocation11 + $0x18] sm:$0xff]
    %v652 = vld [vmem:[#allocation11 + $0x20] sm:$0xff]
    %v653 = vld [vmem:[#allocation11 + $0x28] sm:$0xff]
    %v654 = vld [vmem:[#allocation11 + $0x30] sm:$0xff]
    %v655 = vld [vmem:[#allocation11 + $0x38] sm:$0xff]
    %v656 = vld [vmem:[#allocation11 + $0x40] sm:$0xff]
    %v657 = vld [vmem:[#allocation11 + $0x48] sm:$0xff]
    %v658 = vld [vmem:[#allocation11 + $0x50] sm:$0xff]
    %v659 = vld [vmem:[#allocation11 + $0x58] sm:$0xff]
    %v660 = vld [vmem:[#allocation11 + $0x60] sm:$0xff]
    %v661 = vld [vmem:[#allocation11 + $0x68] sm:$0xff]
    %v662 = vld [vmem:[#allocation11 + $0x70] sm:$0xff]
    %v663 = vld [vmem:[#allocation11 + $0x78] sm:$0xff]
    %v664 = vld [vmem:[#allocation11 + $0x80] sm:$0xff]
    %v665 = vld [vmem:[#allocation11 + $0x88] sm:$0xff]
    %v666 = vld [vmem:[#allocation11 + $0x90] sm:$0xff]
    %v667 = vld [vmem:[#allocation11 + $0x98] sm:$0xff]
    %v668 = vld [vmem:[#allocation11 + $0xa0] sm:$0xff]
    %v669 = vld [vmem:[#allocation11 + $0xa8] sm:$0xff]
    %v670 = vld [vmem:[#allocation11 + $0xb0] sm:$0xff]
    %v671 = vld [vmem:[#allocation11 + $0xb8] sm:$0xff]
    %v672 = vld [vmem:[#allocation11 + $0xc0] sm:$0xff]
    %v673 = vld [vmem:[#allocation11 + $0xc8] sm:$0xff]
    %v674 = vld [vmem:[#allocation11 + $0xd0] sm:$0xff]
    %v675 = vld [vmem:[#allocation11 + $0xd8] sm:$0xff]
    %v676 = vld [vmem:[#allocation11 + $0xe0] sm:$0xff]
    %v677 = vld [vmem:[#allocation11 + $0xe8] sm:$0xff]
    %v678 = vld [vmem:[#allocation11 + $0xf0] sm:$0xff]
    %v679 = vld [vmem:[#allocation11 + $0xf8] sm:$0xff]
    %v680 = vld [vmem:[#allocation12] sm:$0xff]
    %v681 = vld [vmem:[#allocation12 + $0x8] sm:$0xff]
    %v682 = vld [vmem:[#allocation12 + $0x10] sm:$0xff]
    %v683 = vld [vmem:[#allocation12 + $0x18] sm:$0xff]
    %v684 = vld [vmem:[#allocation12 + $0x20] sm:$0xff]
    %v685 = vld [vmem:[#allocation12 + $0x28] sm:$0xff]
    %v686 = vld [vmem:[#allocation12 + $0x30] sm:$0xff]
    %v687 = vld [vmem:[#allocation12 + $0x38] sm:$0xff]
    %v688 = vld [vmem:[#allocation12 + $0x40] sm:$0xff]
    %v689 = vld [vmem:[#allocation12 + $0x48] sm:$0xff]
    %v690 = vld [vmem:[#allocation12 + $0x50] sm:$0xff]
    %v691 = vld [vmem:[#allocation12 + $0x58] sm:$0xff]
    %v692 = vld [vmem:[#allocation12 + $0x60] sm:$0xff]
    %v693 = vld [vmem:[#allocation12 + $0x68] sm:$0xff]
    %v694 = vld [vmem:[#allocation12 + $0x70] sm:$0xff]
    %v695 = vld [vmem:[#allocation12 + $0x78] sm:$0xff]
    %v696 = vld [vmem:[#allocation12 + $0x80] sm:$0xff]
    %v697 = vld [vmem:[#allocation12 + $0x88] sm:$0xff]
    %v698 = vld [vmem:[#allocation12 + $0x90] sm:$0xff]
    %v699 = vld [vmem:[#allocation12 + $0x98] sm:$0xff]
    %v700 = vld [vmem:[#allocation12 + $0xa0] sm:$0xff]
    %v701 = vld [vmem:[#allocation12 + $0xa8] sm:$0xff]
    %v702 = vld [vmem:[#allocation12 + $0xb0] sm:$0xff]
    %v703 = vld [vmem:[#allocation12 + $0xb8] sm:$0xff]
    %v704 = vld [vmem:[#allocation12 + $0xc0] sm:$0xff]
    %v705 = vld [vmem:[#allocation12 + $0xc8] sm:$0xff]
    %v706 = vld [vmem:[#allocation12 + $0xd0] sm:$0xff]
    %v707 = vld [vmem:[#allocation12 + $0xd8] sm:$0xff]
    %v708 = vld [vmem:[#allocation12 + $0xe0] sm:$0xff]
    %v709 = vld [vmem:[#allocation12 + $0xe8] sm:$0xff]
    %v710 = vld [vmem:[#allocation12 + $0xf0] sm:$0xff]
    %v711 = vld [vmem:[#allocation12 + $0xf8] sm:$0xff]
    %v712 = vld [vmem:[#allocation14] sm:$0xff]
    %v713 = vld [vmem:[#allocation14 + $0x8] sm:$0xff]
    %v714 = vld [vmem:[#allocation14 + $0x10] sm:$0xff]
    %v715 = vld [vmem:[#allocation14 + $0x18] sm:$0xff]
    %v716 = vld [vmem:[#allocation14 + $0x20] sm:$0xff]
    %v717 = vld [vmem:[#allocation14 + $0x28] sm:$0xff]
    %v718 = vld [vmem:[#allocation14 + $0x30] sm:$0xff]
    %v719 = vld [vmem:[#allocation14 + $0x38] sm:$0xff]
    %v720 = vld [vmem:[#allocation14 + $0x40] sm:$0xff]
    %v721 = vld [vmem:[#allocation14 + $0x48] sm:$0xff]
    %v722 = vld [vmem:[#allocation14 + $0x50] sm:$0xff]
    %v723 = vld [vmem:[#allocation14 + $0x58] sm:$0xff]
    %v724 = vld [vmem:[#allocation14 + $0x60] sm:$0xff]
    %v725 = vld [vmem:[#allocation14 + $0x68] sm:$0xff]
    %v726 = vld [vmem:[#allocation14 + $0x70] sm:$0xff]
    %v727 = vld [vmem:[#allocation14 + $0x78] sm:$0xff]
    %v728 = vld [vmem:[#allocation14 + $0x80] sm:$0xff]
    %v729 = vld [vmem:[#allocation14 + $0x88] sm:$0xff]
    %v730 = vld [vmem:[#allocation14 + $0x90] sm:$0xff]
    %v731 = vld [vmem:[#allocation14 + $0x98] sm:$0xff]
    %v732 = vld [vmem:[#allocation14 + $0xa0] sm:$0xff]
    %v733 = vld [vmem:[#allocation14 + $0xa8] sm:$0xff]
    %v734 = vld [vmem:[#allocation14 + $0xb0] sm:$0xff]
    %v735 = vld [vmem:[#allocation14 + $0xb8] sm:$0xff]
    %v736 = vld [vmem:[#allocation14 + $0xc0] sm:$0xff]
    %v737 = vld [vmem:[#allocation14 + $0xc8] sm:$0xff]
    %v738 = vld [vmem:[#allocation14 + $0xd0] sm:$0xff]
    %v739 = vld [vmem:[#allocation14 + $0xd8] sm:$0xff]
    %v740 = vld [vmem:[#allocation14 + $0xe0] sm:$0xff]
    %v741 = vld [vmem:[#allocation14 + $0xe8] sm:$0xff]
    %v742 = vld [vmem:[#allocation14 + $0xf0] sm:$0xff]
    %v743 = vld [vmem:[#allocation14 + $0xf8] sm:$0xff]
    %v744 = vld [vmem:[#allocation15] sm:$0xf]
    %v746 = vlaneseq
    %v747 = vshrl.u32 %v746, 7
    %v748 = vsub.s32 0, %v747
    %v749 = vrot.slane %v744, %v748
    %v750 = vlaneseq
    %v751 = vshrl.u32 %v750, 7
    %v752 = vsub.s32 1, %v751
    %v753 = vrot.slane %v744, %v752
    %v754 = vlaneseq
    %v755 = vshrl.u32 %v754, 7
    %v756 = vsub.s32 2, %v755
    %v757 = vrot.slane %v744, %v756
    %v758 = vlaneseq
    %v759 = vshrl.u32 %v758, 7
    %v760 = vsub.s32 3, %v759
    %v761 = vrot.slane %v744, %v760
    %s766 = scalar_lea.vmem [#allocation17], 2
    %v767 = vld [vmem:[%s766] sm:$0x3]
    %s768 = scalar_lea.vmem [#allocation18], 2
    %v769 = vld [vmem:[%s768] sm:$0x3]
    %v770 = vld [vmem:[#allocation17] sm:$0x3]
    %v771 = vld [vmem:[#allocation18] sm:$0x3]
    %v772 = vld [vmem:[#allocation3] sm:$0xff]
    %v773 = vpack.c.bf16 %v770, %v770
    %v806 = vunpack.c.l.b16 %v648
    %v807 = vunpack.c.h.b16 %v648
    %v808 = vunpack.c.l.b16 %v649
    %v809 = vunpack.c.h.b16 %v649
    %v810 = vunpack.c.l.b16 %v650
    %v811 = vunpack.c.h.b16 %v650
    %v812 = vunpack.c.l.b16 %v651
    %v813 = vunpack.c.h.b16 %v651
    %v814 = vunpack.c.l.b16 %v652
    %v815 = vunpack.c.h.b16 %v652
    %v816 = vunpack.c.l.b16 %v653
    %v817 = vunpack.c.h.b16 %v653
    %v818 = vunpack.c.l.b16 %v654
    %v819 = vunpack.c.h.b16 %v654
    %v820 = vunpack.c.l.b16 %v655
    %v821 = vunpack.c.h.b16 %v655
    %v822 = vunpack.c.l.b16 %v656
    %v823 = vunpack.c.h.b16 %v656
    %v824 = vunpack.c.l.b16 %v657
    %v825 = vunpack.c.h.b16 %v657
    %v826 = vunpack.c.l.b16 %v658
    %v827 = vunpack.c.h.b16 %v658
    %v828 = vunpack.c.l.b16 %v659
    %v829 = vunpack.c.h.b16 %v659
    %v830 = vunpack.c.l.b16 %v660
    %v831 = vunpack.c.h.b16 %v660
    %v832 = vunpack.c.l.b16 %v661
    %v833 = vunpack.c.h.b16 %v661
    %v834 = vunpack.c.l.b16 %v662
    %v835 = vunpack.c.h.b16 %v662
    %v836 = vunpack.c.l.b16 %v663
    %v837 = vunpack.c.h.b16 %v663
    %v838 = vunpack.c.l.b16 %v664
    %v839 = vunpack.c.h.b16 %v664
    %v840 = vunpack.c.l.b16 %v665
    %v841 = vunpack.c.h.b16 %v665
    %v842 = vunpack.c.l.b16 %v666
    %v843 = vunpack.c.h.b16 %v666
    %v844 = vunpack.c.l.b16 %v667
    %v845 = vunpack.c.h.b16 %v667
    %v846 = vunpack.c.l.b16 %v668
    %v847 = vunpack.c.h.b16 %v668
    %v848 = vunpack.c.l.b16 %v669
    %v849 = vunpack.c.h.b16 %v669
    %v850 = vunpack.c.l.b16 %v670
    %v851 = vunpack.c.h.b16 %v670
    %v852 = vunpack.c.l.b16 %v671
    %v853 = vunpack.c.h.b16 %v671
    %v854 = vunpack.c.l.b16 %v672
    %v855 = vunpack.c.h.b16 %v672
    %v856 = vunpack.c.l.b16 %v673
    %v857 = vunpack.c.h.b16 %v673
    %v858 = vunpack.c.l.b16 %v674
    %v859 = vunpack.c.h.b16 %v674
    %v860 = vunpack.c.l.b16 %v675
    %v861 = vunpack.c.h.b16 %v675
    %v862 = vunpack.c.l.b16 %v676
    %v863 = vunpack.c.h.b16 %v676
    %v864 = vunpack.c.l.b16 %v677
    %v865 = vunpack.c.h.b16 %v677
    %v866 = vunpack.c.l.b16 %v678
    %v867 = vunpack.c.h.b16 %v678
    %v868 = vunpack.c.l.b16 %v679
    %v869 = vunpack.c.h.b16 %v679
    %v870 = vpack.c.b16 %v810, %v806
    %v871 = vpack.c.b16 %v811, %v807
    %v872 = vpack.c.b16 %v812, %v808
    %v873 = vpack.c.b16 %v813, %v809
    %v874 = vpack.c.b16 %v818, %v814
    %v875 = vpack.c.b16 %v819, %v815
    %v876 = vpack.c.b16 %v820, %v816
    %v877 = vpack.c.b16 %v821, %v817
    %v878 = vpack.c.b16 %v826, %v822
    %v879 = vpack.c.b16 %v827, %v823
    %v880 = vpack.c.b16 %v828, %v824
    %v881 = vpack.c.b16 %v829, %v825
    %v882 = vpack.c.b16 %v834, %v830
    %v883 = vpack.c.b16 %v835, %v831
    %v884 = vpack.c.b16 %v836, %v832
    %v885 = vpack.c.b16 %v837, %v833
    %v886 = vpack.c.b16 %v842, %v838
    %v887 = vpack.c.b16 %v843, %v839
    %v888 = vpack.c.b16 %v844, %v840
    %v889 = vpack.c.b16 %v845, %v841
    %v890 = vpack.c.b16 %v850, %v846
    %v891 = vpack.c.b16 %v851, %v847
    %v892 = vpack.c.b16 %v852, %v848
    %v893 = vpack.c.b16 %v853, %v849
    %v894 = vpack.c.b16 %v858, %v854
    %v895 = vpack.c.b16 %v859, %v855
    %v896 = vpack.c.b16 %v860, %v856
    %v897 = vpack.c.b16 %v861, %v857
    %v898 = vpack.c.b16 %v866, %v862
    %v899 = vpack.c.b16 %v867, %v863
    %v900 = vpack.c.b16 %v868, %v864
    %v901 = vpack.c.b16 %v869, %v865
    %934 = vmatprep.subr.bf16.mxu0 %v899
    %935 = vmatpush1.bf16.msra.mxu0 %v898
    %936 = vmatprep.subr.bf16.mxu0 %v895
    %937 = vmatpush1.bf16.msra.mxu0 %v894
    %938 = vmatprep.subr.bf16.mxu0 %v891
    %939 = vmatpush1.bf16.msra.mxu0 %v890
    %940 = vmatprep.subr.bf16.mxu0 %v887
    %941 = vmatpush1.bf16.msra.mxu0 %v886
    %942 = vmatprep.subr.bf16.mxu0 %v883
    %943 = vmatpush1.bf16.msra.mxu0 %v882
    %944 = vmatprep.subr.bf16.mxu0 %v879
    %945 = vmatpush1.bf16.msra.mxu0 %v878
    %946 = vmatprep.subr.bf16.mxu0 %v875
    %947 = vmatpush1.bf16.msra.mxu0 %v874
    %948 = vmatprep.subr.bf16.mxu0 %v871
    %949 = vmatpush1.bf16.msra.mxu0 %v870
    %950 = vmatprep.subr.bf16.mxu0 0
    %951 = vmatpush2.bf16.msra.mxu0 0
    %952 = vmatprep.subr.bf16.mxu0 0
    %953 = vmatpush2.bf16.msra.mxu0 0
    %954 = vmatprep.subr.bf16.mxu0 0
    %955 = vmatpush2.bf16.msra.mxu0 0
    %956 = vmatprep.subr.bf16.mxu0 0
    %957 = vmatpush2.bf16.msra.mxu0 0
    %958 = vmatprep.subr.bf16.mxu0 0
    %959 = vmatpush2.bf16.msra.mxu0 0
    %960 = vmatprep.subr.bf16.mxu0 0
    %961 = vmatpush2.bf16.msra.mxu0 0
    %962 = vmatprep.subr.bf16.mxu0 0
    %963 = vmatpush2.bf16.msra.mxu0 0
    %964 = vmatprep.subr.bf16.mxu0 0
    %965 = vmatpush2.bf16.msra.mxu0 0
    %966 = vmatprep.mubr.bf16.mxu0 0
    %967 = vmatmul.mubr.bf16.gmra.mxu0 %v773
    %v968 = vpop.f32.mrf.mxu0
    %v969 = vadd.f32 0.0, %v968
    %v970 = vpop.f32.mrf.mxu0
    %v971 = vadd.f32 0.0, %v970
    %v972 = vpop.f32.mrf.mxu0
    %v973 = vpop.f32.mrf.mxu0
    %974 = vdwg.mxu0
    %975 = vmatprep.subr.bf16.mxu0 %v901
    %976 = vmatpush1.bf16.msra.mxu0 %v900
    %977 = vmatprep.subr.bf16.mxu0 %v897
    %978 = vmatpush1.bf16.msra.mxu0 %v896
    %979 = vmatprep.subr.bf16.mxu0 %v893
    %980 = vmatpush1.bf16.msra.mxu0 %v892
    %981 = vmatprep.subr.bf16.mxu0 %v889
    %982 = vmatpush1.bf16.msra.mxu0 %v888
    %983 = vmatprep.subr.bf16.mxu0 %v885
    %984 = vmatpush1.bf16.msra.mxu0 %v884
    %985 = vmatprep.subr.bf16.mxu0 %v881
    %986 = vmatpush1.bf16.msra.mxu0 %v880
    %987 = vmatprep.subr.bf16.mxu0 %v877
    %988 = vmatpush1.bf16.msra.mxu0 %v876
    %989 = vmatprep.subr.bf16.mxu0 %v873
    %990 = vmatpush1.bf16.msra.mxu0 %v872
    %991 = vmatprep.subr.bf16.mxu0 0
    %992 = vmatpush2.bf16.msra.mxu0 0
    %993 = vmatprep.subr.bf16.mxu0 0
    %994 = vmatpush2.bf16.msra.mxu0 0
    %995 = vmatprep.subr.bf16.mxu0 0
    %996 = vmatpush2.bf16.msra.mxu0 0
    %997 = vmatprep.subr.bf16.mxu0 0
    %998 = vmatpush2.bf16.msra.mxu0 0
    %999 = vmatprep.subr.bf16.mxu0 0
    %1000 = vmatpush2.bf16.msra.mxu0 0
    %1001 = vmatprep.subr.bf16.mxu0 0
    %1002 = vmatpush2.bf16.msra.mxu0 0
    %1003 = vmatprep.subr.bf16.mxu0 0
    %1004 = vmatpush2.bf16.msra.mxu0 0
    %1005 = vmatprep.subr.bf16.mxu0 0
    %1006 = vmatpush2.bf16.msra.mxu0 0
    %1007 = vmatprep.mubr.bf16.mxu0 0
    %1008 = vmatmul.mubr.bf16.gmra.mxu0 %v773
    %v1009 = vpop.f32.mrf.mxu0
    %v1010 = vadd.f32 0.0, %v1009
    %v1011 = vpop.f32.mrf.mxu0
    %v1012 = vadd.f32 0.0, %v1011
    %v1013 = vpop.f32.mrf.mxu0
    %v1014 = vpop.f32.mrf.mxu0
    %1015 = vdwg.mxu0
    %v1020 = vcombine.low %v969, %v971
    %v1021 = vcombine.low %v1010, %v1012
    %v1023 = vunpack.c.l.s4 1983009808
    %v1024 = vunpack.c.0.s8 %v1023
    %v1025 = vlaneseq
    %v1026 = vshrl.u32 %v1025, 7
    %v1027 = vsub.s32 %v1024, %v1026
    %v1028 = vrot.slane %v1020, %v1027
    %v1030 = vunpack.c.l.s4 1983009808
    %v1031 = vunpack.c.0.s8 %v1030
    %v1032 = vlaneseq
    %v1033 = vshrl.u32 %v1032, 7
    %v1034 = vsub.s32 %v1031, %v1033
    %v1035 = vrot.slane %v1021, %v1034
    %v1036 = vcombine.low %v1028, %v1035
    %v1038 = vadd.f32 %v772, %v1036
    %v1039 = vmul.f32 %v1038, 0.5
    %v1040 = vtanh.pop %v1039
    %v1041 = vmul.f32 %v1040, 0.5
    %v1042 = vadd.f32 %v1041, 0.5
    %v1044 = vrot.slane %v1038, 2
    %v1046 = vmul.f32 %v1044, 0.5
    %v1047 = vtanh.pop %v1046
    %v1048 = vmul.f32 %v1047, 0.5
    %v1049 = vadd.f32 %v1048, 0.5
    %v1050 = vrot.slane %v1038, 4
    %v1052 = vtanh.pop %v1050
    %v1053 = vrot.slane %v1038, 6
    %v1055 = vmul.f32 %v1053, 0.5
    %v1056 = vtanh.pop %v1055
    %v1057 = vmul.f32 %v1056, 0.5
    %v1058 = vadd.f32 %v1057, 0.5
    %v1059 = vmul.f32 %v1049, %v771
    %v1060 = vmul.f32 %v1042, %v1052
    %v1061 = vadd.f32 %v1059, %v1060
    %v1062 = vtanh.pop %v1061
    %v1063 = vmul.f32 %v1058, %v1062
    %v1064 = vpack.c.bf16 %v1063, %v1063
    %v1065 = vpack.c.bf16 %v767, %v767
    %v1098 = vunpack.c.l.b16 %v712
    %v1099 = vunpack.c.h.b16 %v712
    %v1100 = vunpack.c.l.b16 %v713
    %v1101 = vunpack.c.h.b16 %v713
    %v1102 = vunpack.c.l.b16 %v714
    %v1103 = vunpack.c.h.b16 %v714
    %v1104 = vunpack.c.l.b16 %v715
    %v1105 = vunpack.c.h.b16 %v715
    %v1106 = vunpack.c.l.b16 %v716
    %v1107 = vunpack.c.h.b16 %v716
    %v1108 = vunpack.c.l.b16 %v717
    %v1109 = vunpack.c.h.b16 %v717
    %v1110 = vunpack.c.l.b16 %v718
    %v1111 = vunpack.c.h.b16 %v718
    %v1112 = vunpack.c.l.b16 %v719
    %v1113 = vunpack.c.h.b16 %v719
    %v1114 = vunpack.c.l.b16 %v720
    %v1115 = vunpack.c.h.b16 %v720
    %v1116 = vunpack.c.l.b16 %v721
    %v1117 = vunpack.c.h.b16 %v721
    %v1118 = vunpack.c.l.b16 %v722
    %v1119 = vunpack.c.h.b16 %v722
    %v1120 = vunpack.c.l.b16 %v723
    %v1121 = vunpack.c.h.b16 %v723
    %v1122 = vunpack.c.l.b16 %v724
    %v1123 = vunpack.c.h.b16 %v724
    %v1124 = vunpack.c.l.b16 %v725
    %v1125 = vunpack.c.h.b16 %v725
    %v1126 = vunpack.c.l.b16 %v726
    %v1127 = vunpack.c.h.b16 %v726
    %v1128 = vunpack.c.l.b16 %v727
    %v1129 = vunpack.c.h.b16 %v727
    %v1130 = vunpack.c.l.b16 %v728
    %v1131 = vunpack.c.h.b16 %v728
    %v1132 = vunpack.c.l.b16 %v729
    %v1133 = vunpack.c.h.b16 %v729
    %v1134 = vunpack.c.l.b16 %v730
    %v1135 = vunpack.c.h.b16 %v730
    %v1136 = vunpack.c.l.b16 %v731
    %v1137 = vunpack.c.h.b16 %v731
    %v1138 = vunpack.c.l.b16 %v732
    %v1139 = vunpack.c.h.b16 %v732
    %v1140 = vunpack.c.l.b16 %v733
    %v1141 = vunpack.c.h.b16 %v733
    %v1142 = vunpack.c.l.b16 %v734
    %v1143 = vunpack.c.h.b16 %v734
    %v1144 = vunpack.c.l.b16 %v735
    %v1145 = vunpack.c.h.b16 %v735
    %v1146 = vunpack.c.l.b16 %v736
    %v1147 = vunpack.c.h.b16 %v736
    %v1148 = vunpack.c.l.b16 %v737
    %v1149 = vunpack.c.h.b16 %v737
    %v1150 = vunpack.c.l.b16 %v738
    %v1151 = vunpack.c.h.b16 %v738
    %v1152 = vunpack.c.l.b16 %v739
    %v1153 = vunpack.c.h.b16 %v739
    %v1154 = vunpack.c.l.b16 %v740
    %v1155 = vunpack.c.h.b16 %v740
    %v1156 = vunpack.c.l.b16 %v741
    %v1157 = vunpack.c.h.b16 %v741
    %v1158 = vunpack.c.l.b16 %v742
    %v1159 = vunpack.c.h.b16 %v742
    %v1160 = vunpack.c.l.b16 %v743
    %v1161 = vunpack.c.h.b16 %v743
    %v1162 = vpack.c.b16 %v1102, %v1098
    %v1163 = vpack.c.b16 %v1103, %v1099
    %v1164 = vpack.c.b16 %v1104, %v1100
    %v1165 = vpack.c.b16 %v1105, %v1101
    %v1166 = vpack.c.b16 %v1110, %v1106
    %v1167 = vpack.c.b16 %v1111, %v1107
    %v1168 = vpack.c.b16 %v1112, %v1108
    %v1169 = vpack.c.b16 %v1113, %v1109
    %v1170 = vpack.c.b16 %v1118, %v1114
    %v1171 = vpack.c.b16 %v1119, %v1115
    %v1172 = vpack.c.b16 %v1120, %v1116
    %v1173 = vpack.c.b16 %v1121, %v1117
    %v1174 = vpack.c.b16 %v1126, %v1122
    %v1175 = vpack.c.b16 %v1127, %v1123
    %v1176 = vpack.c.b16 %v1128, %v1124
    %v1177 = vpack.c.b16 %v1129, %v1125
    %v1178 = vpack.c.b16 %v1134, %v1130
    %v1179 = vpack.c.b16 %v1135, %v1131
    %v1180 = vpack.c.b16 %v1136, %v1132
    %v1181 = vpack.c.b16 %v1137, %v1133
    %v1182 = vpack.c.b16 %v1142, %v1138
    %v1183 = vpack.c.b16 %v1143, %v1139
    %v1184 = vpack.c.b16 %v1144, %v1140
    %v1185 = vpack.c.b16 %v1145, %v1141
    %v1186 = vpack.c.b16 %v1150, %v1146
    %v1187 = vpack.c.b16 %v1151, %v1147
    %v1188 = vpack.c.b16 %v1152, %v1148
    %v1189 = vpack.c.b16 %v1153, %v1149
    %v1190 = vpack.c.b16 %v1158, %v1154
    %v1191 = vpack.c.b16 %v1159, %v1155
    %v1192 = vpack.c.b16 %v1160, %v1156
    %v1193 = vpack.c.b16 %v1161, %v1157
    %1226 = vmatprep.subr.bf16.mxu0 %v1191
    %1227 = vmatpush1.bf16.msra.mxu0 %v1190
    %1228 = vmatprep.subr.bf16.mxu0 %v1187
    %1229 = vmatpush1.bf16.msra.mxu0 %v1186
    %1230 = vmatprep.subr.bf16.mxu0 %v1183
    %1231 = vmatpush1.bf16.msra.mxu0 %v1182
    %1232 = vmatprep.subr.bf16.mxu0 %v1179
    %1233 = vmatpush1.bf16.msra.mxu0 %v1178
    %1234 = vmatprep.subr.bf16.mxu0 %v1175
    %1235 = vmatpush1.bf16.msra.mxu0 %v1174
    %1236 = vmatprep.subr.bf16.mxu0 %v1171
    %1237 = vmatpush1.bf16.msra.mxu0 %v1170
    %1238 = vmatprep.subr.bf16.mxu0 %v1167
    %1239 = vmatpush1.bf16.msra.mxu0 %v1166
    %1240 = vmatprep.subr.bf16.mxu0 %v1163
    %1241 = vmatpush1.bf16.msra.mxu0 %v1162
    %1242 = vmatprep.subr.bf16.mxu0 0
    %1243 = vmatpush2.bf16.msra.mxu0 0
    %1244 = vmatprep.subr.bf16.mxu0 0
    %1245 = vmatpush2.bf16.msra.mxu0 0
    %1246 = vmatprep.subr.bf16.mxu0 0
    %1247 = vmatpush2.bf16.msra.mxu0 0
    %1248 = vmatprep.subr.bf16.mxu0 0
    %1249 = vmatpush2.bf16.msra.mxu0 0
    %1250 = vmatprep.subr.bf16.mxu0 0
    %1251 = vmatpush2.bf16.msra.mxu0 0
    %1252 = vmatprep.subr.bf16.mxu0 0
    %1253 = vmatpush2.bf16.msra.mxu0 0
    %1254 = vmatprep.subr.bf16.mxu0 0
    %1255 = vmatpush2.bf16.msra.mxu0 0
    %1256 = vmatprep.subr.bf16.mxu0 0
    %1257 = vmatpush2.bf16.msra.mxu0 0
    %1258 = vmatprep.mubr.bf16.mxu0 0
    %1259 = vmatmul.mubr.bf16.gmra.mxu0 %v1065
    %v1260 = vpop.f32.mrf.mxu0
    %v1261 = vadd.f32 0.0, %v1260
    %v1262 = vpop.f32.mrf.mxu0
    %v1263 = vadd.f32 0.0, %v1262
    %v1264 = vpop.f32.mrf.mxu0
    %v1265 = vpop.f32.mrf.mxu0
    %1266 = vdwg.mxu0
    %1267 = vmatprep.subr.bf16.mxu0 %v1193
    %1268 = vmatpush1.bf16.msra.mxu0 %v1192
    %1269 = vmatprep.subr.bf16.mxu0 %v1189
    %1270 = vmatpush1.bf16.msra.mxu0 %v1188
    %1271 = vmatprep.subr.bf16.mxu0 %v1185
    %1272 = vmatpush1.bf16.msra.mxu0 %v1184
    %1273 = vmatprep.subr.bf16.mxu0 %v1181
    %1274 = vmatpush1.bf16.msra.mxu0 %v1180
    %1275 = vmatprep.subr.bf16.mxu0 %v1177
    %1276 = vmatpush1.bf16.msra.mxu0 %v1176
    %1277 = vmatprep.subr.bf16.mxu0 %v1173
    %1278 = vmatpush1.bf16.msra.mxu0 %v1172
    %1279 = vmatprep.subr.bf16.mxu0 %v1169
    %1280 = vmatpush1.bf16.msra.mxu0 %v1168
    %1281 = vmatprep.subr.bf16.mxu0 %v1165
    %1282 = vmatpush1.bf16.msra.mxu0 %v1164
    %1283 = vmatprep.subr.bf16.mxu0 0
    %1284 = vmatpush2.bf16.msra.mxu0 0
    %1285 = vmatprep.subr.bf16.mxu0 0
    %1286 = vmatpush2.bf16.msra.mxu0 0
    %1287 = vmatprep.subr.bf16.mxu0 0
    %1288 = vmatpush2.bf16.msra.mxu0 0
    %1289 = vmatprep.subr.bf16.mxu0 0
    %1290 = vmatpush2.bf16.msra.mxu0 0
    %1291 = vmatprep.subr.bf16.mxu0 0
    %1292 = vmatpush2.bf16.msra.mxu0 0
    %1293 = vmatprep.subr.bf16.mxu0 0
    %1294 = vmatpush2.bf16.msra.mxu0 0
    %1295 = vmatprep.subr.bf16.mxu0 0
    %1296 = vmatpush2.bf16.msra.mxu0 0
    %1297 = vmatprep.subr.bf16.mxu0 0
    %1298 = vmatpush2.bf16.msra.mxu0 0
    %1299 = vmatprep.mubr.bf16.mxu0 0
    %1300 = vmatmul.mubr.bf16.gmra.mxu0 %v1065
    %v1301 = vpop.f32.mrf.mxu0
    %v1302 = vadd.f32 0.0, %v1301
    %v1303 = vpop.f32.mrf.mxu0
    %v1304 = vadd.f32 0.0, %v1303
    %v1305 = vpop.f32.mrf.mxu0
    %v1306 = vpop.f32.mrf.mxu0
    %1307 = vdwg.mxu0
    %v1340 = vunpack.c.l.b16 %v680
    %v1341 = vunpack.c.h.b16 %v680
    %v1342 = vunpack.c.l.b16 %v681
    %v1343 = vunpack.c.h.b16 %v681
    %v1344 = vunpack.c.l.b16 %v682
    %v1345 = vunpack.c.h.b16 %v682
    %v1346 = vunpack.c.l.b16 %v683
    %v1347 = vunpack.c.h.b16 %v683
    %v1348 = vunpack.c.l.b16 %v684
    %v1349 = vunpack.c.h.b16 %v684
    %v1350 = vunpack.c.l.b16 %v685
    %v1351 = vunpack.c.h.b16 %v685
    %v1352 = vunpack.c.l.b16 %v686
    %v1353 = vunpack.c.h.b16 %v686
    %v1354 = vunpack.c.l.b16 %v687
    %v1355 = vunpack.c.h.b16 %v687
    %v1356 = vunpack.c.l.b16 %v688
    %v1357 = vunpack.c.h.b16 %v688
    %v1358 = vunpack.c.l.b16 %v689
    %v1359 = vunpack.c.h.b16 %v689
    %v1360 = vunpack.c.l.b16 %v690
    %v1361 = vunpack.c.h.b16 %v690
    %v1362 = vunpack.c.l.b16 %v691
    %v1363 = vunpack.c.h.b16 %v691
    %v1364 = vunpack.c.l.b16 %v692
    %v1365 = vunpack.c.h.b16 %v692
    %v1366 = vunpack.c.l.b16 %v693
    %v1367 = vunpack.c.h.b16 %v693
    %v1368 = vunpack.c.l.b16 %v694
    %v1369 = vunpack.c.h.b16 %v694
    %v1370 = vunpack.c.l.b16 %v695
    %v1371 = vunpack.c.h.b16 %v695
    %v1372 = vunpack.c.l.b16 %v696
    %v1373 = vunpack.c.h.b16 %v696
    %v1374 = vunpack.c.l.b16 %v697
    %v1375 = vunpack.c.h.b16 %v697
    %v1376 = vunpack.c.l.b16 %v698
    %v1377 = vunpack.c.h.b16 %v698
    %v1378 = vunpack.c.l.b16 %v699
    %v1379 = vunpack.c.h.b16 %v699
    %v1380 = vunpack.c.l.b16 %v700
    %v1381 = vunpack.c.h.b16 %v700
    %v1382 = vunpack.c.l.b16 %v701
    %v1383 = vunpack.c.h.b16 %v701
    %v1384 = vunpack.c.l.b16 %v702
    %v1385 = vunpack.c.h.b16 %v702
    %v1386 = vunpack.c.l.b16 %v703
    %v1387 = vunpack.c.h.b16 %v703
    %v1388 = vunpack.c.l.b16 %v704
    %v1389 = vunpack.c.h.b16 %v704
    %v1390 = vunpack.c.l.b16 %v705
    %v1391 = vunpack.c.h.b16 %v705
    %v1392 = vunpack.c.l.b16 %v706
    %v1393 = vunpack.c.h.b16 %v706
    %v1394 = vunpack.c.l.b16 %v707
    %v1395 = vunpack.c.h.b16 %v707
    %v1396 = vunpack.c.l.b16 %v708
    %v1397 = vunpack.c.h.b16 %v708
    %v1398 = vunpack.c.l.b16 %v709
    %v1399 = vunpack.c.h.b16 %v709
    %v1400 = vunpack.c.l.b16 %v710
    %v1401 = vunpack.c.h.b16 %v710
    %v1402 = vunpack.c.l.b16 %v711
    %v1403 = vunpack.c.h.b16 %v711
    %v1404 = vpack.c.b16 %v1344, %v1340
    %v1405 = vpack.c.b16 %v1345, %v1341
    %v1406 = vpack.c.b16 %v1346, %v1342
    %v1407 = vpack.c.b16 %v1347, %v1343
    %v1408 = vpack.c.b16 %v1352, %v1348
    %v1409 = vpack.c.b16 %v1353, %v1349
    %v1410 = vpack.c.b16 %v1354, %v1350
    %v1411 = vpack.c.b16 %v1355, %v1351
    %v1412 = vpack.c.b16 %v1360, %v1356
    %v1413 = vpack.c.b16 %v1361, %v1357
    %v1414 = vpack.c.b16 %v1362, %v1358
    %v1415 = vpack.c.b16 %v1363, %v1359
    %v1416 = vpack.c.b16 %v1368, %v1364
    %v1417 = vpack.c.b16 %v1369, %v1365
    %v1418 = vpack.c.b16 %v1370, %v1366
    %v1419 = vpack.c.b16 %v1371, %v1367
    %v1420 = vpack.c.b16 %v1376, %v1372
    %v1421 = vpack.c.b16 %v1377, %v1373
    %v1422 = vpack.c.b16 %v1378, %v1374
    %v1423 = vpack.c.b16 %v1379, %v1375
    %v1424 = vpack.c.b16 %v1384, %v1380
    %v1425 = vpack.c.b16 %v1385, %v1381
    %v1426 = vpack.c.b16 %v1386, %v1382
    %v1427 = vpack.c.b16 %v1387, %v1383
    %v1428 = vpack.c.b16 %v1392, %v1388
    %v1429 = vpack.c.b16 %v1393, %v1389
    %v1430 = vpack.c.b16 %v1394, %v1390
    %v1431 = vpack.c.b16 %v1395, %v1391
    %v1432 = vpack.c.b16 %v1400, %v1396
    %v1433 = vpack.c.b16 %v1401, %v1397
    %v1434 = vpack.c.b16 %v1402, %v1398
    %v1435 = vpack.c.b16 %v1403, %v1399
    %1468 = vmatprep.subr.bf16.mxu0 %v1433
    %1469 = vmatpush1.bf16.msra.mxu0 %v1432
    %1470 = vmatprep.subr.bf16.mxu0 %v1429
    %1471 = vmatpush1.bf16.msra.mxu0 %v1428
    %1472 = vmatprep.subr.bf16.mxu0 %v1425
    %1473 = vmatpush1.bf16.msra.mxu0 %v1424
    %1474 = vmatprep.subr.bf16.mxu0 %v1421
    %1475 = vmatpush1.bf16.msra.mxu0 %v1420
    %1476 = vmatprep.subr.bf16.mxu0 %v1417
    %1477 = vmatpush1.bf16.msra.mxu0 %v1416
    %1478 = vmatprep.subr.bf16.mxu0 %v1413
    %1479 = vmatpush1.bf16.msra.mxu0 %v1412
    %1480 = vmatprep.subr.bf16.mxu0 %v1409
    %1481 = vmatpush1.bf16.msra.mxu0 %v1408
    %1482 = vmatprep.subr.bf16.mxu0 %v1405
    %1483 = vmatpush1.bf16.msra.mxu0 %v1404
    %1484 = vmatprep.subr.bf16.mxu0 0
    %1485 = vmatpush2.bf16.msra.mxu0 0
    %1486 = vmatprep.subr.bf16.mxu0 0
    %1487 = vmatpush2.bf16.msra.mxu0 0
    %1488 = vmatprep.subr.bf16.mxu0 0
    %1489 = vmatpush2.bf16.msra.mxu0 0
    %1490 = vmatprep.subr.bf16.mxu0 0
    %1491 = vmatpush2.bf16.msra.mxu0 0
    %1492 = vmatprep.subr.bf16.mxu0 0
    %1493 = vmatpush2.bf16.msra.mxu0 0
    %1494 = vmatprep.subr.bf16.mxu0 0
    %1495 = vmatpush2.bf16.msra.mxu0 0
    %1496 = vmatprep.subr.bf16.mxu0 0
    %1497 = vmatpush2.bf16.msra.mxu0 0
    %1498 = vmatprep.subr.bf16.mxu0 0
    %1499 = vmatpush2.bf16.msra.mxu0 0
    %1500 = vmatprep.mubr.bf16.mxu0 0
    %1501 = vmatmul.mubr.bf16.gmra.mxu0 %v1064
    %v1502 = vpop.f32.mrf.mxu0
    %v1503 = vadd.f32 %v1261, %v1502
    %v1504 = vpop.f32.mrf.mxu0
    %v1505 = vadd.f32 %v1263, %v1504
    %v1506 = vpop.f32.mrf.mxu0
    %v1507 = vpop.f32.mrf.mxu0
    %1508 = vdwg.mxu0
    %1509 = vmatprep.subr.bf16.mxu0 %v1435
    %1510 = vmatpush1.bf16.msra.mxu0 %v1434
    %1511 = vmatprep.subr.bf16.mxu0 %v1431
    %1512 = vmatpush1.bf16.msra.mxu0 %v1430
    %1513 = vmatprep.subr.bf16.mxu0 %v1427
    %1514 = vmatpush1.bf16.msra.mxu0 %v1426
    %1515 = vmatprep.subr.bf16.mxu0 %v1423
    %1516 = vmatpush1.bf16.msra.mxu0 %v1422
    %1517 = vmatprep.subr.bf16.mxu0 %v1419
    %1518 = vmatpush1.bf16.msra.mxu0 %v1418
    %1519 = vmatprep.subr.bf16.mxu0 %v1415
    %1520 = vmatpush1.bf16.msra.mxu0 %v1414
    %1521 = vmatprep.subr.bf16.mxu0 %v1411
    %1522 = vmatpush1.bf16.msra.mxu0 %v1410
    %1523 = vmatprep.subr.bf16.mxu0 %v1407
    %1524 = vmatpush1.bf16.msra.mxu0 %v1406
    %1525 = vmatprep.subr.bf16.mxu0 0
    %1526 = vmatpush2.bf16.msra.mxu0 0
    %1527 = vmatprep.subr.bf16.mxu0 0
    %1528 = vmatpush2.bf16.msra.mxu0 0
    %1529 = vmatprep.subr.bf16.mxu0 0
    %1530 = vmatpush2.bf16.msra.mxu0 0
    %1531 = vmatprep.subr.bf16.mxu0 0
    %1532 = vmatpush2.bf16.msra.mxu0 0
    %1533 = vmatprep.subr.bf16.mxu0 0
    %1534 = vmatpush2.bf16.msra.mxu0 0
    %1535 = vmatprep.subr.bf16.mxu0 0
    %1536 = vmatpush2.bf16.msra.mxu0 0
    %1537 = vmatprep.subr.bf16.mxu0 0
    %1538 = vmatpush2.bf16.msra.mxu0 0
    %1539 = vmatprep.subr.bf16.mxu0 0
    %1540 = vmatpush2.bf16.msra.mxu0 0
    %1541 = vmatprep.mubr.bf16.mxu0 0
    %1542 = vmatmul.mubr.bf16.gmra.mxu0 %v1064
    %v1543 = vpop.f32.mrf.mxu0
    %v1544 = vadd.f32 %v1302, %v1543
    %v1545 = vpop.f32.mrf.mxu0
    %v1546 = vadd.f32 %v1304, %v1545
    %v1547 = vpop.f32.mrf.mxu0
    %v1548 = vpop.f32.mrf.mxu0
    %1549 = vdwg.mxu0
    %v1550 = vadd.f32 %v1503, %v749
    %v1551 = vadd.f32 %v1505, %v753
    %v1552 = vadd.f32 %v1544, %v757
    %v1553 = vadd.f32 %v1546, %v761
    %v1554 = vmul.f32 %v1550, 0.5
    %v1555 = vtanh.pop %v1554
    %v1556 = vmul.f32 %v1555, 0.5
    %v1557 = vadd.f32 %v1556, 0.5
    %v1558 = vmul.f32 %v1551, 0.5
    %v1559 = vtanh.pop %v1558
    %v1560 = vmul.f32 %v1559, 0.5
    %v1561 = vadd.f32 %v1560, 0.5
    %v1562 = vtanh.pop %v1552
    %v1563 = vmul.f32 %v1553, 0.5
    %v1564 = vtanh.pop %v1563
    %v1565 = vmul.f32 %v1564, 0.5
    %v1566 = vadd.f32 %v1565, 0.5
    %v1567 = vmul.f32 %v1561, %v769
    %v1568 = vmul.f32 %v1557, %v1562
    %v1569 = vadd.f32 %v1567, %v1568
    %v1570 = vtanh.pop %v1569
    %v1571 = vmul.f32 %v1566, %v1570
    %v1572 = vld [vmem:[%s570] sm:$0xff]
    %1573 = vmatprep.subr.bf16.mxu0 %v899
    %1574 = vmatpush1.bf16.msra.mxu0 %v898
    %1575 = vmatprep.subr.bf16.mxu0 %v895
    %1576 = vmatpush1.bf16.msra.mxu0 %v894
    %1577 = vmatprep.subr.bf16.mxu0 %v891
    %1578 = vmatpush1.bf16.msra.mxu0 %v890
    %1579 = vmatprep.subr.bf16.mxu0 %v887
    %1580 = vmatpush1.bf16.msra.mxu0 %v886
    %1581 = vmatprep.subr.bf16.mxu0 %v883
    %1582 = vmatpush1.bf16.msra.mxu0 %v882
    %1583 = vmatprep.subr.bf16.mxu0 %v879
    %1584 = vmatpush1.bf16.msra.mxu0 %v878
    %1585 = vmatprep.subr.bf16.mxu0 %v875
    %1586 = vmatpush1.bf16.msra.mxu0 %v874
    %1587 = vmatprep.subr.bf16.mxu0 %v871
    %1588 = vmatpush1.bf16.msra.mxu0 %v870
    %1589 = vmatprep.subr.bf16.mxu0 0
    %1590 = vmatpush2.bf16.msra.mxu0 0
    %1591 = vmatprep.subr.bf16.mxu0 0
    %1592 = vmatpush2.bf16.msra.mxu0 0
    %1593 = vmatprep.subr.bf16.mxu0 0
    %1594 = vmatpush2.bf16.msra.mxu0 0
    %1595 = vmatprep.subr.bf16.mxu0 0
    %1596 = vmatpush2.bf16.msra.mxu0 0
    %1597 = vmatprep.subr.bf16.mxu0 0
    %1598 = vmatpush2.bf16.msra.mxu0 0
    %1599 = vmatprep.subr.bf16.mxu0 0
    %1600 = vmatpush2.bf16.msra.mxu0 0
    %1601 = vmatprep.subr.bf16.mxu0 0
    %1602 = vmatpush2.bf16.msra.mxu0 0
    %1603 = vmatprep.subr.bf16.mxu0 0
    %1604 = vmatpush2.bf16.msra.mxu0 0
    %1605 = vmatprep.mubr.bf16.mxu0 0
    %1606 = vmatmul.mubr.bf16.gmra.mxu0 %v1064
    %v1607 = vpop.f32.mrf.mxu0
    %v1608 = vadd.f32 0.0, %v1607
    %v1609 = vpop.f32.mrf.mxu0
    %v1610 = vadd.f32 0.0, %v1609
    %v1611 = vpop.f32.mrf.mxu0
    %v1612 = vpop.f32.mrf.mxu0
    %1613 = vdwg.mxu0
    %1614 = vmatprep.subr.bf16.mxu0 %v901
    %1615 = vmatpush1.bf16.msra.mxu0 %v900
    %1616 = vmatprep.subr.bf16.mxu0 %v897
    %1617 = vmatpush1.bf16.msra.mxu0 %v896
    %1618 = vmatprep.subr.bf16.mxu0 %v893
    %1619 = vmatpush1.bf16.msra.mxu0 %v892
    %1620 = vmatprep.subr.bf16.mxu0 %v889
    %1621 = vmatpush1.bf16.msra.mxu0 %v888
    %1622 = vmatprep.subr.bf16.mxu0 %v885
    %1623 = vmatpush1.bf16.msra.mxu0 %v884
    %1624 = vmatprep.subr.bf16.mxu0 %v881
    %1625 = vmatpush1.bf16.msra.mxu0 %v880
    %1626 = vmatprep.subr.bf16.mxu0 %v877
    %1627 = vmatpush1.bf16.msra.mxu0 %v876
    %1628 = vmatprep.subr.bf16.mxu0 %v873
    %1629 = vmatpush1.bf16.msra.mxu0 %v872
    %1630 = vmatprep.subr.bf16.mxu0 0
    %1631 = vmatpush2.bf16.msra.mxu0 0
    %1632 = vmatprep.subr.bf16.mxu0 0
    %1633 = vmatpush2.bf16.msra.mxu0 0
    %1634 = vmatprep.subr.bf16.mxu0 0
    %1635 = vmatpush2.bf16.msra.mxu0 0
    %1636 = vmatprep.subr.bf16.mxu0 0
    %1637 = vmatpush2.bf16.msra.mxu0 0
    %1638 = vmatprep.subr.bf16.mxu0 0
    %1639 = vmatpush2.bf16.msra.mxu0 0
    %1640 = vmatprep.subr.bf16.mxu0 0
    %1641 = vmatpush2.bf16.msra.mxu0 0
    %1642 = vmatprep.subr.bf16.mxu0 0
    %1643 = vmatpush2.bf16.msra.mxu0 0
    %1644 = vmatprep.subr.bf16.mxu0 0
    %1645 = vmatpush2.bf16.msra.mxu0 0
    %1646 = vmatprep.mubr.bf16.mxu0 0
    %1647 = vmatmul.mubr.bf16.gmra.mxu0 %v1064
    %v1648 = vpop.f32.mrf.mxu0
    %v1649 = vadd.f32 0.0, %v1648
    %v1650 = vpop.f32.mrf.mxu0
    %v1651 = vadd.f32 0.0, %v1650
    %v1652 = vpop.f32.mrf.mxu0
    %v1653 = vpop.f32.mrf.mxu0
    %1654 = vdwg.mxu0
    %v1659 = vcombine.low %v1608, %v1610
    %v1660 = vcombine.low %v1649, %v1651
    %v1662 = vunpack.c.l.s4 1983009808
    %v1663 = vunpack.c.0.s8 %v1662
    %v1664 = vlaneseq
    %v1665 = vshrl.u32 %v1664, 7
    %v1666 = vsub.s32 %v1663, %v1665
    %v1667 = vrot.slane %v1659, %v1666
    %v1669 = vunpack.c.l.s4 1983009808
    %v1670 = vunpack.c.0.s8 %v1669
    %v1671 = vlaneseq
    %v1672 = vshrl.u32 %v1671, 7
    %v1673 = vsub.s32 %v1670, %v1672
    %v1674 = vrot.slane %v1660, %v1673
    %v1675 = vcombine.low %v1667, %v1674
    %v1677 = vadd.f32 %v1572, %v1675
    %v1678 = vmul.f32 %v1677, 0.5
    %v1679 = vtanh.pop %v1678
    %v1680 = vmul.f32 %v1679, 0.5
    %v1681 = vadd.f32 %v1680, 0.5
    %v1683 = vrot.slane %v1677, 2
    %v1685 = vmul.f32 %v1683, 0.5
    %v1686 = vtanh.pop %v1685
    %v1687 = vmul.f32 %v1686, 0.5
    %v1688 = vadd.f32 %v1687, 0.5
    %v1689 = vrot.slane %v1677, 4
    %v1691 = vtanh.pop %v1689
    %v1692 = vrot.slane %v1677, 6
    %v1694 = vmul.f32 %v1692, 0.5
    %v1695 = vtanh.pop %v1694
    %v1696 = vmul.f32 %v1695, 0.5
    %v1697 = vadd.f32 %v1696, 0.5
    %v1698 = vmul.f32 %v1688, %v1061
    %v1699 = vmul.f32 %v1681, %v1691
    %v1700 = vadd.f32 %v1698, %v1699
    %v1701 = vtanh.pop %v1700
    %v1702 = vmul.f32 %v1697, %v1701
    %v1703 = vpack.c.bf16 %v1702, %v1702
    %v1704 = vpack.c.bf16 %v1571, %v1571
    %1705 = vmatprep.subr.bf16.mxu0 %v1191
    %1706 = vmatpush1.bf16.msra.mxu0 %v1190
    %1707 = vmatprep.subr.bf16.mxu0 %v1187
    %1708 = vmatpush1.bf16.msra.mxu0 %v1186
    %1709 = vmatprep.subr.bf16.mxu0 %v1183
    %1710 = vmatpush1.bf16.msra.mxu0 %v1182
    %1711 = vmatprep.subr.bf16.mxu0 %v1179
    %1712 = vmatpush1.bf16.msra.mxu0 %v1178
    %1713 = vmatprep.subr.bf16.mxu0 %v1175
    %1714 = vmatpush1.bf16.msra.mxu0 %v1174
    %1715 = vmatprep.subr.bf16.mxu0 %v1171
    %1716 = vmatpush1.bf16.msra.mxu0 %v1170
    %1717 = vmatprep.subr.bf16.mxu0 %v1167
    %1718 = vmatpush1.bf16.msra.mxu0 %v1166
    %1719 = vmatprep.subr.bf16.mxu0 %v1163
    %1720 = vmatpush1.bf16.msra.mxu0 %v1162
    %1721 = vmatprep.subr.bf16.mxu0 0
    %1722 = vmatpush2.bf16.msra.mxu0 0
    %1723 = vmatprep.subr.bf16.mxu0 0
    %1724 = vmatpush2.bf16.msra.mxu0 0
    %1725 = vmatprep.subr.bf16.mxu0 0
    %1726 = vmatpush2.bf16.msra.mxu0 0
    %1727 = vmatprep.subr.bf16.mxu0 0
    %1728 = vmatpush2.bf16.msra.mxu0 0
    %1729 = vmatprep.subr.bf16.mxu0 0
    %1730 = vmatpush2.bf16.msra.mxu0 0
    %1731 = vmatprep.subr.bf16.mxu0 0
    %1732 = vmatpush2.bf16.msra.mxu0 0
    %1733 = vmatprep.subr.bf16.mxu0 0
    %1734 = vmatpush2.bf16.msra.mxu0 0
    %1735 = vmatprep.subr.bf16.mxu0 0
    %1736 = vmatpush2.bf16.msra.mxu0 0
    %1737 = vmatprep.mubr.bf16.mxu0 0
    %1738 = vmatmul.mubr.bf16.gmra.mxu0 %v1704
    %v1739 = vpop.f32.mrf.mxu0
    %v1740 = vadd.f32 0.0, %v1739
    %v1741 = vpop.f32.mrf.mxu0
    %v1742 = vadd.f32 0.0, %v1741
    %v1743 = vpop.f32.mrf.mxu0
    %v1744 = vpop.f32.mrf.mxu0
    %1745 = vdwg.mxu0
    %1746 = vmatprep.subr.bf16.mxu0 %v1193
    %1747 = vmatpush1.bf16.msra.mxu0 %v1192
    %1748 = vmatprep.subr.bf16.mxu0 %v1189
    %1749 = vmatpush1.bf16.msra.mxu0 %v1188
    %1750 = vmatprep.subr.bf16.mxu0 %v1185
    %1751 = vmatpush1.bf16.msra.mxu0 %v1184
    %1752 = vmatprep.subr.bf16.mxu0 %v1181
    %1753 = vmatpush1.bf16.msra.mxu0 %v1180
    %1754 = vmatprep.subr.bf16.mxu0 %v1177
    %1755 = vmatpush1.bf16.msra.mxu0 %v1176
    %1756 = vmatprep.subr.bf16.mxu0 %v1173
    %1757 = vmatpush1.bf16.msra.mxu0 %v1172
    %1758 = vmatprep.subr.bf16.mxu0 %v1169
    %1759 = vmatpush1.bf16.msra.mxu0 %v1168
    %1760 = vmatprep.subr.bf16.mxu0 %v1165
    %1761 = vmatpush1.bf16.msra.mxu0 %v1164
    %1762 = vmatprep.subr.bf16.mxu0 0
    %1763 = vmatpush2.bf16.msra.mxu0 0
    %1764 = vmatprep.subr.bf16.mxu0 0
    %1765 = vmatpush2.bf16.msra.mxu0 0
    %1766 = vmatprep.subr.bf16.mxu0 0
    %1767 = vmatpush2.bf16.msra.mxu0 0
    %1768 = vmatprep.subr.bf16.mxu0 0
    %1769 = vmatpush2.bf16.msra.mxu0 0
    %1770 = vmatprep.subr.bf16.mxu0 0
    %1771 = vmatpush2.bf16.msra.mxu0 0
    %1772 = vmatprep.subr.bf16.mxu0 0
    %1773 = vmatpush2.bf16.msra.mxu0 0
    %1774 = vmatprep.subr.bf16.mxu0 0
    %1775 = vmatpush2.bf16.msra.mxu0 0
    %1776 = vmatprep.subr.bf16.mxu0 0
    %1777 = vmatpush2.bf16.msra.mxu0 0
    %1778 = vmatprep.mubr.bf16.mxu0 0
    %1779 = vmatmul.mubr.bf16.gmra.mxu0 %v1704
    %v1780 = vpop.f32.mrf.mxu0
    %v1781 = vadd.f32 0.0, %v1780
    %v1782 = vpop.f32.mrf.mxu0
    %v1783 = vadd.f32 0.0, %v1782
    %v1784 = vpop.f32.mrf.mxu0
    %v1785 = vpop.f32.mrf.mxu0
    %1786 = vdwg.mxu0
    %1787 = vmatprep.subr.bf16.mxu0 %v1433
    %1788 = vmatpush1.bf16.msra.mxu0 %v1432
    %1789 = vmatprep.subr.bf16.mxu0 %v1429
    %1790 = vmatpush1.bf16.msra.mxu0 %v1428
    %1791 = vmatprep.subr.bf16.mxu0 %v1425
    %1792 = vmatpush1.bf16.msra.mxu0 %v1424
    %1793 = vmatprep.subr.bf16.mxu0 %v1421
    %1794 = vmatpush1.bf16.msra.mxu0 %v1420
    %1795 = vmatprep.subr.bf16.mxu0 %v1417
    %1796 = vmatpush1.bf16.msra.mxu0 %v1416
    %1797 = vmatprep.subr.bf16.mxu0 %v1413
    %1798 = vmatpush1.bf16.msra.mxu0 %v1412
    %1799 = vmatprep.subr.bf16.mxu0 %v1409
    %1800 = vmatpush1.bf16.msra.mxu0 %v1408
    %1801 = vmatprep.subr.bf16.mxu0 %v1405
    %1802 = vmatpush1.bf16.msra.mxu0 %v1404
    %1803 = vmatprep.subr.bf16.mxu0 0
    %1804 = vmatpush2.bf16.msra.mxu0 0
    %1805 = vmatprep.subr.bf16.mxu0 0
    %1806 = vmatpush2.bf16.msra.mxu0 0
    %1807 = vmatprep.subr.bf16.mxu0 0
    %1808 = vmatpush2.bf16.msra.mxu0 0
    %1809 = vmatprep.subr.bf16.mxu0 0
    %1810 = vmatpush2.bf16.msra.mxu0 0
    %1811 = vmatprep.subr.bf16.mxu0 0
    %1812 = vmatpush2.bf16.msra.mxu0 0
    %1813 = vmatprep.subr.bf16.mxu0 0
    %1814 = vmatpush2.bf16.msra.mxu0 0
    %1815 = vmatprep.subr.bf16.mxu0 0
    %1816 = vmatpush2.bf16.msra.mxu0 0
    %1817 = vmatprep.subr.bf16.mxu0 0
    %1818 = vmatpush2.bf16.msra.mxu0 0
    %1819 = vmatprep.mubr.bf16.mxu0 0
    %1820 = vmatmul.mubr.bf16.gmra.mxu0 %v1703
    %v1821 = vpop.f32.mrf.mxu0
    %v1822 = vadd.f32 %v1740, %v1821
    %v1823 = vpop.f32.mrf.mxu0
    %v1824 = vadd.f32 %v1742, %v1823
    %v1825 = vpop.f32.mrf.mxu0
    %v1826 = vpop.f32.mrf.mxu0
    %1827 = vdwg.mxu0
    %1828 = vmatprep.subr.bf16.mxu0 %v1435
    %1829 = vmatpush1.bf16.msra.mxu0 %v1434
    %1830 = vmatprep.subr.bf16.mxu0 %v1431
    %1831 = vmatpush1.bf16.msra.mxu0 %v1430
    %1832 = vmatprep.subr.bf16.mxu0 %v1427
    %1833 = vmatpush1.bf16.msra.mxu0 %v1426
    %1834 = vmatprep.subr.bf16.mxu0 %v1423
    %1835 = vmatpush1.bf16.msra.mxu0 %v1422
    %1836 = vmatprep.subr.bf16.mxu0 %v1419
    %1837 = vmatpush1.bf16.msra.mxu0 %v1418
    %1838 = vmatprep.subr.bf16.mxu0 %v1415
    %1839 = vmatpush1.bf16.msra.mxu0 %v1414
    %1840 = vmatprep.subr.bf16.mxu0 %v1411
    %1841 = vmatpush1.bf16.msra.mxu0 %v1410
    %1842 = vmatprep.subr.bf16.mxu0 %v1407
    %1843 = vmatpush1.bf16.msra.mxu0 %v1406
    %1844 = vmatprep.subr.bf16.mxu0 0
    %1845 = vmatpush2.bf16.msra.mxu0 0
    %1846 = vmatprep.subr.bf16.mxu0 0
    %1847 = vmatpush2.bf16.msra.mxu0 0
    %1848 = vmatprep.subr.bf16.mxu0 0
    %1849 = vmatpush2.bf16.msra.mxu0 0
    %1850 = vmatprep.subr.bf16.mxu0 0
    %1851 = vmatpush2.bf16.msra.mxu0 0
    %1852 = vmatprep.subr.bf16.mxu0 0
    %1853 = vmatpush2.bf16.msra.mxu0 0
    %1854 = vmatprep.subr.bf16.mxu0 0
    %1855 = vmatpush2.bf16.msra.mxu0 0
    %1856 = vmatprep.subr.bf16.mxu0 0
    %1857 = vmatpush2.bf16.msra.mxu0 0
    %1858 = vmatprep.subr.bf16.mxu0 0
    %1859 = vmatpush2.bf16.msra.mxu0 0
    %1860 = vmatprep.mubr.bf16.mxu0 0
    %1861 = vmatmul.mubr.bf16.gmra.mxu0 %v1703
    %v1862 = vpop.f32.mrf.mxu0
    %v1863 = vadd.f32 %v1781, %v1862
    %v1864 = vpop.f32.mrf.mxu0
    %v1865 = vadd.f32 %v1783, %v1864
    %v1866 = vpop.f32.mrf.mxu0
    %v1867 = vpop.f32.mrf.mxu0
    %1868 = vdwg.mxu0
    %v1869 = vadd.f32 %v1822, %v749
    %v1870 = vadd.f32 %v1824, %v753
    %v1871 = vadd.f32 %v1863, %v757
    %v1872 = vadd.f32 %v1865, %v761
    %v1873 = vmul.f32 %v1869, 0.5
    %v1874 = vtanh.pop %v1873
    %v1875 = vmul.f32 %v1874, 0.5
    %v1876 = vadd.f32 %v1875, 0.5
    %v1877 = vmul.f32 %v1870, 0.5
    %v1878 = vtanh.pop %v1877
    %v1879 = vmul.f32 %v1878, 0.5
    %v1880 = vadd.f32 %v1879, 0.5
    %v1881 = vtanh.pop %v1871
    %v1882 = vmul.f32 %v1872, 0.5
    %v1883 = vtanh.pop %v1882
    %v1884 = vmul.f32 %v1883, 0.5
    %v1885 = vadd.f32 %v1884, 0.5
    %v1886 = vmul.f32 %v1880, %v1569
    %v1887 = vmul.f32 %v1876, %v1881
    %v1888 = vadd.f32 %v1886, %v1887
    %v1889 = vtanh.pop %v1888
    %v1890 = vmul.f32 %v1885, %v1889
    %v1891 = vld [vmem:[%s590] sm:$0xff]
    %1892 = vmatprep.subr.bf16.mxu0 %v899
    %1893 = vmatpush1.bf16.msra.mxu0 %v898
    %1894 = vmatprep.subr.bf16.mxu0 %v895
    %1895 = vmatpush1.bf16.msra.mxu0 %v894
    %1896 = vmatprep.subr.bf16.mxu0 %v891
    %1897 = vmatpush1.bf16.msra.mxu0 %v890
    %1898 = vmatprep.subr.bf16.mxu0 %v887
    %1899 = vmatpush1.bf16.msra.mxu0 %v886
    %1900 = vmatprep.subr.bf16.mxu0 %v883
    %1901 = vmatpush1.bf16.msra.mxu0 %v882
    %1902 = vmatprep.subr.bf16.mxu0 %v879
    %1903 = vmatpush1.bf16.msra.mxu0 %v878
    %1904 = vmatprep.subr.bf16.mxu0 %v875
    %1905 = vmatpush1.bf16.msra.mxu0 %v874
    %1906 = vmatprep.subr.bf16.mxu0 %v871
    %1907 = vmatpush1.bf16.msra.mxu0 %v870
    %1908 = vmatprep.subr.bf16.mxu0 0
    %1909 = vmatpush2.bf16.msra.mxu0 0
    %1910 = vmatprep.subr.bf16.mxu0 0
    %1911 = vmatpush2.bf16.msra.mxu0 0
    %1912 = vmatprep.subr.bf16.mxu0 0
    %1913 = vmatpush2.bf16.msra.mxu0 0
    %1914 = vmatprep.subr.bf16.mxu0 0
    %1915 = vmatpush2.bf16.msra.mxu0 0
    %1916 = vmatprep.subr.bf16.mxu0 0
    %1917 = vmatpush2.bf16.msra.mxu0 0
    %1918 = vmatprep.subr.bf16.mxu0 0
    %1919 = vmatpush2.bf16.msra.mxu0 0
    %1920 = vmatprep.subr.bf16.mxu0 0
    %1921 = vmatpush2.bf16.msra.mxu0 0
    %1922 = vmatprep.subr.bf16.mxu0 0
    %1923 = vmatpush2.bf16.msra.mxu0 0
    %1924 = vmatprep.mubr.bf16.mxu0 0
    %1925 = vmatmul.mubr.bf16.gmra.mxu0 %v1703
    %v1926 = vpop.f32.mrf.mxu0
    %v1927 = vadd.f32 0.0, %v1926
    %v1928 = vpop.f32.mrf.mxu0
    %v1929 = vadd.f32 0.0, %v1928
    %v1930 = vpop.f32.mrf.mxu0
    %v1931 = vpop.f32.mrf.mxu0
    %1932 = vdwg.mxu0
    %1933 = vmatprep.subr.bf16.mxu0 %v901
    %1934 = vmatpush1.bf16.msra.mxu0 %v900
    %1935 = vmatprep.subr.bf16.mxu0 %v897
    %1936 = vmatpush1.bf16.msra.mxu0 %v896
    %1937 = vmatprep.subr.bf16.mxu0 %v893
    %1938 = vmatpush1.bf16.msra.mxu0 %v892
    %1939 = vmatprep.subr.bf16.mxu0 %v889
    %1940 = vmatpush1.bf16.msra.mxu0 %v888
    %1941 = vmatprep.subr.bf16.mxu0 %v885
    %1942 = vmatpush1.bf16.msra.mxu0 %v884
    %1943 = vmatprep.subr.bf16.mxu0 %v881
    %1944 = vmatpush1.bf16.msra.mxu0 %v880
    %1945 = vmatprep.subr.bf16.mxu0 %v877
    %1946 = vmatpush1.bf16.msra.mxu0 %v876
    %1947 = vmatprep.subr.bf16.mxu0 %v873
    %1948 = vmatpush1.bf16.msra.mxu0 %v872
    %1949 = vmatprep.subr.bf16.mxu0 0
    %1950 = vmatpush2.bf16.msra.mxu0 0
    %1951 = vmatprep.subr.bf16.mxu0 0
    %1952 = vmatpush2.bf16.msra.mxu0 0
    %1953 = vmatprep.subr.bf16.mxu0 0
    %1954 = vmatpush2.bf16.msra.mxu0 0
    %1955 = vmatprep.subr.bf16.mxu0 0
    %1956 = vmatpush2.bf16.msra.mxu0 0
    %1957 = vmatprep.subr.bf16.mxu0 0
    %1958 = vmatpush2.bf16.msra.mxu0 0
    %1959 = vmatprep.subr.bf16.mxu0 0
    %1960 = vmatpush2.bf16.msra.mxu0 0
    %1961 = vmatprep.subr.bf16.mxu0 0
    %1962 = vmatpush2.bf16.msra.mxu0 0
    %1963 = vmatprep.subr.bf16.mxu0 0
    %1964 = vmatpush2.bf16.msra.mxu0 0
    %1965 = vmatprep.mubr.bf16.mxu0 0
    %1966 = vmatmul.mubr.bf16.gmra.mxu0 %v1703
    %v1967 = vpop.f32.mrf.mxu0
    %v1968 = vadd.f32 0.0, %v1967
    %v1969 = vpop.f32.mrf.mxu0
    %v1970 = vadd.f32 0.0, %v1969
    %v1971 = vpop.f32.mrf.mxu0
    %v1972 = vpop.f32.mrf.mxu0
    %1973 = vdwg.mxu0
    %v1978 = vcombine.low %v1927, %v1929
    %v1979 = vcombine.low %v1968, %v1970
    %v1981 = vunpack.c.l.s4 1983009808
    %v1982 = vunpack.c.0.s8 %v1981
    %v1983 = vlaneseq
    %v1984 = vshrl.u32 %v1983, 7
    %v1985 = vsub.s32 %v1982, %v1984
    %v1986 = vrot.slane %v1978, %v1985
    %v1988 = vunpack.c.l.s4 1983009808
    %v1989 = vunpack.c.0.s8 %v1988
    %v1990 = vlaneseq
    %v1991 = vshrl.u32 %v1990, 7
    %v1992 = vsub.s32 %v1989, %v1991
    %v1993 = vrot.slane %v1979, %v1992
    %v1994 = vcombine.low %v1986, %v1993
    %v1996 = vadd.f32 %v1891, %v1994
    %v1997 = vmul.f32 %v1996, 0.5
    %v1998 = vtanh.pop %v1997
    %v1999 = vmul.f32 %v1998, 0.5
    %v2000 = vadd.f32 %v1999, 0.5
    %v2002 = vrot.slane %v1996, 2
    %v2004 = vmul.f32 %v2002, 0.5
    %v2005 = vtanh.pop %v2004
    %v2006 = vmul.f32 %v2005, 0.5
    %v2007 = vadd.f32 %v2006, 0.5
    %v2008 = vrot.slane %v1996, 4
    %v2010 = vtanh.pop %v2008
    %v2011 = vrot.slane %v1996, 6
    %v2013 = vmul.f32 %v2011, 0.5
    %v2014 = vtanh.pop %v2013
    %v2015 = vmul.f32 %v2014, 0.5
    %v2016 = vadd.f32 %v2015, 0.5
    %v2017 = vmul.f32 %v2007, %v1700
    %v2018 = vmul.f32 %v2000, %v2010
    %v2019 = vadd.f32 %v2017, %v2018
    %v2020 = vtanh.pop %v2019
    %v2021 = vmul.f32 %v2016, %v2020
    %v2022 = vpack.c.bf16 %v2021, %v2021
    %v2023 = vpack.c.bf16 %v1890, %v1890
    %2024 = vmatprep.subr.bf16.mxu0 %v1191
    %2025 = vmatpush1.bf16.msra.mxu0 %v1190
    %2026 = vmatprep.subr.bf16.mxu0 %v1187
    %2027 = vmatpush1.bf16.msra.mxu0 %v1186
    %2028 = vmatprep.subr.bf16.mxu0 %v1183
    %2029 = vmatpush1.bf16.msra.mxu0 %v1182
    %2030 = vmatprep.subr.bf16.mxu0 %v1179
    %2031 = vmatpush1.bf16.msra.mxu0 %v1178
    %2032 = vmatprep.subr.bf16.mxu0 %v1175
    %2033 = vmatpush1.bf16.msra.mxu0 %v1174
    %2034 = vmatprep.subr.bf16.mxu0 %v1171
    %2035 = vmatpush1.bf16.msra.mxu0 %v1170
    %2036 = vmatprep.subr.bf16.mxu0 %v1167
    %2037 = vmatpush1.bf16.msra.mxu0 %v1166
    %2038 = vmatprep.subr.bf16.mxu0 %v1163
    %2039 = vmatpush1.bf16.msra.mxu0 %v1162
    %2040 = vmatprep.subr.bf16.mxu0 0
    %2041 = vmatpush2.bf16.msra.mxu0 0
    %2042 = vmatprep.subr.bf16.mxu0 0
    %2043 = vmatpush2.bf16.msra.mxu0 0
    %2044 = vmatprep.subr.bf16.mxu0 0
    %2045 = vmatpush2.bf16.msra.mxu0 0
    %2046 = vmatprep.subr.bf16.mxu0 0
    %2047 = vmatpush2.bf16.msra.mxu0 0
    %2048 = vmatprep.subr.bf16.mxu0 0
    %2049 = vmatpush2.bf16.msra.mxu0 0
    %2050 = vmatprep.subr.bf16.mxu0 0
    %2051 = vmatpush2.bf16.msra.mxu0 0
    %2052 = vmatprep.subr.bf16.mxu0 0
    %2053 = vmatpush2.bf16.msra.mxu0 0
    %2054 = vmatprep.subr.bf16.mxu0 0
    %2055 = vmatpush2.bf16.msra.mxu0 0
    %2056 = vmatprep.mubr.bf16.mxu0 0
    %2057 = vmatmul.mubr.bf16.gmra.mxu0 %v2023
    %v2058 = vpop.f32.mrf.mxu0
    %v2059 = vadd.f32 0.0, %v2058
    %v2060 = vpop.f32.mrf.mxu0
    %v2061 = vadd.f32 0.0, %v2060
    %v2062 = vpop.f32.mrf.mxu0
    %v2063 = vpop.f32.mrf.mxu0
    %2064 = vdwg.mxu0
    %2065 = vmatprep.subr.bf16.mxu0 %v1193
    %2066 = vmatpush1.bf16.msra.mxu0 %v1192
    %2067 = vmatprep.subr.bf16.mxu0 %v1189
    %2068 = vmatpush1.bf16.msra.mxu0 %v1188
    %2069 = vmatprep.subr.bf16.mxu0 %v1185
    %2070 = vmatpush1.bf16.msra.mxu0 %v1184
    %2071 = vmatprep.subr.bf16.mxu0 %v1181
    %2072 = vmatpush1.bf16.msra.mxu0 %v1180
    %2073 = vmatprep.subr.bf16.mxu0 %v1177
    %2074 = vmatpush1.bf16.msra.mxu0 %v1176
    %2075 = vmatprep.subr.bf16.mxu0 %v1173
    %2076 = vmatpush1.bf16.msra.mxu0 %v1172
    %2077 = vmatprep.subr.bf16.mxu0 %v1169
    %2078 = vmatpush1.bf16.msra.mxu0 %v1168
    %2079 = vmatprep.subr.bf16.mxu0 %v1165
    %2080 = vmatpush1.bf16.msra.mxu0 %v1164
    %2081 = vmatprep.subr.bf16.mxu0 0
    %2082 = vmatpush2.bf16.msra.mxu0 0
    %2083 = vmatprep.subr.bf16.mxu0 0
    %2084 = vmatpush2.bf16.msra.mxu0 0
    %2085 = vmatprep.subr.bf16.mxu0 0
    %2086 = vmatpush2.bf16.msra.mxu0 0
    %2087 = vmatprep.subr.bf16.mxu0 0
    %2088 = vmatpush2.bf16.msra.mxu0 0
    %2089 = vmatprep.subr.bf16.mxu0 0
    %2090 = vmatpush2.bf16.msra.mxu0 0
    %2091 = vmatprep.subr.bf16.mxu0 0
    %2092 = vmatpush2.bf16.msra.mxu0 0
    %2093 = vmatprep.subr.bf16.mxu0 0
    %2094 = vmatpush2.bf16.msra.mxu0 0
    %2095 = vmatprep.subr.bf16.mxu0 0
    %2096 = vmatpush2.bf16.msra.mxu0 0
    %2097 = vmatprep.mubr.bf16.mxu0 0
    %2098 = vmatmul.mubr.bf16.gmra.mxu0 %v2023
    %v2099 = vpop.f32.mrf.mxu0
    %v2100 = vadd.f32 0.0, %v2099
    %v2101 = vpop.f32.mrf.mxu0
    %v2102 = vadd.f32 0.0, %v2101
    %v2103 = vpop.f32.mrf.mxu0
    %v2104 = vpop.f32.mrf.mxu0
    %2105 = vdwg.mxu0
    %2106 = vmatprep.subr.bf16.mxu0 %v1433
    %2107 = vmatpush1.bf16.msra.mxu0 %v1432
    %2108 = vmatprep.subr.bf16.mxu0 %v1429
    %2109 = vmatpush1.bf16.msra.mxu0 %v1428
    %2110 = vmatprep.subr.bf16.mxu0 %v1425
    %2111 = vmatpush1.bf16.msra.mxu0 %v1424
    %2112 = vmatprep.subr.bf16.mxu0 %v1421
    %2113 = vmatpush1.bf16.msra.mxu0 %v1420
    %2114 = vmatprep.subr.bf16.mxu0 %v1417
    %2115 = vmatpush1.bf16.msra.mxu0 %v1416
    %2116 = vmatprep.subr.bf16.mxu0 %v1413
    %2117 = vmatpush1.bf16.msra.mxu0 %v1412
    %2118 = vmatprep.subr.bf16.mxu0 %v1409
    %2119 = vmatpush1.bf16.msra.mxu0 %v1408
    %2120 = vmatprep.subr.bf16.mxu0 %v1405
    %2121 = vmatpush1.bf16.msra.mxu0 %v1404
    %2122 = vmatprep.subr.bf16.mxu0 0
    %2123 = vmatpush2.bf16.msra.mxu0 0
    %2124 = vmatprep.subr.bf16.mxu0 0
    %2125 = vmatpush2.bf16.msra.mxu0 0
    %2126 = vmatprep.subr.bf16.mxu0 0
    %2127 = vmatpush2.bf16.msra.mxu0 0
    %2128 = vmatprep.subr.bf16.mxu0 0
    %2129 = vmatpush2.bf16.msra.mxu0 0
    %2130 = vmatprep.subr.bf16.mxu0 0
    %2131 = vmatpush2.bf16.msra.mxu0 0
    %2132 = vmatprep.subr.bf16.mxu0 0
    %2133 = vmatpush2.bf16.msra.mxu0 0
    %2134 = vmatprep.subr.bf16.mxu0 0
    %2135 = vmatpush2.bf16.msra.mxu0 0
    %2136 = vmatprep.subr.bf16.mxu0 0
    %2137 = vmatpush2.bf16.msra.mxu0 0
    %2138 = vmatprep.mubr.bf16.mxu0 0
    %2139 = vmatmul.mubr.bf16.gmra.mxu0 %v2022
    %v2140 = vpop.f32.mrf.mxu0
    %v2141 = vadd.f32 %v2059, %v2140
    %v2142 = vpop.f32.mrf.mxu0
    %v2143 = vadd.f32 %v2061, %v2142
    %v2144 = vpop.f32.mrf.mxu0
    %v2145 = vpop.f32.mrf.mxu0
    %2146 = vdwg.mxu0
    %2147 = vmatprep.subr.bf16.mxu0 %v1435
    %2148 = vmatpush1.bf16.msra.mxu0 %v1434
    %2149 = vmatprep.subr.bf16.mxu0 %v1431
    %2150 = vmatpush1.bf16.msra.mxu0 %v1430
    %2151 = vmatprep.subr.bf16.mxu0 %v1427
    %2152 = vmatpush1.bf16.msra.mxu0 %v1426
    %2153 = vmatprep.subr.bf16.mxu0 %v1423
    %2154 = vmatpush1.bf16.msra.mxu0 %v1422
    %2155 = vmatprep.subr.bf16.mxu0 %v1419
    %2156 = vmatpush1.bf16.msra.mxu0 %v1418
    %2157 = vmatprep.subr.bf16.mxu0 %v1415
    %2158 = vmatpush1.bf16.msra.mxu0 %v1414
    %2159 = vmatprep.subr.bf16.mxu0 %v1411
    %2160 = vmatpush1.bf16.msra.mxu0 %v1410
    %2161 = vmatprep.subr.bf16.mxu0 %v1407
    %2162 = vmatpush1.bf16.msra.mxu0 %v1406
    %2163 = vmatprep.subr.bf16.mxu0 0
    %2164 = vmatpush2.bf16.msra.mxu0 0
    %2165 = vmatprep.subr.bf16.mxu0 0
    %2166 = vmatpush2.bf16.msra.mxu0 0
    %2167 = vmatprep.subr.bf16.mxu0 0
    %2168 = vmatpush2.bf16.msra.mxu0 0
    %2169 = vmatprep.subr.bf16.mxu0 0
    %2170 = vmatpush2.bf16.msra.mxu0 0
    %2171 = vmatprep.subr.bf16.mxu0 0
    %2172 = vmatpush2.bf16.msra.mxu0 0
    %2173 = vmatprep.subr.bf16.mxu0 0
    %2174 = vmatpush2.bf16.msra.mxu0 0
    %2175 = vmatprep.subr.bf16.mxu0 0
    %2176 = vmatpush2.bf16.msra.mxu0 0
    %2177 = vmatprep.subr.bf16.mxu0 0
    %2178 = vmatpush2.bf16.msra.mxu0 0
    %2179 = vmatprep.mubr.bf16.mxu0 0
    %2180 = vmatmul.mubr.bf16.gmra.mxu0 %v2022
    %v2181 = vpop.f32.mrf.mxu0
    %v2182 = vadd.f32 %v2100, %v2181
    %v2183 = vpop.f32.mrf.mxu0
    %v2184 = vadd.f32 %v2102, %v2183
    %v2185 = vpop.f32.mrf.mxu0
    %v2186 = vpop.f32.mrf.mxu0
    %2187 = vdwg.mxu0
    %v2188 = vadd.f32 %v2141, %v749
    %v2189 = vadd.f32 %v2143, %v753
    %v2190 = vadd.f32 %v2182, %v757
    %v2191 = vadd.f32 %v2184, %v761
    %v2192 = vmul.f32 %v2188, 0.5
    %v2193 = vtanh.pop %v2192
    %v2194 = vmul.f32 %v2193, 0.5
    %v2195 = vadd.f32 %v2194, 0.5
    %v2196 = vmul.f32 %v2189, 0.5
    %v2197 = vtanh.pop %v2196
    %v2198 = vmul.f32 %v2197, 0.5
    %v2199 = vadd.f32 %v2198, 0.5
    %v2200 = vtanh.pop %v2190
    %v2201 = vmul.f32 %v2191, 0.5
    %v2202 = vtanh.pop %v2201
    %v2203 = vmul.f32 %v2202, 0.5
    %v2204 = vadd.f32 %v2203, 0.5
    %v2205 = vmul.f32 %v2199, %v1888
    %v2206 = vmul.f32 %v2195, %v2200
    %v2207 = vadd.f32 %v2205, %v2206
    %v2208 = vtanh.pop %v2207
    %v2209 = vmul.f32 %v2204, %v2208
    %v2210 = vld [vmem:[%s594] sm:$0xff]
    %2211 = vmatprep.subr.bf16.mxu0 %v899
    %2212 = vmatpush1.bf16.msra.mxu0 %v898
    %2213 = vmatprep.subr.bf16.mxu0 %v895
    %2214 = vmatpush1.bf16.msra.mxu0 %v894
    %2215 = vmatprep.subr.bf16.mxu0 %v891
    %2216 = vmatpush1.bf16.msra.mxu0 %v890
    %2217 = vmatprep.subr.bf16.mxu0 %v887
    %2218 = vmatpush1.bf16.msra.mxu0 %v886
    %2219 = vmatprep.subr.bf16.mxu0 %v883
    %2220 = vmatpush1.bf16.msra.mxu0 %v882
    %2221 = vmatprep.subr.bf16.mxu0 %v879
    %2222 = vmatpush1.bf16.msra.mxu0 %v878
    %2223 = vmatprep.subr.bf16.mxu0 %v875
    %2224 = vmatpush1.bf16.msra.mxu0 %v874
    %2225 = vmatprep.subr.bf16.mxu0 %v871
    %2226 = vmatpush1.bf16.msra.mxu0 %v870
    %2227 = vmatprep.subr.bf16.mxu0 0
    %2228 = vmatpush2.bf16.msra.mxu0 0
    %2229 = vmatprep.subr.bf16.mxu0 0
    %2230 = vmatpush2.bf16.msra.mxu0 0
    %2231 = vmatprep.subr.bf16.mxu0 0
    %2232 = vmatpush2.bf16.msra.mxu0 0
    %2233 = vmatprep.subr.bf16.mxu0 0
    %2234 = vmatpush2.bf16.msra.mxu0 0
    %2235 = vmatprep.subr.bf16.mxu0 0
    %2236 = vmatpush2.bf16.msra.mxu0 0
    %2237 = vmatprep.subr.bf16.mxu0 0
    %2238 = vmatpush2.bf16.msra.mxu0 0
    %2239 = vmatprep.subr.bf16.mxu0 0
    %2240 = vmatpush2.bf16.msra.mxu0 0
    %2241 = vmatprep.subr.bf16.mxu0 0
    %2242 = vmatpush2.bf16.msra.mxu0 0
    %2243 = vmatprep.mubr.bf16.mxu0 0
    %2244 = vmatmul.mubr.bf16.gmra.mxu0 %v2022
    %v2245 = vpop.f32.mrf.mxu0
    %v2246 = vadd.f32 0.0, %v2245
    %v2247 = vpop.f32.mrf.mxu0
    %v2248 = vadd.f32 0.0, %v2247
    %v2249 = vpop.f32.mrf.mxu0
    %v2250 = vpop.f32.mrf.mxu0
    %2251 = vdwg.mxu0
    %2252 = vmatprep.subr.bf16.mxu0 %v901
    %2253 = vmatpush1.bf16.msra.mxu0 %v900
    %2254 = vmatprep.subr.bf16.mxu0 %v897
    %2255 = vmatpush1.bf16.msra.mxu0 %v896
    %2256 = vmatprep.subr.bf16.mxu0 %v893
    %2257 = vmatpush1.bf16.msra.mxu0 %v892
    %2258 = vmatprep.subr.bf16.mxu0 %v889
    %2259 = vmatpush1.bf16.msra.mxu0 %v888
    %2260 = vmatprep.subr.bf16.mxu0 %v885
    %2261 = vmatpush1.bf16.msra.mxu0 %v884
    %2262 = vmatprep.subr.bf16.mxu0 %v881
    %2263 = vmatpush1.bf16.msra.mxu0 %v880
    %2264 = vmatprep.subr.bf16.mxu0 %v877
    %2265 = vmatpush1.bf16.msra.mxu0 %v876
    %2266 = vmatprep.subr.bf16.mxu0 %v873
    %2267 = vmatpush1.bf16.msra.mxu0 %v872
    %2268 = vmatprep.subr.bf16.mxu0 0
    %2269 = vmatpush2.bf16.msra.mxu0 0
    %2270 = vmatprep.subr.bf16.mxu0 0
    %2271 = vmatpush2.bf16.msra.mxu0 0
    %2272 = vmatprep.subr.bf16.mxu0 0
    %2273 = vmatpush2.bf16.msra.mxu0 0
    %2274 = vmatprep.subr.bf16.mxu0 0
    %2275 = vmatpush2.bf16.msra.mxu0 0
    %2276 = vmatprep.subr.bf16.mxu0 0
    %2277 = vmatpush2.bf16.msra.mxu0 0
    %2278 = vmatprep.subr.bf16.mxu0 0
    %2279 = vmatpush2.bf16.msra.mxu0 0
    %2280 = vmatprep.subr.bf16.mxu0 0
    %2281 = vmatpush2.bf16.msra.mxu0 0
    %2282 = vmatprep.subr.bf16.mxu0 0
    %2283 = vmatpush2.bf16.msra.mxu0 0
    %2284 = vmatprep.mubr.bf16.mxu0 0
    %2285 = vmatmul.mubr.bf16.gmra.mxu0 %v2022
    %v2286 = vpop.f32.mrf.mxu0
    %v2287 = vadd.f32 0.0, %v2286
    %v2288 = vpop.f32.mrf.mxu0
    %v2289 = vadd.f32 0.0, %v2288
    %v2290 = vpop.f32.mrf.mxu0
    %v2291 = vpop.f32.mrf.mxu0
    %2292 = vdwg.mxu0
    %v2297 = vcombine.low %v2246, %v2248
    %v2298 = vcombine.low %v2287, %v2289
    %v2300 = vunpack.c.l.s4 1983009808
    %v2301 = vunpack.c.0.s8 %v2300
    %v2302 = vlaneseq
    %v2303 = vshrl.u32 %v2302, 7
    %v2304 = vsub.s32 %v2301, %v2303
    %v2305 = vrot.slane %v2297, %v2304
    %v2307 = vunpack.c.l.s4 1983009808
    %v2308 = vunpack.c.0.s8 %v2307
    %v2309 = vlaneseq
    %v2310 = vshrl.u32 %v2309, 7
    %v2311 = vsub.s32 %v2308, %v2310
    %v2312 = vrot.slane %v2298, %v2311
    %v2313 = vcombine.low %v2305, %v2312
    %v2315 = vadd.f32 %v2210, %v2313
    %v2316 = vmul.f32 %v2315, 0.5
    %v2317 = vtanh.pop %v2316
    %v2318 = vmul.f32 %v2317, 0.5
    %v2319 = vadd.f32 %v2318, 0.5
    %v2321 = vrot.slane %v2315, 2
    %v2323 = vmul.f32 %v2321, 0.5
    %v2324 = vtanh.pop %v2323
    %v2325 = vmul.f32 %v2324, 0.5
    %v2326 = vadd.f32 %v2325, 0.5
    %v2327 = vrot.slane %v2315, 4
    %v2329 = vtanh.pop %v2327
    %v2330 = vrot.slane %v2315, 6
    %v2332 = vmul.f32 %v2330, 0.5
    %v2333 = vtanh.pop %v2332
    %v2334 = vmul.f32 %v2333, 0.5
    %v2335 = vadd.f32 %v2334, 0.5
    %v2336 = vmul.f32 %v2326, %v2019
    %v2337 = vmul.f32 %v2319, %v2329
    %v2338 = vadd.f32 %v2336, %v2337
    %v2339 = vtanh.pop %v2338
    %v2340 = vmul.f32 %v2335, %v2339
    %v2341 = vpack.c.bf16 %v2340, %v2340
    %v2342 = vpack.c.bf16 %v2209, %v2209
    %2343 = vmatprep.subr.bf16.mxu0 %v1191
    %2344 = vmatpush1.bf16.msra.mxu0 %v1190
    %2345 = vmatprep.subr.bf16.mxu0 %v1187
    %2346 = vmatpush1.bf16.msra.mxu0 %v1186
    %2347 = vmatprep.subr.bf16.mxu0 %v1183
    %2348 = vmatpush1.bf16.msra.mxu0 %v1182
    %2349 = vmatprep.subr.bf16.mxu0 %v1179
    %2350 = vmatpush1.bf16.msra.mxu0 %v1178
    %2351 = vmatprep.subr.bf16.mxu0 %v1175
    %2352 = vmatpush1.bf16.msra.mxu0 %v1174
    %2353 = vmatprep.subr.bf16.mxu0 %v1171
    %2354 = vmatpush1.bf16.msra.mxu0 %v1170
    %2355 = vmatprep.subr.bf16.mxu0 %v1167
    %2356 = vmatpush1.bf16.msra.mxu0 %v1166
    %2357 = vmatprep.subr.bf16.mxu0 %v1163
    %2358 = vmatpush1.bf16.msra.mxu0 %v1162
    %2359 = vmatprep.subr.bf16.mxu0 0
    %2360 = vmatpush2.bf16.msra.mxu0 0
    %2361 = vmatprep.subr.bf16.mxu0 0
    %2362 = vmatpush2.bf16.msra.mxu0 0
    %2363 = vmatprep.subr.bf16.mxu0 0
    %2364 = vmatpush2.bf16.msra.mxu0 0
    %2365 = vmatprep.subr.bf16.mxu0 0
    %2366 = vmatpush2.bf16.msra.mxu0 0
    %2367 = vmatprep.subr.bf16.mxu0 0
    %2368 = vmatpush2.bf16.msra.mxu0 0
    %2369 = vmatprep.subr.bf16.mxu0 0
    %2370 = vmatpush2.bf16.msra.mxu0 0
    %2371 = vmatprep.subr.bf16.mxu0 0
    %2372 = vmatpush2.bf16.msra.mxu0 0
    %2373 = vmatprep.subr.bf16.mxu0 0
    %2374 = vmatpush2.bf16.msra.mxu0 0
    %2375 = vmatprep.mubr.bf16.mxu0 0
    %2376 = vmatmul.mubr.bf16.gmra.mxu0 %v2342
    %v2377 = vpop.f32.mrf.mxu0
    %v2378 = vadd.f32 0.0, %v2377
    %v2379 = vpop.f32.mrf.mxu0
    %v2380 = vadd.f32 0.0, %v2379
    %v2381 = vpop.f32.mrf.mxu0
    %v2382 = vpop.f32.mrf.mxu0
    %2383 = vdwg.mxu0
    %2384 = vmatprep.subr.bf16.mxu0 %v1193
    %2385 = vmatpush1.bf16.msra.mxu0 %v1192
    %2386 = vmatprep.subr.bf16.mxu0 %v1189
    %2387 = vmatpush1.bf16.msra.mxu0 %v1188
    %2388 = vmatprep.subr.bf16.mxu0 %v1185
    %2389 = vmatpush1.bf16.msra.mxu0 %v1184
    %2390 = vmatprep.subr.bf16.mxu0 %v1181
    %2391 = vmatpush1.bf16.msra.mxu0 %v1180
    %2392 = vmatprep.subr.bf16.mxu0 %v1177
    %2393 = vmatpush1.bf16.msra.mxu0 %v1176
    %2394 = vmatprep.subr.bf16.mxu0 %v1173
    %2395 = vmatpush1.bf16.msra.mxu0 %v1172
    %2396 = vmatprep.subr.bf16.mxu0 %v1169
    %2397 = vmatpush1.bf16.msra.mxu0 %v1168
    %2398 = vmatprep.subr.bf16.mxu0 %v1165
    %2399 = vmatpush1.bf16.msra.mxu0 %v1164
    %2400 = vmatprep.subr.bf16.mxu0 0
    %2401 = vmatpush2.bf16.msra.mxu0 0
    %2402 = vmatprep.subr.bf16.mxu0 0
    %2403 = vmatpush2.bf16.msra.mxu0 0
    %2404 = vmatprep.subr.bf16.mxu0 0
    %2405 = vmatpush2.bf16.msra.mxu0 0
    %2406 = vmatprep.subr.bf16.mxu0 0
    %2407 = vmatpush2.bf16.msra.mxu0 0
    %2408 = vmatprep.subr.bf16.mxu0 0
    %2409 = vmatpush2.bf16.msra.mxu0 0
    %2410 = vmatprep.subr.bf16.mxu0 0
    %2411 = vmatpush2.bf16.msra.mxu0 0
    %2412 = vmatprep.subr.bf16.mxu0 0
    %2413 = vmatpush2.bf16.msra.mxu0 0
    %2414 = vmatprep.subr.bf16.mxu0 0
    %2415 = vmatpush2.bf16.msra.mxu0 0
    %2416 = vmatprep.mubr.bf16.mxu0 0
    %2417 = vmatmul.mubr.bf16.gmra.mxu0 %v2342
    %v2418 = vpop.f32.mrf.mxu0
    %v2419 = vadd.f32 0.0, %v2418
    %v2420 = vpop.f32.mrf.mxu0
    %v2421 = vadd.f32 0.0, %v2420
    %v2422 = vpop.f32.mrf.mxu0
    %v2423 = vpop.f32.mrf.mxu0
    %2424 = vdwg.mxu0
    %2425 = vmatprep.subr.bf16.mxu0 %v1433
    %2426 = vmatpush1.bf16.msra.mxu0 %v1432
    %2427 = vmatprep.subr.bf16.mxu0 %v1429
    %2428 = vmatpush1.bf16.msra.mxu0 %v1428
    %2429 = vmatprep.subr.bf16.mxu0 %v1425
    %2430 = vmatpush1.bf16.msra.mxu0 %v1424
    %2431 = vmatprep.subr.bf16.mxu0 %v1421
    %2432 = vmatpush1.bf16.msra.mxu0 %v1420
    %2433 = vmatprep.subr.bf16.mxu0 %v1417
    %2434 = vmatpush1.bf16.msra.mxu0 %v1416
    %2435 = vmatprep.subr.bf16.mxu0 %v1413
    %2436 = vmatpush1.bf16.msra.mxu0 %v1412
    %2437 = vmatprep.subr.bf16.mxu0 %v1409
    %2438 = vmatpush1.bf16.msra.mxu0 %v1408
    %2439 = vmatprep.subr.bf16.mxu0 %v1405
    %2440 = vmatpush1.bf16.msra.mxu0 %v1404
    %2441 = vmatprep.subr.bf16.mxu0 0
    %2442 = vmatpush2.bf16.msra.mxu0 0
    %2443 = vmatprep.subr.bf16.mxu0 0
    %2444 = vmatpush2.bf16.msra.mxu0 0
    %2445 = vmatprep.subr.bf16.mxu0 0
    %2446 = vmatpush2.bf16.msra.mxu0 0
    %2447 = vmatprep.subr.bf16.mxu0 0
    %2448 = vmatpush2.bf16.msra.mxu0 0
    %2449 = vmatprep.subr.bf16.mxu0 0
    %2450 = vmatpush2.bf16.msra.mxu0 0
    %2451 = vmatprep.subr.bf16.mxu0 0
    %2452 = vmatpush2.bf16.msra.mxu0 0
    %2453 = vmatprep.subr.bf16.mxu0 0
    %2454 = vmatpush2.bf16.msra.mxu0 0
    %2455 = vmatprep.subr.bf16.mxu0 0
    %2456 = vmatpush2.bf16.msra.mxu0 0
    %2457 = vmatprep.mubr.bf16.mxu0 0
    %2458 = vmatmul.mubr.bf16.gmra.mxu0 %v2341
    %v2459 = vpop.f32.mrf.mxu0
    %v2460 = vadd.f32 %v2378, %v2459
    %v2461 = vpop.f32.mrf.mxu0
    %v2462 = vadd.f32 %v2380, %v2461
    %v2463 = vpop.f32.mrf.mxu0
    %v2464 = vpop.f32.mrf.mxu0
    %2465 = vdwg.mxu0
    %2466 = vmatprep.subr.bf16.mxu0 %v1435
    %2467 = vmatpush1.bf16.msra.mxu0 %v1434
    %2468 = vmatprep.subr.bf16.mxu0 %v1431
    %2469 = vmatpush1.bf16.msra.mxu0 %v1430
    %2470 = vmatprep.subr.bf16.mxu0 %v1427
    %2471 = vmatpush1.bf16.msra.mxu0 %v1426
    %2472 = vmatprep.subr.bf16.mxu0 %v1423
    %2473 = vmatpush1.bf16.msra.mxu0 %v1422
    %2474 = vmatprep.subr.bf16.mxu0 %v1419
    %2475 = vmatpush1.bf16.msra.mxu0 %v1418
    %2476 = vmatprep.subr.bf16.mxu0 %v1415
    %2477 = vmatpush1.bf16.msra.mxu0 %v1414
    %2478 = vmatprep.subr.bf16.mxu0 %v1411
    %2479 = vmatpush1.bf16.msra.mxu0 %v1410
    %2480 = vmatprep.subr.bf16.mxu0 %v1407
    %2481 = vmatpush1.bf16.msra.mxu0 %v1406
    %2482 = vmatprep.subr.bf16.mxu0 0
    %2483 = vmatpush2.bf16.msra.mxu0 0
    %2484 = vmatprep.subr.bf16.mxu0 0
    %2485 = vmatpush2.bf16.msra.mxu0 0
    %2486 = vmatprep.subr.bf16.mxu0 0
    %2487 = vmatpush2.bf16.msra.mxu0 0
    %2488 = vmatprep.subr.bf16.mxu0 0
    %2489 = vmatpush2.bf16.msra.mxu0 0
    %2490 = vmatprep.subr.bf16.mxu0 0
    %2491 = vmatpush2.bf16.msra.mxu0 0
    %2492 = vmatprep.subr.bf16.mxu0 0
    %2493 = vmatpush2.bf16.msra.mxu0 0
    %2494 = vmatprep.subr.bf16.mxu0 0
    %2495 = vmatpush2.bf16.msra.mxu0 0
    %2496 = vmatprep.subr.bf16.mxu0 0
    %2497 = vmatpush2.bf16.msra.mxu0 0
    %2498 = vmatprep.mubr.bf16.mxu0 0
    %2499 = vmatmul.mubr.bf16.gmra.mxu0 %v2341
    %v2500 = vpop.f32.mrf.mxu0
    %v2501 = vadd.f32 %v2419, %v2500
    %v2502 = vpop.f32.mrf.mxu0
    %v2503 = vadd.f32 %v2421, %v2502
    %v2504 = vpop.f32.mrf.mxu0
    %v2505 = vpop.f32.mrf.mxu0
    %2506 = vdwg.mxu0
    %v2507 = vadd.f32 %v2460, %v749
    %v2508 = vadd.f32 %v2462, %v753
    %v2509 = vadd.f32 %v2501, %v757
    %v2510 = vadd.f32 %v2503, %v761
    %v2511 = vmul.f32 %v2507, 0.5
    %v2512 = vtanh.pop %v2511
    %v2513 = vmul.f32 %v2512, 0.5
    %v2514 = vadd.f32 %v2513, 0.5
    %v2515 = vmul.f32 %v2508, 0.5
    %v2516 = vtanh.pop %v2515
    %v2517 = vmul.f32 %v2516, 0.5
    %v2518 = vadd.f32 %v2517, 0.5
    %v2519 = vtanh.pop %v2509
    %v2520 = vmul.f32 %v2510, 0.5
    %v2521 = vtanh.pop %v2520
    %v2522 = vmul.f32 %v2521, 0.5
    %v2523 = vadd.f32 %v2522, 0.5
    %v2524 = vmul.f32 %v2518, %v2207
    %v2525 = vmul.f32 %v2514, %v2519
    %v2526 = vadd.f32 %v2524, %v2525
    %v2527 = vtanh.pop %v2526
    %v2528 = vmul.f32 %v2523, %v2527
    %v2529 = vld [vmem:[%s618] sm:$0xff]
    %2530 = vmatprep.subr.bf16.mxu0 %v899
    %2531 = vmatpush1.bf16.msra.mxu0 %v898
    %2532 = vmatprep.subr.bf16.mxu0 %v895
    %2533 = vmatpush1.bf16.msra.mxu0 %v894
    %2534 = vmatprep.subr.bf16.mxu0 %v891
    %2535 = vmatpush1.bf16.msra.mxu0 %v890
    %2536 = vmatprep.subr.bf16.mxu0 %v887
    %2537 = vmatpush1.bf16.msra.mxu0 %v886
    %2538 = vmatprep.subr.bf16.mxu0 %v883
    %2539 = vmatpush1.bf16.msra.mxu0 %v882
    %2540 = vmatprep.subr.bf16.mxu0 %v879
    %2541 = vmatpush1.bf16.msra.mxu0 %v878
    %2542 = vmatprep.subr.bf16.mxu0 %v875
    %2543 = vmatpush1.bf16.msra.mxu0 %v874
    %2544 = vmatprep.subr.bf16.mxu0 %v871
    %2545 = vmatpush1.bf16.msra.mxu0 %v870
    %2546 = vmatprep.subr.bf16.mxu0 0
    %2547 = vmatpush2.bf16.msra.mxu0 0
    %2548 = vmatprep.subr.bf16.mxu0 0
    %2549 = vmatpush2.bf16.msra.mxu0 0
    %2550 = vmatprep.subr.bf16.mxu0 0
    %2551 = vmatpush2.bf16.msra.mxu0 0
    %2552 = vmatprep.subr.bf16.mxu0 0
    %2553 = vmatpush2.bf16.msra.mxu0 0
    %2554 = vmatprep.subr.bf16.mxu0 0
    %2555 = vmatpush2.bf16.msra.mxu0 0
    %2556 = vmatprep.subr.bf16.mxu0 0
    %2557 = vmatpush2.bf16.msra.mxu0 0
    %2558 = vmatprep.subr.bf16.mxu0 0
    %2559 = vmatpush2.bf16.msra.mxu0 0
    %2560 = vmatprep.subr.bf16.mxu0 0
    %2561 = vmatpush2.bf16.msra.mxu0 0
    %2562 = vmatprep.mubr.bf16.mxu0 0
    %2563 = vmatmul.mubr.bf16.gmra.mxu0 %v2341
    %v2564 = vpop.f32.mrf.mxu0
    %v2565 = vadd.f32 0.0, %v2564
    %v2566 = vpop.f32.mrf.mxu0
    %v2567 = vadd.f32 0.0, %v2566
    %v2568 = vpop.f32.mrf.mxu0
    %v2569 = vpop.f32.mrf.mxu0
    %2570 = vdwg.mxu0
    %2571 = vmatprep.subr.bf16.mxu0 %v901
    %2572 = vmatpush1.bf16.msra.mxu0 %v900
    %2573 = vmatprep.subr.bf16.mxu0 %v897
    %2574 = vmatpush1.bf16.msra.mxu0 %v896
    %2575 = vmatprep.subr.bf16.mxu0 %v893
    %2576 = vmatpush1.bf16.msra.mxu0 %v892
    %2577 = vmatprep.subr.bf16.mxu0 %v889
    %2578 = vmatpush1.bf16.msra.mxu0 %v888
    %2579 = vmatprep.subr.bf16.mxu0 %v885
    %2580 = vmatpush1.bf16.msra.mxu0 %v884
    %2581 = vmatprep.subr.bf16.mxu0 %v881
    %2582 = vmatpush1.bf16.msra.mxu0 %v880
    %2583 = vmatprep.subr.bf16.mxu0 %v877
    %2584 = vmatpush1.bf16.msra.mxu0 %v876
    %2585 = vmatprep.subr.bf16.mxu0 %v873
    %2586 = vmatpush1.bf16.msra.mxu0 %v872
    %2587 = vmatprep.subr.bf16.mxu0 0
    %2588 = vmatpush2.bf16.msra.mxu0 0
    %2589 = vmatprep.subr.bf16.mxu0 0
    %2590 = vmatpush2.bf16.msra.mxu0 0
    %2591 = vmatprep.subr.bf16.mxu0 0
    %2592 = vmatpush2.bf16.msra.mxu0 0
    %2593 = vmatprep.subr.bf16.mxu0 0
    %2594 = vmatpush2.bf16.msra.mxu0 0
    %2595 = vmatprep.subr.bf16.mxu0 0
    %2596 = vmatpush2.bf16.msra.mxu0 0
    %2597 = vmatprep.subr.bf16.mxu0 0
    %2598 = vmatpush2.bf16.msra.mxu0 0
    %2599 = vmatprep.subr.bf16.mxu0 0
    %2600 = vmatpush2.bf16.msra.mxu0 0
    %2601 = vmatprep.subr.bf16.mxu0 0
    %2602 = vmatpush2.bf16.msra.mxu0 0
    %2603 = vmatprep.mubr.bf16.mxu0 0
    %2604 = vmatmul.mubr.bf16.gmra.mxu0 %v2341
    %v2605 = vpop.f32.mrf.mxu0
    %v2606 = vadd.f32 0.0, %v2605
    %v2607 = vpop.f32.mrf.mxu0
    %v2608 = vadd.f32 0.0, %v2607
    %v2609 = vpop.f32.mrf.mxu0
    %v2610 = vpop.f32.mrf.mxu0
    %2611 = vdwg.mxu0
    %v2616 = vcombine.low %v2565, %v2567
    %v2617 = vcombine.low %v2606, %v2608
    %v2619 = vunpack.c.l.s4 1983009808
    %v2620 = vunpack.c.0.s8 %v2619
    %v2621 = vlaneseq
    %v2622 = vshrl.u32 %v2621, 7
    %v2623 = vsub.s32 %v2620, %v2622
    %v2624 = vrot.slane %v2616, %v2623
    %v2626 = vunpack.c.l.s4 1983009808
    %v2627 = vunpack.c.0.s8 %v2626
    %v2628 = vlaneseq
    %v2629 = vshrl.u32 %v2628, 7
    %v2630 = vsub.s32 %v2627, %v2629
    %v2631 = vrot.slane %v2617, %v2630
    %v2632 = vcombine.low %v2624, %v2631
    %v2634 = vadd.f32 %v2529, %v2632
    %v2635 = vmul.f32 %v2634, 0.5
    %v2636 = vtanh.pop %v2635
    %v2637 = vmul.f32 %v2636, 0.5
    %v2638 = vadd.f32 %v2637, 0.5
    %v2640 = vrot.slane %v2634, 2
    %v2642 = vmul.f32 %v2640, 0.5
    %v2643 = vtanh.pop %v2642
    %v2644 = vmul.f32 %v2643, 0.5
    %v2645 = vadd.f32 %v2644, 0.5
    %v2646 = vrot.slane %v2634, 4
    %v2648 = vtanh.pop %v2646
    %v2649 = vrot.slane %v2634, 6
    %v2651 = vmul.f32 %v2649, 0.5
    %v2652 = vtanh.pop %v2651
    %v2653 = vmul.f32 %v2652, 0.5
    %v2654 = vadd.f32 %v2653, 0.5
    %v2655 = vmul.f32 %v2645, %v2338
    %v2656 = vmul.f32 %v2638, %v2648
    %v2657 = vadd.f32 %v2655, %v2656
    %v2658 = vtanh.pop %v2657
    %v2659 = vmul.f32 %v2654, %v2658
    %v2660 = vpack.c.bf16 %v2659, %v2659
    %v2661 = vpack.c.bf16 %v2528, %v2528
    %2662 = vmatprep.subr.bf16.mxu0 %v1191
    %2663 = vmatpush1.bf16.msra.mxu0 %v1190
    %2664 = vmatprep.subr.bf16.mxu0 %v1187
    %2665 = vmatpush1.bf16.msra.mxu0 %v1186
    %2666 = vmatprep.subr.bf16.mxu0 %v1183
    %2667 = vmatpush1.bf16.msra.mxu0 %v1182
    %2668 = vmatprep.subr.bf16.mxu0 %v1179
    %2669 = vmatpush1.bf16.msra.mxu0 %v1178
    %2670 = vmatprep.subr.bf16.mxu0 %v1175
    %2671 = vmatpush1.bf16.msra.mxu0 %v1174
    %2672 = vmatprep.subr.bf16.mxu0 %v1171
    %2673 = vmatpush1.bf16.msra.mxu0 %v1170
    %2674 = vmatprep.subr.bf16.mxu0 %v1167
    %2675 = vmatpush1.bf16.msra.mxu0 %v1166
    %2676 = vmatprep.subr.bf16.mxu0 %v1163
    %2677 = vmatpush1.bf16.msra.mxu0 %v1162
    %2678 = vmatprep.subr.bf16.mxu0 0
    %2679 = vmatpush2.bf16.msra.mxu0 0
    %2680 = vmatprep.subr.bf16.mxu0 0
    %2681 = vmatpush2.bf16.msra.mxu0 0
    %2682 = vmatprep.subr.bf16.mxu0 0
    %2683 = vmatpush2.bf16.msra.mxu0 0
    %2684 = vmatprep.subr.bf16.mxu0 0
    %2685 = vmatpush2.bf16.msra.mxu0 0
    %2686 = vmatprep.subr.bf16.mxu0 0
    %2687 = vmatpush2.bf16.msra.mxu0 0
    %2688 = vmatprep.subr.bf16.mxu0 0
    %2689 = vmatpush2.bf16.msra.mxu0 0
    %2690 = vmatprep.subr.bf16.mxu0 0
    %2691 = vmatpush2.bf16.msra.mxu0 0
    %2692 = vmatprep.subr.bf16.mxu0 0
    %2693 = vmatpush2.bf16.msra.mxu0 0
    %2694 = vmatprep.mubr.bf16.mxu0 0
    %2695 = vmatmul.mubr.bf16.gmra.mxu0 %v2661
    %v2696 = vpop.f32.mrf.mxu0
    %v2697 = vadd.f32 0.0, %v2696
    %v2698 = vpop.f32.mrf.mxu0
    %v2699 = vadd.f32 0.0, %v2698
    %v2700 = vpop.f32.mrf.mxu0
    %v2701 = vpop.f32.mrf.mxu0
    %2702 = vdwg.mxu0
    %2703 = vmatprep.subr.bf16.mxu0 %v1193
    %2704 = vmatpush1.bf16.msra.mxu0 %v1192
    %2705 = vmatprep.subr.bf16.mxu0 %v1189
    %2706 = vmatpush1.bf16.msra.mxu0 %v1188
    %2707 = vmatprep.subr.bf16.mxu0 %v1185
    %2708 = vmatpush1.bf16.msra.mxu0 %v1184
    %2709 = vmatprep.subr.bf16.mxu0 %v1181
    %2710 = vmatpush1.bf16.msra.mxu0 %v1180
    %2711 = vmatprep.subr.bf16.mxu0 %v1177
    %2712 = vmatpush1.bf16.msra.mxu0 %v1176
    %2713 = vmatprep.subr.bf16.mxu0 %v1173
    %2714 = vmatpush1.bf16.msra.mxu0 %v1172
    %2715 = vmatprep.subr.bf16.mxu0 %v1169
    %2716 = vmatpush1.bf16.msra.mxu0 %v1168
    %2717 = vmatprep.subr.bf16.mxu0 %v1165
    %2718 = vmatpush1.bf16.msra.mxu0 %v1164
    %2719 = vmatprep.subr.bf16.mxu0 0
    %2720 = vmatpush2.bf16.msra.mxu0 0
    %2721 = vmatprep.subr.bf16.mxu0 0
    %2722 = vmatpush2.bf16.msra.mxu0 0
    %2723 = vmatprep.subr.bf16.mxu0 0
    %2724 = vmatpush2.bf16.msra.mxu0 0
    %2725 = vmatprep.subr.bf16.mxu0 0
    %2726 = vmatpush2.bf16.msra.mxu0 0
    %2727 = vmatprep.subr.bf16.mxu0 0
    %2728 = vmatpush2.bf16.msra.mxu0 0
    %2729 = vmatprep.subr.bf16.mxu0 0
    %2730 = vmatpush2.bf16.msra.mxu0 0
    %2731 = vmatprep.subr.bf16.mxu0 0
    %2732 = vmatpush2.bf16.msra.mxu0 0
    %2733 = vmatprep.subr.bf16.mxu0 0
    %2734 = vmatpush2.bf16.msra.mxu0 0
    %2735 = vmatprep.mubr.bf16.mxu0 0
    %2736 = vmatmul.mubr.bf16.gmra.mxu0 %v2661
    %v2737 = vpop.f32.mrf.mxu0
    %v2738 = vadd.f32 0.0, %v2737
    %v2739 = vpop.f32.mrf.mxu0
    %v2740 = vadd.f32 0.0, %v2739
    %v2741 = vpop.f32.mrf.mxu0
    %v2742 = vpop.f32.mrf.mxu0
    %2743 = vdwg.mxu0
    %2744 = vmatprep.subr.bf16.mxu0 %v1433
    %2745 = vmatpush1.bf16.msra.mxu0 %v1432
    %2746 = vmatprep.subr.bf16.mxu0 %v1429
    %2747 = vmatpush1.bf16.msra.mxu0 %v1428
    %2748 = vmatprep.subr.bf16.mxu0 %v1425
    %2749 = vmatpush1.bf16.msra.mxu0 %v1424
    %2750 = vmatprep.subr.bf16.mxu0 %v1421
    %2751 = vmatpush1.bf16.msra.mxu0 %v1420
    %2752 = vmatprep.subr.bf16.mxu0 %v1417
    %2753 = vmatpush1.bf16.msra.mxu0 %v1416
    %2754 = vmatprep.subr.bf16.mxu0 %v1413
    %2755 = vmatpush1.bf16.msra.mxu0 %v1412
    %2756 = vmatprep.subr.bf16.mxu0 %v1409
    %2757 = vmatpush1.bf16.msra.mxu0 %v1408
    %2758 = vmatprep.subr.bf16.mxu0 %v1405
    %2759 = vmatpush1.bf16.msra.mxu0 %v1404
    %2760 = vmatprep.subr.bf16.mxu0 0
    %2761 = vmatpush2.bf16.msra.mxu0 0
    %2762 = vmatprep.subr.bf16.mxu0 0
    %2763 = vmatpush2.bf16.msra.mxu0 0
    %2764 = vmatprep.subr.bf16.mxu0 0
    %2765 = vmatpush2.bf16.msra.mxu0 0
    %2766 = vmatprep.subr.bf16.mxu0 0
    %2767 = vmatpush2.bf16.msra.mxu0 0
    %2768 = vmatprep.subr.bf16.mxu0 0
    %2769 = vmatpush2.bf16.msra.mxu0 0
    %2770 = vmatprep.subr.bf16.mxu0 0
    %2771 = vmatpush2.bf16.msra.mxu0 0
    %2772 = vmatprep.subr.bf16.mxu0 0
    %2773 = vmatpush2.bf16.msra.mxu0 0
    %2774 = vmatprep.subr.bf16.mxu0 0
    %2775 = vmatpush2.bf16.msra.mxu0 0
    %2776 = vmatprep.mubr.bf16.mxu0 0
    %2777 = vmatmul.mubr.bf16.gmra.mxu0 %v2660
    %v2778 = vpop.f32.mrf.mxu0
    %v2779 = vadd.f32 %v2697, %v2778
    %v2780 = vpop.f32.mrf.mxu0
    %v2781 = vadd.f32 %v2699, %v2780
    %v2782 = vpop.f32.mrf.mxu0
    %v2783 = vpop.f32.mrf.mxu0
    %2784 = vdwg.mxu0
    %2785 = vmatprep.subr.bf16.mxu0 %v1435
    %2786 = vmatpush1.bf16.msra.mxu0 %v1434
    %2787 = vmatprep.subr.bf16.mxu0 %v1431
    %2788 = vmatpush1.bf16.msra.mxu0 %v1430
    %2789 = vmatprep.subr.bf16.mxu0 %v1427
    %2790 = vmatpush1.bf16.msra.mxu0 %v1426
    %2791 = vmatprep.subr.bf16.mxu0 %v1423
    %2792 = vmatpush1.bf16.msra.mxu0 %v1422
    %2793 = vmatprep.subr.bf16.mxu0 %v1419
    %2794 = vmatpush1.bf16.msra.mxu0 %v1418
    %2795 = vmatprep.subr.bf16.mxu0 %v1415
    %2796 = vmatpush1.bf16.msra.mxu0 %v1414
    %2797 = vmatprep.subr.bf16.mxu0 %v1411
    %2798 = vmatpush1.bf16.msra.mxu0 %v1410
    %2799 = vmatprep.subr.bf16.mxu0 %v1407
    %2800 = vmatpush1.bf16.msra.mxu0 %v1406
    %2801 = vmatprep.subr.bf16.mxu0 0
    %2802 = vmatpush2.bf16.msra.mxu0 0
    %2803 = vmatprep.subr.bf16.mxu0 0
    %2804 = vmatpush2.bf16.msra.mxu0 0
    %2805 = vmatprep.subr.bf16.mxu0 0
    %2806 = vmatpush2.bf16.msra.mxu0 0
    %2807 = vmatprep.subr.bf16.mxu0 0
    %2808 = vmatpush2.bf16.msra.mxu0 0
    %2809 = vmatprep.subr.bf16.mxu0 0
    %2810 = vmatpush2.bf16.msra.mxu0 0
    %2811 = vmatprep.subr.bf16.mxu0 0
    %2812 = vmatpush2.bf16.msra.mxu0 0
    %2813 = vmatprep.subr.bf16.mxu0 0
    %2814 = vmatpush2.bf16.msra.mxu0 0
    %2815 = vmatprep.subr.bf16.mxu0 0
    %2816 = vmatpush2.bf16.msra.mxu0 0
    %2817 = vmatprep.mubr.bf16.mxu0 0
    %2818 = vmatmul.mubr.bf16.gmra.mxu0 %v2660
    %v2819 = vpop.f32.mrf.mxu0
    %v2820 = vadd.f32 %v2738, %v2819
    %v2821 = vpop.f32.mrf.mxu0
    %v2822 = vadd.f32 %v2740, %v2821
    %v2823 = vpop.f32.mrf.mxu0
    %v2824 = vpop.f32.mrf.mxu0
    %2825 = vdwg.mxu0
    %v2826 = vadd.f32 %v2779, %v749
    %v2827 = vadd.f32 %v2781, %v753
    %v2828 = vadd.f32 %v2820, %v757
    %v2829 = vadd.f32 %v2822, %v761
    %v2830 = vmul.f32 %v2826, 0.5
    %v2831 = vtanh.pop %v2830
    %v2832 = vmul.f32 %v2831, 0.5
    %v2833 = vadd.f32 %v2832, 0.5
    %v2834 = vmul.f32 %v2827, 0.5
    %v2835 = vtanh.pop %v2834
    %v2836 = vmul.f32 %v2835, 0.5
    %v2837 = vadd.f32 %v2836, 0.5
    %v2838 = vtanh.pop %v2828
    %v2839 = vmul.f32 %v2829, 0.5
    %v2840 = vtanh.pop %v2839
    %v2841 = vmul.f32 %v2840, 0.5
    %v2842 = vadd.f32 %v2841, 0.5
    %v2843 = vmul.f32 %v2837, %v2526
    %v2844 = vmul.f32 %v2833, %v2838
    %v2845 = vadd.f32 %v2843, %v2844
    %v2846 = vtanh.pop %v2845
    %v2847 = vmul.f32 %v2842, %v2846
    %v2848 = vld [vmem:[%s622] sm:$0xff]
    %2849 = vmatprep.subr.bf16.mxu0 %v899
    %2850 = vmatpush1.bf16.msra.mxu0 %v898
    %2851 = vmatprep.subr.bf16.mxu0 %v895
    %2852 = vmatpush1.bf16.msra.mxu0 %v894
    %2853 = vmatprep.subr.bf16.mxu0 %v891
    %2854 = vmatpush1.bf16.msra.mxu0 %v890
    %2855 = vmatprep.subr.bf16.mxu0 %v887
    %2856 = vmatpush1.bf16.msra.mxu0 %v886
    %2857 = vmatprep.subr.bf16.mxu0 %v883
    %2858 = vmatpush1.bf16.msra.mxu0 %v882
    %2859 = vmatprep.subr.bf16.mxu0 %v879
    %2860 = vmatpush1.bf16.msra.mxu0 %v878
    %2861 = vmatprep.subr.bf16.mxu0 %v875
    %2862 = vmatpush1.bf16.msra.mxu0 %v874
    %2863 = vmatprep.subr.bf16.mxu0 %v871
    %2864 = vmatpush1.bf16.msra.mxu0 %v870
    %2865 = vmatprep.subr.bf16.mxu0 0
    %2866 = vmatpush2.bf16.msra.mxu0 0
    %2867 = vmatprep.subr.bf16.mxu0 0
    %2868 = vmatpush2.bf16.msra.mxu0 0
    %2869 = vmatprep.subr.bf16.mxu0 0
    %2870 = vmatpush2.bf16.msra.mxu0 0
    %2871 = vmatprep.subr.bf16.mxu0 0
    %2872 = vmatpush2.bf16.msra.mxu0 0
    %2873 = vmatprep.subr.bf16.mxu0 0
    %2874 = vmatpush2.bf16.msra.mxu0 0
    %2875 = vmatprep.subr.bf16.mxu0 0
    %2876 = vmatpush2.bf16.msra.mxu0 0
    %2877 = vmatprep.subr.bf16.mxu0 0
    %2878 = vmatpush2.bf16.msra.mxu0 0
    %2879 = vmatprep.subr.bf16.mxu0 0
    %2880 = vmatpush2.bf16.msra.mxu0 0
    %2881 = vmatprep.mubr.bf16.mxu0 0
    %2882 = vmatmul.mubr.bf16.gmra.mxu0 %v2660
    %v2883 = vpop.f32.mrf.mxu0
    %v2884 = vadd.f32 0.0, %v2883
    %v2885 = vpop.f32.mrf.mxu0
    %v2886 = vadd.f32 0.0, %v2885
    %v2887 = vpop.f32.mrf.mxu0
    %v2888 = vpop.f32.mrf.mxu0
    %2889 = vdwg.mxu0
    %2890 = vmatprep.subr.bf16.mxu0 %v901
    %2891 = vmatpush1.bf16.msra.mxu0 %v900
    %2892 = vmatprep.subr.bf16.mxu0 %v897
    %2893 = vmatpush1.bf16.msra.mxu0 %v896
    %2894 = vmatprep.subr.bf16.mxu0 %v893
    %2895 = vmatpush1.bf16.msra.mxu0 %v892
    %2896 = vmatprep.subr.bf16.mxu0 %v889
    %2897 = vmatpush1.bf16.msra.mxu0 %v888
    %2898 = vmatprep.subr.bf16.mxu0 %v885
    %2899 = vmatpush1.bf16.msra.mxu0 %v884
    %2900 = vmatprep.subr.bf16.mxu0 %v881
    %2901 = vmatpush1.bf16.msra.mxu0 %v880
    %2902 = vmatprep.subr.bf16.mxu0 %v877
    %2903 = vmatpush1.bf16.msra.mxu0 %v876
    %2904 = vmatprep.subr.bf16.mxu0 %v873
    %2905 = vmatpush1.bf16.msra.mxu0 %v872
    %2906 = vmatprep.subr.bf16.mxu0 0
    %2907 = vmatpush2.bf16.msra.mxu0 0
    %2908 = vmatprep.subr.bf16.mxu0 0
    %2909 = vmatpush2.bf16.msra.mxu0 0
    %2910 = vmatprep.subr.bf16.mxu0 0
    %2911 = vmatpush2.bf16.msra.mxu0 0
    %2912 = vmatprep.subr.bf16.mxu0 0
    %2913 = vmatpush2.bf16.msra.mxu0 0
    %2914 = vmatprep.subr.bf16.mxu0 0
    %2915 = vmatpush2.bf16.msra.mxu0 0
    %2916 = vmatprep.subr.bf16.mxu0 0
    %2917 = vmatpush2.bf16.msra.mxu0 0
    %2918 = vmatprep.subr.bf16.mxu0 0
    %2919 = vmatpush2.bf16.msra.mxu0 0
    %2920 = vmatprep.subr.bf16.mxu0 0
    %2921 = vmatpush2.bf16.msra.mxu0 0
    %2922 = vmatprep.mubr.bf16.mxu0 0
    %2923 = vmatmul.mubr.bf16.gmra.mxu0 %v2660
    %v2924 = vpop.f32.mrf.mxu0
    %v2925 = vadd.f32 0.0, %v2924
    %v2926 = vpop.f32.mrf.mxu0
    %v2927 = vadd.f32 0.0, %v2926
    %v2928 = vpop.f32.mrf.mxu0
    %v2929 = vpop.f32.mrf.mxu0
    %2930 = vdwg.mxu0
    %v2935 = vcombine.low %v2884, %v2886
    %v2936 = vcombine.low %v2925, %v2927
    %v2938 = vunpack.c.l.s4 1983009808
    %v2939 = vunpack.c.0.s8 %v2938
    %v2940 = vlaneseq
    %v2941 = vshrl.u32 %v2940, 7
    %v2942 = vsub.s32 %v2939, %v2941
    %v2943 = vrot.slane %v2935, %v2942
    %v2945 = vunpack.c.l.s4 1983009808
    %v2946 = vunpack.c.0.s8 %v2945
    %v2947 = vlaneseq
    %v2948 = vshrl.u32 %v2947, 7
    %v2949 = vsub.s32 %v2946, %v2948
    %v2950 = vrot.slane %v2936, %v2949
    %v2951 = vcombine.low %v2943, %v2950
    %v2953 = vadd.f32 %v2848, %v2951
    %v2954 = vmul.f32 %v2953, 0.5
    %v2955 = vtanh.pop %v2954
    %v2956 = vmul.f32 %v2955, 0.5
    %v2957 = vadd.f32 %v2956, 0.5
    %v2959 = vrot.slane %v2953, 2
    %v2961 = vmul.f32 %v2959, 0.5
    %v2962 = vtanh.pop %v2961
    %v2963 = vmul.f32 %v2962, 0.5
    %v2964 = vadd.f32 %v2963, 0.5
    %v2965 = vrot.slane %v2953, 4
    %v2967 = vtanh.pop %v2965
    %v2968 = vrot.slane %v2953, 6
    %v2970 = vmul.f32 %v2968, 0.5
    %v2971 = vtanh.pop %v2970
    %v2972 = vmul.f32 %v2971, 0.5
    %v2973 = vadd.f32 %v2972, 0.5
    %v2974 = vmul.f32 %v2964, %v2657
    %v2975 = vmul.f32 %v2957, %v2967
    %v2976 = vadd.f32 %v2974, %v2975
    %v2977 = vtanh.pop %v2976
    %v2978 = vmul.f32 %v2973, %v2977
    %v2979 = vpack.c.bf16 %v2978, %v2978
    %v2980 = vpack.c.bf16 %v2847, %v2847
    %2981 = vmatprep.subr.bf16.mxu0 %v1191
    %2982 = vmatpush1.bf16.msra.mxu0 %v1190
    %2983 = vmatprep.subr.bf16.mxu0 %v1187
    %2984 = vmatpush1.bf16.msra.mxu0 %v1186
    %2985 = vmatprep.subr.bf16.mxu0 %v1183
    %2986 = vmatpush1.bf16.msra.mxu0 %v1182
    %2987 = vmatprep.subr.bf16.mxu0 %v1179
    %2988 = vmatpush1.bf16.msra.mxu0 %v1178
    %2989 = vmatprep.subr.bf16.mxu0 %v1175
    %2990 = vmatpush1.bf16.msra.mxu0 %v1174
    %2991 = vmatprep.subr.bf16.mxu0 %v1171
    %2992 = vmatpush1.bf16.msra.mxu0 %v1170
    %2993 = vmatprep.subr.bf16.mxu0 %v1167
    %2994 = vmatpush1.bf16.msra.mxu0 %v1166
    %2995 = vmatprep.subr.bf16.mxu0 %v1163
    %2996 = vmatpush1.bf16.msra.mxu0 %v1162
    %2997 = vmatprep.subr.bf16.mxu0 0
    %2998 = vmatpush2.bf16.msra.mxu0 0
    %2999 = vmatprep.subr.bf16.mxu0 0
    %3000 = vmatpush2.bf16.msra.mxu0 0
    %3001 = vmatprep.subr.bf16.mxu0 0
    %3002 = vmatpush2.bf16.msra.mxu0 0
    %3003 = vmatprep.subr.bf16.mxu0 0
    %3004 = vmatpush2.bf16.msra.mxu0 0
    %3005 = vmatprep.subr.bf16.mxu0 0
    %3006 = vmatpush2.bf16.msra.mxu0 0
    %3007 = vmatprep.subr.bf16.mxu0 0
    %3008 = vmatpush2.bf16.msra.mxu0 0
    %3009 = vmatprep.subr.bf16.mxu0 0
    %3010 = vmatpush2.bf16.msra.mxu0 0
    %3011 = vmatprep.subr.bf16.mxu0 0
    %3012 = vmatpush2.bf16.msra.mxu0 0
    %3013 = vmatprep.mubr.bf16.mxu0 0
    %3014 = vmatmul.mubr.bf16.gmra.mxu0 %v2980
    %v3015 = vpop.f32.mrf.mxu0
    %v3016 = vadd.f32 0.0, %v3015
    %v3017 = vpop.f32.mrf.mxu0
    %v3018 = vadd.f32 0.0, %v3017
    %v3019 = vpop.f32.mrf.mxu0
    %v3020 = vpop.f32.mrf.mxu0
    %3021 = vdwg.mxu0
    %3022 = vmatprep.subr.bf16.mxu0 %v1193
    %3023 = vmatpush1.bf16.msra.mxu0 %v1192
    %3024 = vmatprep.subr.bf16.mxu0 %v1189
    %3025 = vmatpush1.bf16.msra.mxu0 %v1188
    %3026 = vmatprep.subr.bf16.mxu0 %v1185
    %3027 = vmatpush1.bf16.msra.mxu0 %v1184
    %3028 = vmatprep.subr.bf16.mxu0 %v1181
    %3029 = vmatpush1.bf16.msra.mxu0 %v1180
    %3030 = vmatprep.subr.bf16.mxu0 %v1177
    %3031 = vmatpush1.bf16.msra.mxu0 %v1176
    %3032 = vmatprep.subr.bf16.mxu0 %v1173
    %3033 = vmatpush1.bf16.msra.mxu0 %v1172
    %3034 = vmatprep.subr.bf16.mxu0 %v1169
    %3035 = vmatpush1.bf16.msra.mxu0 %v1168
    %3036 = vmatprep.subr.bf16.mxu0 %v1165
    %3037 = vmatpush1.bf16.msra.mxu0 %v1164
    %3038 = vmatprep.subr.bf16.mxu0 0
    %3039 = vmatpush2.bf16.msra.mxu0 0
    %3040 = vmatprep.subr.bf16.mxu0 0
    %3041 = vmatpush2.bf16.msra.mxu0 0
    %3042 = vmatprep.subr.bf16.mxu0 0
    %3043 = vmatpush2.bf16.msra.mxu0 0
    %3044 = vmatprep.subr.bf16.mxu0 0
    %3045 = vmatpush2.bf16.msra.mxu0 0
    %3046 = vmatprep.subr.bf16.mxu0 0
    %3047 = vmatpush2.bf16.msra.mxu0 0
    %3048 = vmatprep.subr.bf16.mxu0 0
    %3049 = vmatpush2.bf16.msra.mxu0 0
    %3050 = vmatprep.subr.bf16.mxu0 0
    %3051 = vmatpush2.bf16.msra.mxu0 0
    %3052 = vmatprep.subr.bf16.mxu0 0
    %3053 = vmatpush2.bf16.msra.mxu0 0
    %3054 = vmatprep.mubr.bf16.mxu0 0
    %3055 = vmatmul.mubr.bf16.gmra.mxu0 %v2980
    %v3056 = vpop.f32.mrf.mxu0
    %v3057 = vadd.f32 0.0, %v3056
    %v3058 = vpop.f32.mrf.mxu0
    %v3059 = vadd.f32 0.0, %v3058
    %v3060 = vpop.f32.mrf.mxu0
    %v3061 = vpop.f32.mrf.mxu0
    %3062 = vdwg.mxu0
    %3063 = vmatprep.subr.bf16.mxu0 %v1433
    %3064 = vmatpush1.bf16.msra.mxu0 %v1432
    %3065 = vmatprep.subr.bf16.mxu0 %v1429
    %3066 = vmatpush1.bf16.msra.mxu0 %v1428
    %3067 = vmatprep.subr.bf16.mxu0 %v1425
    %3068 = vmatpush1.bf16.msra.mxu0 %v1424
    %3069 = vmatprep.subr.bf16.mxu0 %v1421
    %3070 = vmatpush1.bf16.msra.mxu0 %v1420
    %3071 = vmatprep.subr.bf16.mxu0 %v1417
    %3072 = vmatpush1.bf16.msra.mxu0 %v1416
    %3073 = vmatprep.subr.bf16.mxu0 %v1413
    %3074 = vmatpush1.bf16.msra.mxu0 %v1412
    %3075 = vmatprep.subr.bf16.mxu0 %v1409
    %3076 = vmatpush1.bf16.msra.mxu0 %v1408
    %3077 = vmatprep.subr.bf16.mxu0 %v1405
    %3078 = vmatpush1.bf16.msra.mxu0 %v1404
    %3079 = vmatprep.subr.bf16.mxu0 0
    %3080 = vmatpush2.bf16.msra.mxu0 0
    %3081 = vmatprep.subr.bf16.mxu0 0
    %3082 = vmatpush2.bf16.msra.mxu0 0
    %3083 = vmatprep.subr.bf16.mxu0 0
    %3084 = vmatpush2.bf16.msra.mxu0 0
    %3085 = vmatprep.subr.bf16.mxu0 0
    %3086 = vmatpush2.bf16.msra.mxu0 0
    %3087 = vmatprep.subr.bf16.mxu0 0
    %3088 = vmatpush2.bf16.msra.mxu0 0
    %3089 = vmatprep.subr.bf16.mxu0 0
    %3090 = vmatpush2.bf16.msra.mxu0 0
    %3091 = vmatprep.subr.bf16.mxu0 0
    %3092 = vmatpush2.bf16.msra.mxu0 0
    %3093 = vmatprep.subr.bf16.mxu0 0
    %3094 = vmatpush2.bf16.msra.mxu0 0
    %3095 = vmatprep.mubr.bf16.mxu0 0
    %3096 = vmatmul.mubr.bf16.gmra.mxu0 %v2979
    %v3097 = vpop.f32.mrf.mxu0
    %v3098 = vadd.f32 %v3016, %v3097
    %v3099 = vpop.f32.mrf.mxu0
    %v3100 = vadd.f32 %v3018, %v3099
    %v3101 = vpop.f32.mrf.mxu0
    %v3102 = vpop.f32.mrf.mxu0
    %3103 = vdwg.mxu0
    %3104 = vmatprep.subr.bf16.mxu0 %v1435
    %3105 = vmatpush1.bf16.msra.mxu0 %v1434
    %3106 = vmatprep.subr.bf16.mxu0 %v1431
    %3107 = vmatpush1.bf16.msra.mxu0 %v1430
    %3108 = vmatprep.subr.bf16.mxu0 %v1427
    %3109 = vmatpush1.bf16.msra.mxu0 %v1426
    %3110 = vmatprep.subr.bf16.mxu0 %v1423
    %3111 = vmatpush1.bf16.msra.mxu0 %v1422
    %3112 = vmatprep.subr.bf16.mxu0 %v1419
    %3113 = vmatpush1.bf16.msra.mxu0 %v1418
    %3114 = vmatprep.subr.bf16.mxu0 %v1415
    %3115 = vmatpush1.bf16.msra.mxu0 %v1414
    %3116 = vmatprep.subr.bf16.mxu0 %v1411
    %3117 = vmatpush1.bf16.msra.mxu0 %v1410
    %3118 = vmatprep.subr.bf16.mxu0 %v1407
    %3119 = vmatpush1.bf16.msra.mxu0 %v1406
    %3120 = vmatprep.subr.bf16.mxu0 0
    %3121 = vmatpush2.bf16.msra.mxu0 0
    %3122 = vmatprep.subr.bf16.mxu0 0
    %3123 = vmatpush2.bf16.msra.mxu0 0
    %3124 = vmatprep.subr.bf16.mxu0 0
    %3125 = vmatpush2.bf16.msra.mxu0 0
    %3126 = vmatprep.subr.bf16.mxu0 0
    %3127 = vmatpush2.bf16.msra.mxu0 0
    %3128 = vmatprep.subr.bf16.mxu0 0
    %3129 = vmatpush2.bf16.msra.mxu0 0
    %3130 = vmatprep.subr.bf16.mxu0 0
    %3131 = vmatpush2.bf16.msra.mxu0 0
    %3132 = vmatprep.subr.bf16.mxu0 0
    %3133 = vmatpush2.bf16.msra.mxu0 0
    %3134 = vmatprep.subr.bf16.mxu0 0
    %3135 = vmatpush2.bf16.msra.mxu0 0
    %3136 = vmatprep.mubr.bf16.mxu0 0
    %3137 = vmatmul.mubr.bf16.gmra.mxu0 %v2979
    %v3138 = vpop.f32.mrf.mxu0
    %v3139 = vadd.f32 %v3057, %v3138
    %v3140 = vpop.f32.mrf.mxu0
    %v3141 = vadd.f32 %v3059, %v3140
    %v3142 = vpop.f32.mrf.mxu0
    %v3143 = vpop.f32.mrf.mxu0
    %3144 = vdwg.mxu0
    %v3145 = vadd.f32 %v3098, %v749
    %v3146 = vadd.f32 %v3100, %v753
    %v3147 = vadd.f32 %v3139, %v757
    %v3148 = vadd.f32 %v3141, %v761
    %v3149 = vmul.f32 %v3145, 0.5
    %v3150 = vtanh.pop %v3149
    %v3151 = vmul.f32 %v3150, 0.5
    %v3152 = vadd.f32 %v3151, 0.5
    %v3153 = vmul.f32 %v3146, 0.5
    %v3154 = vtanh.pop %v3153
    %v3155 = vmul.f32 %v3154, 0.5
    %v3156 = vadd.f32 %v3155, 0.5
    %v3157 = vtanh.pop %v3147
    %v3158 = vmul.f32 %v3148, 0.5
    %v3159 = vtanh.pop %v3158
    %v3160 = vmul.f32 %v3159, 0.5
    %v3161 = vadd.f32 %v3160, 0.5
    %v3162 = vmul.f32 %v3156, %v2845
    %v3163 = vmul.f32 %v3152, %v3157
    %v3164 = vadd.f32 %v3162, %v3163
    %v3165 = vtanh.pop %v3164
    %v3166 = vmul.f32 %v3161, %v3165
    %v3167 = vld [vmem:[%s642] sm:$0xff]
    %3168 = vmatprep.subr.bf16.mxu0 %v899
    %3169 = vmatpush1.bf16.msra.mxu0 %v898
    %3170 = vmatprep.subr.bf16.mxu0 %v895
    %3171 = vmatpush1.bf16.msra.mxu0 %v894
    %3172 = vmatprep.subr.bf16.mxu0 %v891
    %3173 = vmatpush1.bf16.msra.mxu0 %v890
    %3174 = vmatprep.subr.bf16.mxu0 %v887
    %3175 = vmatpush1.bf16.msra.mxu0 %v886
    %3176 = vmatprep.subr.bf16.mxu0 %v883
    %3177 = vmatpush1.bf16.msra.mxu0 %v882
    %3178 = vmatprep.subr.bf16.mxu0 %v879
    %3179 = vmatpush1.bf16.msra.mxu0 %v878
    %3180 = vmatprep.subr.bf16.mxu0 %v875
    %3181 = vmatpush1.bf16.msra.mxu0 %v874
    %3182 = vmatprep.subr.bf16.mxu0 %v871
    %3183 = vmatpush1.bf16.msra.mxu0 %v870
    %3184 = vmatprep.subr.bf16.mxu0 0
    %3185 = vmatpush2.bf16.msra.mxu0 0
    %3186 = vmatprep.subr.bf16.mxu0 0
    %3187 = vmatpush2.bf16.msra.mxu0 0
    %3188 = vmatprep.subr.bf16.mxu0 0
    %3189 = vmatpush2.bf16.msra.mxu0 0
    %3190 = vmatprep.subr.bf16.mxu0 0
    %3191 = vmatpush2.bf16.msra.mxu0 0
    %3192 = vmatprep.subr.bf16.mxu0 0
    %3193 = vmatpush2.bf16.msra.mxu0 0
    %3194 = vmatprep.subr.bf16.mxu0 0
    %3195 = vmatpush2.bf16.msra.mxu0 0
    %3196 = vmatprep.subr.bf16.mxu0 0
    %3197 = vmatpush2.bf16.msra.mxu0 0
    %3198 = vmatprep.subr.bf16.mxu0 0
    %3199 = vmatpush2.bf16.msra.mxu0 0
    %3200 = vmatprep.mubr.bf16.mxu0 0
    %3201 = vmatmul.mubr.bf16.gmra.mxu0 %v2979
    %v3202 = vpop.f32.mrf.mxu0
    %v3203 = vadd.f32 0.0, %v3202
    %v3204 = vpop.f32.mrf.mxu0
    %v3205 = vadd.f32 0.0, %v3204
    %v3206 = vpop.f32.mrf.mxu0
    %v3207 = vpop.f32.mrf.mxu0
    %3208 = vdwg.mxu0
    %3209 = vmatprep.subr.bf16.mxu0 %v901
    %3210 = vmatpush1.bf16.msra.mxu0 %v900
    %3211 = vmatprep.subr.bf16.mxu0 %v897
    %3212 = vmatpush1.bf16.msra.mxu0 %v896
    %3213 = vmatprep.subr.bf16.mxu0 %v893
    %3214 = vmatpush1.bf16.msra.mxu0 %v892
    %3215 = vmatprep.subr.bf16.mxu0 %v889
    %3216 = vmatpush1.bf16.msra.mxu0 %v888
    %3217 = vmatprep.subr.bf16.mxu0 %v885
    %3218 = vmatpush1.bf16.msra.mxu0 %v884
    %3219 = vmatprep.subr.bf16.mxu0 %v881
    %3220 = vmatpush1.bf16.msra.mxu0 %v880
    %3221 = vmatprep.subr.bf16.mxu0 %v877
    %3222 = vmatpush1.bf16.msra.mxu0 %v876
    %3223 = vmatprep.subr.bf16.mxu0 %v873
    %3224 = vmatpush1.bf16.msra.mxu0 %v872
    %3225 = vmatprep.subr.bf16.mxu0 0
    %3226 = vmatpush2.bf16.msra.mxu0 0
    %3227 = vmatprep.subr.bf16.mxu0 0
    %3228 = vmatpush2.bf16.msra.mxu0 0
    %3229 = vmatprep.subr.bf16.mxu0 0
    %3230 = vmatpush2.bf16.msra.mxu0 0
    %3231 = vmatprep.subr.bf16.mxu0 0
    %3232 = vmatpush2.bf16.msra.mxu0 0
    %3233 = vmatprep.subr.bf16.mxu0 0
    %3234 = vmatpush2.bf16.msra.mxu0 0
    %3235 = vmatprep.subr.bf16.mxu0 0
    %3236 = vmatpush2.bf16.msra.mxu0 0
    %3237 = vmatprep.subr.bf16.mxu0 0
    %3238 = vmatpush2.bf16.msra.mxu0 0
    %3239 = vmatprep.subr.bf16.mxu0 0
    %3240 = vmatpush2.bf16.msra.mxu0 0
    %3241 = vmatprep.mubr.bf16.mxu0 0
    %3242 = vmatmul.mubr.bf16.gmra.mxu0 %v2979
    %v3243 = vpop.f32.mrf.mxu0
    %v3244 = vadd.f32 0.0, %v3243
    %v3245 = vpop.f32.mrf.mxu0
    %v3246 = vadd.f32 0.0, %v3245
    %v3247 = vpop.f32.mrf.mxu0
    %v3248 = vpop.f32.mrf.mxu0
    %3249 = vdwg.mxu0
    %v3254 = vcombine.low %v3203, %v3205
    %v3255 = vcombine.low %v3244, %v3246
    %v3257 = vunpack.c.l.s4 1983009808
    %v3258 = vunpack.c.0.s8 %v3257
    %v3259 = vlaneseq
    %v3260 = vshrl.u32 %v3259, 7
    %v3261 = vsub.s32 %v3258, %v3260
    %v3262 = vrot.slane %v3254, %v3261
    %v3264 = vunpack.c.l.s4 1983009808
    %v3265 = vunpack.c.0.s8 %v3264
    %v3266 = vlaneseq
    %v3267 = vshrl.u32 %v3266, 7
    %v3268 = vsub.s32 %v3265, %v3267
    %v3269 = vrot.slane %v3255, %v3268
    %v3270 = vcombine.low %v3262, %v3269
    %v3272 = vadd.f32 %v3167, %v3270
    %v3273 = vmul.f32 %v3272, 0.5
    %v3274 = vtanh.pop %v3273
    %v3275 = vmul.f32 %v3274, 0.5
    %v3276 = vadd.f32 %v3275, 0.5
    %v3278 = vrot.slane %v3272, 2
    %v3280 = vmul.f32 %v3278, 0.5
    %v3281 = vtanh.pop %v3280
    %v3282 = vmul.f32 %v3281, 0.5
    %v3283 = vadd.f32 %v3282, 0.5
    %v3284 = vrot.slane %v3272, 4
    %v3286 = vtanh.pop %v3284
    %v3287 = vrot.slane %v3272, 6
    %v3289 = vmul.f32 %v3287, 0.5
    %v3290 = vtanh.pop %v3289
    %v3291 = vmul.f32 %v3290, 0.5
    %v3292 = vadd.f32 %v3291, 0.5
    %v3293 = vmul.f32 %v3283, %v2976
    %v3294 = vmul.f32 %v3276, %v3286
    %v3295 = vadd.f32 %v3293, %v3294
    %v3296 = vtanh.pop %v3295
    %v3297 = vmul.f32 %v3292, %v3296
    %v3298 = vpack.c.bf16 %v3297, %v3297
    %v3299 = vpack.c.bf16 %v3166, %v3166
    %3300 = vmatprep.subr.bf16.mxu0 %v1191
    %3301 = vmatpush1.bf16.msra.mxu0 %v1190
    %3302 = vmatprep.subr.bf16.mxu0 %v1187
    %3303 = vmatpush1.bf16.msra.mxu0 %v1186
    %3304 = vmatprep.subr.bf16.mxu0 %v1183
    %3305 = vmatpush1.bf16.msra.mxu0 %v1182
    %3306 = vmatprep.subr.bf16.mxu0 %v1179
    %3307 = vmatpush1.bf16.msra.mxu0 %v1178
    %3308 = vmatprep.subr.bf16.mxu0 %v1175
    %3309 = vmatpush1.bf16.msra.mxu0 %v1174
    %3310 = vmatprep.subr.bf16.mxu0 %v1171
    %3311 = vmatpush1.bf16.msra.mxu0 %v1170
    %3312 = vmatprep.subr.bf16.mxu0 %v1167
    %3313 = vmatpush1.bf16.msra.mxu0 %v1166
    %3314 = vmatprep.subr.bf16.mxu0 %v1163
    %3315 = vmatpush1.bf16.msra.mxu0 %v1162
    %3316 = vmatprep.subr.bf16.mxu0 0
    %3317 = vmatpush2.bf16.msra.mxu0 0
    %3318 = vmatprep.subr.bf16.mxu0 0
    %3319 = vmatpush2.bf16.msra.mxu0 0
    %3320 = vmatprep.subr.bf16.mxu0 0
    %3321 = vmatpush2.bf16.msra.mxu0 0
    %3322 = vmatprep.subr.bf16.mxu0 0
    %3323 = vmatpush2.bf16.msra.mxu0 0
    %3324 = vmatprep.subr.bf16.mxu0 0
    %3325 = vmatpush2.bf16.msra.mxu0 0
    %3326 = vmatprep.subr.bf16.mxu0 0
    %3327 = vmatpush2.bf16.msra.mxu0 0
    %3328 = vmatprep.subr.bf16.mxu0 0
    %3329 = vmatpush2.bf16.msra.mxu0 0
    %3330 = vmatprep.subr.bf16.mxu0 0
    %3331 = vmatpush2.bf16.msra.mxu0 0
    %3332 = vmatprep.mubr.bf16.mxu0 0
    %3333 = vmatmul.mubr.bf16.gmra.mxu0 %v3299
    %v3334 = vpop.f32.mrf.mxu0
    %v3335 = vadd.f32 0.0, %v3334
    %v3336 = vpop.f32.mrf.mxu0
    %v3337 = vadd.f32 0.0, %v3336
    %v3338 = vpop.f32.mrf.mxu0
    %v3339 = vpop.f32.mrf.mxu0
    %3340 = vdwg.mxu0
    %3341 = vmatprep.subr.bf16.mxu0 %v1193
    %3342 = vmatpush1.bf16.msra.mxu0 %v1192
    %3343 = vmatprep.subr.bf16.mxu0 %v1189
    %3344 = vmatpush1.bf16.msra.mxu0 %v1188
    %3345 = vmatprep.subr.bf16.mxu0 %v1185
    %3346 = vmatpush1.bf16.msra.mxu0 %v1184
    %3347 = vmatprep.subr.bf16.mxu0 %v1181
    %3348 = vmatpush1.bf16.msra.mxu0 %v1180
    %3349 = vmatprep.subr.bf16.mxu0 %v1177
    %3350 = vmatpush1.bf16.msra.mxu0 %v1176
    %3351 = vmatprep.subr.bf16.mxu0 %v1173
    %3352 = vmatpush1.bf16.msra.mxu0 %v1172
    %3353 = vmatprep.subr.bf16.mxu0 %v1169
    %3354 = vmatpush1.bf16.msra.mxu0 %v1168
    %3355 = vmatprep.subr.bf16.mxu0 %v1165
    %3356 = vmatpush1.bf16.msra.mxu0 %v1164
    %3357 = vmatprep.subr.bf16.mxu0 0
    %3358 = vmatpush2.bf16.msra.mxu0 0
    %3359 = vmatprep.subr.bf16.mxu0 0
    %3360 = vmatpush2.bf16.msra.mxu0 0
    %3361 = vmatprep.subr.bf16.mxu0 0
    %3362 = vmatpush2.bf16.msra.mxu0 0
    %3363 = vmatprep.subr.bf16.mxu0 0
    %3364 = vmatpush2.bf16.msra.mxu0 0
    %3365 = vmatprep.subr.bf16.mxu0 0
    %3366 = vmatpush2.bf16.msra.mxu0 0
    %3367 = vmatprep.subr.bf16.mxu0 0
    %3368 = vmatpush2.bf16.msra.mxu0 0
    %3369 = vmatprep.subr.bf16.mxu0 0
    %3370 = vmatpush2.bf16.msra.mxu0 0
    %3371 = vmatprep.subr.bf16.mxu0 0
    %3372 = vmatpush2.bf16.msra.mxu0 0
    %3373 = vmatprep.mubr.bf16.mxu0 0
    %3374 = vmatmul.mubr.bf16.gmra.mxu0 %v3299
    %v3375 = vpop.f32.mrf.mxu0
    %v3376 = vadd.f32 0.0, %v3375
    %v3377 = vpop.f32.mrf.mxu0
    %v3378 = vadd.f32 0.0, %v3377
    %v3379 = vpop.f32.mrf.mxu0
    %v3380 = vpop.f32.mrf.mxu0
    %3381 = vdwg.mxu0
    %3382 = vmatprep.subr.bf16.mxu0 %v1433
    %3383 = vmatpush1.bf16.msra.mxu0 %v1432
    %3384 = vmatprep.subr.bf16.mxu0 %v1429
    %3385 = vmatpush1.bf16.msra.mxu0 %v1428
    %3386 = vmatprep.subr.bf16.mxu0 %v1425
    %3387 = vmatpush1.bf16.msra.mxu0 %v1424
    %3388 = vmatprep.subr.bf16.mxu0 %v1421
    %3389 = vmatpush1.bf16.msra.mxu0 %v1420
    %3390 = vmatprep.subr.bf16.mxu0 %v1417
    %3391 = vmatpush1.bf16.msra.mxu0 %v1416
    %3392 = vmatprep.subr.bf16.mxu0 %v1413
    %3393 = vmatpush1.bf16.msra.mxu0 %v1412
    %3394 = vmatprep.subr.bf16.mxu0 %v1409
    %3395 = vmatpush1.bf16.msra.mxu0 %v1408
    %3396 = vmatprep.subr.bf16.mxu0 %v1405
    %3397 = vmatpush1.bf16.msra.mxu0 %v1404
    %3398 = vmatprep.subr.bf16.mxu0 0
    %3399 = vmatpush2.bf16.msra.mxu0 0
    %3400 = vmatprep.subr.bf16.mxu0 0
    %3401 = vmatpush2.bf16.msra.mxu0 0
    %3402 = vmatprep.subr.bf16.mxu0 0
    %3403 = vmatpush2.bf16.msra.mxu0 0
    %3404 = vmatprep.subr.bf16.mxu0 0
    %3405 = vmatpush2.bf16.msra.mxu0 0
    %3406 = vmatprep.subr.bf16.mxu0 0
    %3407 = vmatpush2.bf16.msra.mxu0 0
    %3408 = vmatprep.subr.bf16.mxu0 0
    %3409 = vmatpush2.bf16.msra.mxu0 0
    %3410 = vmatprep.subr.bf16.mxu0 0
    %3411 = vmatpush2.bf16.msra.mxu0 0
    %3412 = vmatprep.subr.bf16.mxu0 0
    %3413 = vmatpush2.bf16.msra.mxu0 0
    %3414 = vmatprep.mubr.bf16.mxu0 0
    %3415 = vmatmul.mubr.bf16.gmra.mxu0 %v3298
    %v3416 = vpop.f32.mrf.mxu0
    %v3417 = vadd.f32 %v3335, %v3416
    %v3418 = vpop.f32.mrf.mxu0
    %v3419 = vadd.f32 %v3337, %v3418
    %v3420 = vpop.f32.mrf.mxu0
    %v3421 = vpop.f32.mrf.mxu0
    %3422 = vdwg.mxu0
    %3423 = vmatprep.subr.bf16.mxu0 %v1435
    %3424 = vmatpush1.bf16.msra.mxu0 %v1434
    %3425 = vmatprep.subr.bf16.mxu0 %v1431
    %3426 = vmatpush1.bf16.msra.mxu0 %v1430
    %3427 = vmatprep.subr.bf16.mxu0 %v1427
    %3428 = vmatpush1.bf16.msra.mxu0 %v1426
    %3429 = vmatprep.subr.bf16.mxu0 %v1423
    %3430 = vmatpush1.bf16.msra.mxu0 %v1422
    %3431 = vmatprep.subr.bf16.mxu0 %v1419
    %3432 = vmatpush1.bf16.msra.mxu0 %v1418
    %3433 = vmatprep.subr.bf16.mxu0 %v1415
    %3434 = vmatpush1.bf16.msra.mxu0 %v1414
    %3435 = vmatprep.subr.bf16.mxu0 %v1411
    %3436 = vmatpush1.bf16.msra.mxu0 %v1410
    %3437 = vmatprep.subr.bf16.mxu0 %v1407
    %3438 = vmatpush1.bf16.msra.mxu0 %v1406
    %3439 = vmatprep.subr.bf16.mxu0 0
    %3440 = vmatpush2.bf16.msra.mxu0 0
    %3441 = vmatprep.subr.bf16.mxu0 0
    %3442 = vmatpush2.bf16.msra.mxu0 0
    %3443 = vmatprep.subr.bf16.mxu0 0
    %3444 = vmatpush2.bf16.msra.mxu0 0
    %3445 = vmatprep.subr.bf16.mxu0 0
    %3446 = vmatpush2.bf16.msra.mxu0 0
    %3447 = vmatprep.subr.bf16.mxu0 0
    %3448 = vmatpush2.bf16.msra.mxu0 0
    %3449 = vmatprep.subr.bf16.mxu0 0
    %3450 = vmatpush2.bf16.msra.mxu0 0
    %3451 = vmatprep.subr.bf16.mxu0 0
    %3452 = vmatpush2.bf16.msra.mxu0 0
    %3453 = vmatprep.subr.bf16.mxu0 0
    %3454 = vmatpush2.bf16.msra.mxu0 0
    %3455 = vmatprep.mubr.bf16.mxu0 0
    %3456 = vmatmul.mubr.bf16.gmra.mxu0 %v3298
    %v3457 = vpop.f32.mrf.mxu0
    %v3458 = vadd.f32 %v3376, %v3457
    %v3459 = vpop.f32.mrf.mxu0
    %v3460 = vadd.f32 %v3378, %v3459
    %v3461 = vpop.f32.mrf.mxu0
    %v3462 = vpop.f32.mrf.mxu0
    %3463 = vdwg.mxu0
    %v3464 = vadd.f32 %v3417, %v749
    %v3465 = vadd.f32 %v3419, %v753
    %v3466 = vadd.f32 %v3458, %v757
    %v3467 = vadd.f32 %v3460, %v761
    %v3468 = vmul.f32 %v3464, 0.5
    %v3469 = vtanh.pop %v3468
    %v3470 = vmul.f32 %v3469, 0.5
    %v3471 = vadd.f32 %v3470, 0.5
    %v3472 = vmul.f32 %v3465, 0.5
    %v3473 = vtanh.pop %v3472
    %v3474 = vmul.f32 %v3473, 0.5
    %v3475 = vadd.f32 %v3474, 0.5
    %v3476 = vtanh.pop %v3466
    %v3477 = vmul.f32 %v3467, 0.5
    %v3478 = vtanh.pop %v3477
    %v3479 = vmul.f32 %v3478, 0.5
    %v3480 = vadd.f32 %v3479, 0.5
    %v3481 = vmul.f32 %v3475, %v3164
    %v3482 = vmul.f32 %v3471, %v3476
    %v3483 = vadd.f32 %v3481, %v3482
    %v3484 = vtanh.pop %v3483
    %v3485 = vmul.f32 %v3480, %v3484
    %v3486 = vld [vmem:[%s646] sm:$0xff]
    %3487 = vmatprep.subr.bf16.mxu0 %v899
    %3488 = vmatpush1.bf16.msra.mxu0 %v898
    %3489 = vmatprep.subr.bf16.mxu0 %v895
    %3490 = vmatpush1.bf16.msra.mxu0 %v894
    %3491 = vmatprep.subr.bf16.mxu0 %v891
    %3492 = vmatpush1.bf16.msra.mxu0 %v890
    %3493 = vmatprep.subr.bf16.mxu0 %v887
    %3494 = vmatpush1.bf16.msra.mxu0 %v886
    %3495 = vmatprep.subr.bf16.mxu0 %v883
    %3496 = vmatpush1.bf16.msra.mxu0 %v882
    %3497 = vmatprep.subr.bf16.mxu0 %v879
    %3498 = vmatpush1.bf16.msra.mxu0 %v878
    %3499 = vmatprep.subr.bf16.mxu0 %v875
    %3500 = vmatpush1.bf16.msra.mxu0 %v874
    %3501 = vmatprep.subr.bf16.mxu0 %v871
    %3502 = vmatpush1.bf16.msra.mxu0 %v870
    %3503 = vmatprep.subr.bf16.mxu0 0
    %3504 = vmatpush2.bf16.msra.mxu0 0
    %3505 = vmatprep.subr.bf16.mxu0 0
    %3506 = vmatpush2.bf16.msra.mxu0 0
    %3507 = vmatprep.subr.bf16.mxu0 0
    %3508 = vmatpush2.bf16.msra.mxu0 0
    %3509 = vmatprep.subr.bf16.mxu0 0
    %3510 = vmatpush2.bf16.msra.mxu0 0
    %3511 = vmatprep.subr.bf16.mxu0 0
    %3512 = vmatpush2.bf16.msra.mxu0 0
    %3513 = vmatprep.subr.bf16.mxu0 0
    %3514 = vmatpush2.bf16.msra.mxu0 0
    %3515 = vmatprep.subr.bf16.mxu0 0
    %3516 = vmatpush2.bf16.msra.mxu0 0
    %3517 = vmatprep.subr.bf16.mxu0 0
    %3518 = vmatpush2.bf16.msra.mxu0 0
    %3519 = vmatprep.mubr.bf16.mxu0 0
    %3520 = vmatmul.mubr.bf16.gmra.mxu0 %v3298
    %v3521 = vpop.f32.mrf.mxu0
    %v3522 = vadd.f32 0.0, %v3521
    %v3523 = vpop.f32.mrf.mxu0
    %v3524 = vadd.f32 0.0, %v3523
    %v3525 = vpop.f32.mrf.mxu0
    %v3526 = vpop.f32.mrf.mxu0
    %3527 = vdwg.mxu0
    %3528 = vmatprep.subr.bf16.mxu0 %v901
    %3529 = vmatpush1.bf16.msra.mxu0 %v900
    %3530 = vmatprep.subr.bf16.mxu0 %v897
    %3531 = vmatpush1.bf16.msra.mxu0 %v896
    %3532 = vmatprep.subr.bf16.mxu0 %v893
    %3533 = vmatpush1.bf16.msra.mxu0 %v892
    %3534 = vmatprep.subr.bf16.mxu0 %v889
    %3535 = vmatpush1.bf16.msra.mxu0 %v888
    %3536 = vmatprep.subr.bf16.mxu0 %v885
    %3537 = vmatpush1.bf16.msra.mxu0 %v884
    %3538 = vmatprep.subr.bf16.mxu0 %v881
    %3539 = vmatpush1.bf16.msra.mxu0 %v880
    %3540 = vmatprep.subr.bf16.mxu0 %v877
    %3541 = vmatpush1.bf16.msra.mxu0 %v876
    %3542 = vmatprep.subr.bf16.mxu0 %v873
    %3543 = vmatpush1.bf16.msra.mxu0 %v872
    %3544 = vmatprep.subr.bf16.mxu0 0
    %3545 = vmatpush2.bf16.msra.mxu0 0
    %3546 = vmatprep.subr.bf16.mxu0 0
    %3547 = vmatpush2.bf16.msra.mxu0 0
    %3548 = vmatprep.subr.bf16.mxu0 0
    %3549 = vmatpush2.bf16.msra.mxu0 0
    %3550 = vmatprep.subr.bf16.mxu0 0
    %3551 = vmatpush2.bf16.msra.mxu0 0
    %3552 = vmatprep.subr.bf16.mxu0 0
    %3553 = vmatpush2.bf16.msra.mxu0 0
    %3554 = vmatprep.subr.bf16.mxu0 0
    %3555 = vmatpush2.bf16.msra.mxu0 0
    %3556 = vmatprep.subr.bf16.mxu0 0
    %3557 = vmatpush2.bf16.msra.mxu0 0
    %3558 = vmatprep.subr.bf16.mxu0 0
    %3559 = vmatpush2.bf16.msra.mxu0 0
    %3560 = vmatprep.mubr.bf16.mxu0 0
    %3561 = vmatmul.mubr.bf16.gmra.mxu0 %v3298
    %v3562 = vpop.f32.mrf.mxu0
    %v3563 = vadd.f32 0.0, %v3562
    %v3564 = vpop.f32.mrf.mxu0
    %v3565 = vadd.f32 0.0, %v3564
    %v3566 = vpop.f32.mrf.mxu0
    %v3567 = vpop.f32.mrf.mxu0
    %3568 = vdwg.mxu0
    %v3573 = vcombine.low %v3522, %v3524
    %v3574 = vcombine.low %v3563, %v3565
    %v3576 = vunpack.c.l.s4 1983009808
    %v3577 = vunpack.c.0.s8 %v3576
    %v3578 = vlaneseq
    %v3579 = vshrl.u32 %v3578, 7
    %v3580 = vsub.s32 %v3577, %v3579
    %v3581 = vrot.slane %v3573, %v3580
    %v3583 = vunpack.c.l.s4 1983009808
    %v3584 = vunpack.c.0.s8 %v3583
    %v3585 = vlaneseq
    %v3586 = vshrl.u32 %v3585, 7
    %v3587 = vsub.s32 %v3584, %v3586
    %v3588 = vrot.slane %v3574, %v3587
    %v3589 = vcombine.low %v3581, %v3588
    %v3591 = vadd.f32 %v3486, %v3589
    %v3592 = vmul.f32 %v3591, 0.5
    %v3593 = vtanh.pop %v3592
    %v3594 = vmul.f32 %v3593, 0.5
    %v3595 = vadd.f32 %v3594, 0.5
    %v3597 = vrot.slane %v3591, 2
    %v3599 = vmul.f32 %v3597, 0.5
    %v3600 = vtanh.pop %v3599
    %v3601 = vmul.f32 %v3600, 0.5
    %v3602 = vadd.f32 %v3601, 0.5
    %v3603 = vrot.slane %v3591, 4
    %v3605 = vtanh.pop %v3603
    %v3606 = vrot.slane %v3591, 6
    %v3608 = vmul.f32 %v3606, 0.5
    %v3609 = vtanh.pop %v3608
    %v3610 = vmul.f32 %v3609, 0.5
    %v3611 = vadd.f32 %v3610, 0.5
    %v3612 = vmul.f32 %v3602, %v3295
    %v3613 = vmul.f32 %v3595, %v3605
    %v3614 = vadd.f32 %v3612, %v3613
    %v3615 = vtanh.pop %v3614
    %v3616 = vmul.f32 %v3611, %v3615
    %v3617 = vpack.c.bf16 %v3616, %v3616
    %v3618 = vpack.c.bf16 %v3485, %v3485
    %3619 = vmatprep.subr.bf16.mxu0 %v1191
    %3620 = vmatpush1.bf16.msra.mxu0 %v1190
    %3621 = vmatprep.subr.bf16.mxu0 %v1187
    %3622 = vmatpush1.bf16.msra.mxu0 %v1186
    %3623 = vmatprep.subr.bf16.mxu0 %v1183
    %3624 = vmatpush1.bf16.msra.mxu0 %v1182
    %3625 = vmatprep.subr.bf16.mxu0 %v1179
    %3626 = vmatpush1.bf16.msra.mxu0 %v1178
    %3627 = vmatprep.subr.bf16.mxu0 %v1175
    %3628 = vmatpush1.bf16.msra.mxu0 %v1174
    %3629 = vmatprep.subr.bf16.mxu0 %v1171
    %3630 = vmatpush1.bf16.msra.mxu0 %v1170
    %3631 = vmatprep.subr.bf16.mxu0 %v1167
    %3632 = vmatpush1.bf16.msra.mxu0 %v1166
    %3633 = vmatprep.subr.bf16.mxu0 %v1163
    %3634 = vmatpush1.bf16.msra.mxu0 %v1162
    %3635 = vmatprep.subr.bf16.mxu0 0
    %3636 = vmatpush2.bf16.msra.mxu0 0
    %3637 = vmatprep.subr.bf16.mxu0 0
    %3638 = vmatpush2.bf16.msra.mxu0 0
    %3639 = vmatprep.subr.bf16.mxu0 0
    %3640 = vmatpush2.bf16.msra.mxu0 0
    %3641 = vmatprep.subr.bf16.mxu0 0
    %3642 = vmatpush2.bf16.msra.mxu0 0
    %3643 = vmatprep.subr.bf16.mxu0 0
    %3644 = vmatpush2.bf16.msra.mxu0 0
    %3645 = vmatprep.subr.bf16.mxu0 0
    %3646 = vmatpush2.bf16.msra.mxu0 0
    %3647 = vmatprep.subr.bf16.mxu0 0
    %3648 = vmatpush2.bf16.msra.mxu0 0
    %3649 = vmatprep.subr.bf16.mxu0 0
    %3650 = vmatpush2.bf16.msra.mxu0 0
    %3651 = vmatprep.mubr.bf16.mxu0 0
    %3652 = vmatmul.mubr.bf16.gmra.mxu0 %v3618
    %v3653 = vpop.f32.mrf.mxu0
    %v3654 = vadd.f32 0.0, %v3653
    %v3655 = vpop.f32.mrf.mxu0
    %v3656 = vadd.f32 0.0, %v3655
    %v3657 = vpop.f32.mrf.mxu0
    %v3658 = vpop.f32.mrf.mxu0
    %3659 = vdwg.mxu0
    %3660 = vmatprep.subr.bf16.mxu0 %v1193
    %3661 = vmatpush1.bf16.msra.mxu0 %v1192
    %3662 = vmatprep.subr.bf16.mxu0 %v1189
    %3663 = vmatpush1.bf16.msra.mxu0 %v1188
    %3664 = vmatprep.subr.bf16.mxu0 %v1185
    %3665 = vmatpush1.bf16.msra.mxu0 %v1184
    %3666 = vmatprep.subr.bf16.mxu0 %v1181
    %3667 = vmatpush1.bf16.msra.mxu0 %v1180
    %3668 = vmatprep.subr.bf16.mxu0 %v1177
    %3669 = vmatpush1.bf16.msra.mxu0 %v1176
    %3670 = vmatprep.subr.bf16.mxu0 %v1173
    %3671 = vmatpush1.bf16.msra.mxu0 %v1172
    %3672 = vmatprep.subr.bf16.mxu0 %v1169
    %3673 = vmatpush1.bf16.msra.mxu0 %v1168
    %3674 = vmatprep.subr.bf16.mxu0 %v1165
    %3675 = vmatpush1.bf16.msra.mxu0 %v1164
    %3676 = vmatprep.subr.bf16.mxu0 0
    %3677 = vmatpush2.bf16.msra.mxu0 0
    %3678 = vmatprep.subr.bf16.mxu0 0
    %3679 = vmatpush2.bf16.msra.mxu0 0
    %3680 = vmatprep.subr.bf16.mxu0 0
    %3681 = vmatpush2.bf16.msra.mxu0 0
    %3682 = vmatprep.subr.bf16.mxu0 0
    %3683 = vmatpush2.bf16.msra.mxu0 0
    %3684 = vmatprep.subr.bf16.mxu0 0
    %3685 = vmatpush2.bf16.msra.mxu0 0
    %3686 = vmatprep.subr.bf16.mxu0 0
    %3687 = vmatpush2.bf16.msra.mxu0 0
    %3688 = vmatprep.subr.bf16.mxu0 0
    %3689 = vmatpush2.bf16.msra.mxu0 0
    %3690 = vmatprep.subr.bf16.mxu0 0
    %3691 = vmatpush2.bf16.msra.mxu0 0
    %3692 = vmatprep.mubr.bf16.mxu0 0
    %3693 = vmatmul.mubr.bf16.gmra.mxu0 %v3618
    %v3694 = vpop.f32.mrf.mxu0
    %v3695 = vadd.f32 0.0, %v3694
    %v3696 = vpop.f32.mrf.mxu0
    %v3697 = vadd.f32 0.0, %v3696
    %v3698 = vpop.f32.mrf.mxu0
    %v3699 = vpop.f32.mrf.mxu0
    %3700 = vdwg.mxu0
    %3701 = vmatprep.subr.bf16.mxu0 %v1433
    %3702 = vmatpush1.bf16.msra.mxu0 %v1432
    %3703 = vmatprep.subr.bf16.mxu0 %v1429
    %3704 = vmatpush1.bf16.msra.mxu0 %v1428
    %3705 = vmatprep.subr.bf16.mxu0 %v1425
    %3706 = vmatpush1.bf16.msra.mxu0 %v1424
    %3707 = vmatprep.subr.bf16.mxu0 %v1421
    %3708 = vmatpush1.bf16.msra.mxu0 %v1420
    %3709 = vmatprep.subr.bf16.mxu0 %v1417
    %3710 = vmatpush1.bf16.msra.mxu0 %v1416
    %3711 = vmatprep.subr.bf16.mxu0 %v1413
    %3712 = vmatpush1.bf16.msra.mxu0 %v1412
    %3713 = vmatprep.subr.bf16.mxu0 %v1409
    %3714 = vmatpush1.bf16.msra.mxu0 %v1408
    %3715 = vmatprep.subr.bf16.mxu0 %v1405
    %3716 = vmatpush1.bf16.msra.mxu0 %v1404
    %3717 = vmatprep.subr.bf16.mxu0 0
    %3718 = vmatpush2.bf16.msra.mxu0 0
    %3719 = vmatprep.subr.bf16.mxu0 0
    %3720 = vmatpush2.bf16.msra.mxu0 0
    %3721 = vmatprep.subr.bf16.mxu0 0
    %3722 = vmatpush2.bf16.msra.mxu0 0
    %3723 = vmatprep.subr.bf16.mxu0 0
    %3724 = vmatpush2.bf16.msra.mxu0 0
    %3725 = vmatprep.subr.bf16.mxu0 0
    %3726 = vmatpush2.bf16.msra.mxu0 0
    %3727 = vmatprep.subr.bf16.mxu0 0
    %3728 = vmatpush2.bf16.msra.mxu0 0
    %3729 = vmatprep.subr.bf16.mxu0 0
    %3730 = vmatpush2.bf16.msra.mxu0 0
    %3731 = vmatprep.subr.bf16.mxu0 0
    %3732 = vmatpush2.bf16.msra.mxu0 0
    %3733 = vmatprep.mubr.bf16.mxu0 0
    %3734 = vmatmul.mubr.bf16.gmra.mxu0 %v3617
    %v3735 = vpop.f32.mrf.mxu0
    %v3736 = vadd.f32 %v3654, %v3735
    %v3737 = vpop.f32.mrf.mxu0
    %v3738 = vadd.f32 %v3656, %v3737
    %v3739 = vpop.f32.mrf.mxu0
    %v3740 = vpop.f32.mrf.mxu0
    %3741 = vdwg.mxu0
    %3742 = vmatprep.subr.bf16.mxu0 %v1435
    %3743 = vmatpush1.bf16.msra.mxu0 %v1434
    %3744 = vmatprep.subr.bf16.mxu0 %v1431
    %3745 = vmatpush1.bf16.msra.mxu0 %v1430
    %3746 = vmatprep.subr.bf16.mxu0 %v1427
    %3747 = vmatpush1.bf16.msra.mxu0 %v1426
    %3748 = vmatprep.subr.bf16.mxu0 %v1423
    %3749 = vmatpush1.bf16.msra.mxu0 %v1422
    %3750 = vmatprep.subr.bf16.mxu0 %v1419
    %3751 = vmatpush1.bf16.msra.mxu0 %v1418
    %3752 = vmatprep.subr.bf16.mxu0 %v1415
    %3753 = vmatpush1.bf16.msra.mxu0 %v1414
    %3754 = vmatprep.subr.bf16.mxu0 %v1411
    %3755 = vmatpush1.bf16.msra.mxu0 %v1410
    %3756 = vmatprep.subr.bf16.mxu0 %v1407
    %3757 = vmatpush1.bf16.msra.mxu0 %v1406
    %3758 = vmatprep.subr.bf16.mxu0 0
    %3759 = vmatpush2.bf16.msra.mxu0 0
    %3760 = vmatprep.subr.bf16.mxu0 0
    %3761 = vmatpush2.bf16.msra.mxu0 0
    %3762 = vmatprep.subr.bf16.mxu0 0
    %3763 = vmatpush2.bf16.msra.mxu0 0
    %3764 = vmatprep.subr.bf16.mxu0 0
    %3765 = vmatpush2.bf16.msra.mxu0 0
    %3766 = vmatprep.subr.bf16.mxu0 0
    %3767 = vmatpush2.bf16.msra.mxu0 0
    %3768 = vmatprep.subr.bf16.mxu0 0
    %3769 = vmatpush2.bf16.msra.mxu0 0
    %3770 = vmatprep.subr.bf16.mxu0 0
    %3771 = vmatpush2.bf16.msra.mxu0 0
    %3772 = vmatprep.subr.bf16.mxu0 0
    %3773 = vmatpush2.bf16.msra.mxu0 0
    %3774 = vmatprep.mubr.bf16.mxu0 0
    %3775 = vmatmul.mubr.bf16.gmra.mxu0 %v3617
    %v3776 = vpop.f32.mrf.mxu0
    %v3777 = vadd.f32 %v3695, %v3776
    %v3778 = vpop.f32.mrf.mxu0
    %v3779 = vadd.f32 %v3697, %v3778
    %v3780 = vpop.f32.mrf.mxu0
    %v3781 = vpop.f32.mrf.mxu0
    %3782 = vdwg.mxu0
    %v3783 = vadd.f32 %v3736, %v749
    %v3784 = vadd.f32 %v3738, %v753
    %v3785 = vadd.f32 %v3777, %v757
    %v3786 = vadd.f32 %v3779, %v761
    %v3787 = vmul.f32 %v3783, 0.5
    %v3788 = vtanh.pop %v3787
    %v3789 = vmul.f32 %v3788, 0.5
    %v3790 = vadd.f32 %v3789, 0.5
    %v3791 = vmul.f32 %v3784, 0.5
    %v3792 = vtanh.pop %v3791
    %v3793 = vmul.f32 %v3792, 0.5
    %v3794 = vadd.f32 %v3793, 0.5
    %v3795 = vtanh.pop %v3785
    %v3796 = vmul.f32 %v3786, 0.5
    %v3797 = vtanh.pop %v3796
    %v3798 = vmul.f32 %v3797, 0.5
    %v3799 = vadd.f32 %v3798, 0.5
    %v3800 = vmul.f32 %v3794, %v3483
    %v3801 = vmul.f32 %v3790, %v3795
    %v3802 = vadd.f32 %v3800, %v3801
    %v3803 = vtanh.pop %v3802
    %v3804 = vmul.f32 %v3799, %v3803
    %3805 = vst [vmem:[#allocation22] sm:$0x3] %v3616
    %s3806 = scalar_lea.vmem [#allocation22], 2
    %3807 = vst [vmem:[%s3806] sm:$0x3] %v3804
    %3808 = vst [vmem:[#allocation24] sm:$0x3] %v3614
    %s3809 = scalar_lea.vmem [#allocation24], 2
    %3810 = vst [vmem:[%s3809] sm:$0x3] %v3802
    %v3811 = vpack.c.bf16 %v3804, %v3804
    %v3812 = vld [vmem:[#allocation20] sm:$0xff]
    %v3813 = vld [vmem:[#allocation20 + $0x8] sm:$0xff]
    %v3814 = vld [vmem:[#allocation20 + $0x10] sm:$0xff]
    %v3815 = vld [vmem:[#allocation20 + $0x18] sm:$0xff]
    %v3816 = vld [vmem:[#allocation20 + $0x20] sm:$0xff]
    %v3817 = vld [vmem:[#allocation20 + $0x28] sm:$0xff]
    %v3818 = vld [vmem:[#allocation20 + $0x30] sm:$0xff]
    %v3819 = vld [vmem:[#allocation20 + $0x38] sm:$0xff]
    %v3820 = vld [vmem:[#allocation20 + $0x40] sm:$0xff]
    %v3821 = vld [vmem:[#allocation20 + $0x48] sm:$0xff]
    %v3822 = vld [vmem:[#allocation20 + $0x50] sm:$0xff]
    %v3823 = vld [vmem:[#allocation20 + $0x58] sm:$0xff]
    %v3824 = vld [vmem:[#allocation20 + $0x60] sm:$0xff]
    %v3825 = vld [vmem:[#allocation20 + $0x68] sm:$0xff]
    %v3826 = vld [vmem:[#allocation20 + $0x70] sm:$0xff]
    %v3827 = vld [vmem:[#allocation20 + $0x78] sm:$0xff]
    %v3828 = vld [vmem:[#allocation20 + $0x80] sm:$0xff]
    %v3829 = vld [vmem:[#allocation20 + $0x88] sm:$0xff]
    %v3830 = vld [vmem:[#allocation20 + $0x90] sm:$0xff]
    %v3831 = vld [vmem:[#allocation20 + $0x98] sm:$0xff]
    %v3832 = vld [vmem:[#allocation20 + $0xa0] sm:$0xff]
    %v3833 = vld [vmem:[#allocation20 + $0xa8] sm:$0xff]
    %v3834 = vld [vmem:[#allocation20 + $0xb0] sm:$0xff]
    %v3835 = vld [vmem:[#allocation20 + $0xb8] sm:$0xff]
    %v3836 = vld [vmem:[#allocation20 + $0xc0] sm:$0xff]
    %v3837 = vld [vmem:[#allocation20 + $0xc8] sm:$0xff]
    %v3838 = vld [vmem:[#allocation20 + $0xd0] sm:$0xff]
    %v3839 = vld [vmem:[#allocation20 + $0xd8] sm:$0xff]
    %v3840 = vld [vmem:[#allocation20 + $0xe0] sm:$0xff]
    %v3841 = vld [vmem:[#allocation20 + $0xe8] sm:$0xff]
    %v3842 = vld [vmem:[#allocation20 + $0xf0] sm:$0xff]
    %v3843 = vld [vmem:[#allocation20 + $0xf8] sm:$0xff]
    %v3844 = vld [vmem:[%s11] sm:$0xf]
    %v3846 = vlaneseq
    %v3847 = vshrl.u32 %v3846, 7
    %v3848 = vsub.s32 0, %v3847
    %v3849 = vrot.slane %v3844, %v3848
    %v3850 = vlaneseq
    %v3851 = vshrl.u32 %v3850, 7
    %v3852 = vsub.s32 1, %v3851
    %v3853 = vrot.slane %v3844, %v3852
    %v3854 = vlaneseq
    %v3855 = vshrl.u32 %v3854, 7
    %v3856 = vsub.s32 2, %v3855
    %v3857 = vrot.slane %v3844, %v3856
    %v3858 = vlaneseq
    %v3859 = vshrl.u32 %v3858, 7
    %v3860 = vsub.s32 3, %v3859
    %v3861 = vrot.slane %v3844, %v3860
    %v3898 = vunpack.c.l.b16 %v3812
    %v3899 = vunpack.c.h.b16 %v3812
    %v3900 = vunpack.c.l.b16 %v3813
    %v3901 = vunpack.c.h.b16 %v3813
    %v3902 = vunpack.c.l.b16 %v3814
    %v3903 = vunpack.c.h.b16 %v3814
    %v3904 = vunpack.c.l.b16 %v3815
    %v3905 = vunpack.c.h.b16 %v3815
    %v3906 = vunpack.c.l.b16 %v3816
    %v3907 = vunpack.c.h.b16 %v3816
    %v3908 = vunpack.c.l.b16 %v3817
    %v3909 = vunpack.c.h.b16 %v3817
    %v3910 = vunpack.c.l.b16 %v3818
    %v3911 = vunpack.c.h.b16 %v3818
    %v3912 = vunpack.c.l.b16 %v3819
    %v3913 = vunpack.c.h.b16 %v3819
    %v3914 = vunpack.c.l.b16 %v3820
    %v3915 = vunpack.c.h.b16 %v3820
    %v3916 = vunpack.c.l.b16 %v3821
    %v3917 = vunpack.c.h.b16 %v3821
    %v3918 = vunpack.c.l.b16 %v3822
    %v3919 = vunpack.c.h.b16 %v3822
    %v3920 = vunpack.c.l.b16 %v3823
    %v3921 = vunpack.c.h.b16 %v3823
    %v3922 = vunpack.c.l.b16 %v3824
    %v3923 = vunpack.c.h.b16 %v3824
    %v3924 = vunpack.c.l.b16 %v3825
    %v3925 = vunpack.c.h.b16 %v3825
    %v3926 = vunpack.c.l.b16 %v3826
    %v3927 = vunpack.c.h.b16 %v3826
    %v3928 = vunpack.c.l.b16 %v3827
    %v3929 = vunpack.c.h.b16 %v3827
    %v3930 = vunpack.c.l.b16 %v3828
    %v3931 = vunpack.c.h.b16 %v3828
    %v3932 = vunpack.c.l.b16 %v3829
    %v3933 = vunpack.c.h.b16 %v3829
    %v3934 = vunpack.c.l.b16 %v3830
    %v3935 = vunpack.c.h.b16 %v3830
    %v3936 = vunpack.c.l.b16 %v3831
    %v3937 = vunpack.c.h.b16 %v3831
    %v3938 = vunpack.c.l.b16 %v3832
    %v3939 = vunpack.c.h.b16 %v3832
    %v3940 = vunpack.c.l.b16 %v3833
    %v3941 = vunpack.c.h.b16 %v3833
    %v3942 = vunpack.c.l.b16 %v3834
    %v3943 = vunpack.c.h.b16 %v3834
    %v3944 = vunpack.c.l.b16 %v3835
    %v3945 = vunpack.c.h.b16 %v3835
    %v3946 = vunpack.c.l.b16 %v3836
    %v3947 = vunpack.c.h.b16 %v3836
    %v3948 = vunpack.c.l.b16 %v3837
    %v3949 = vunpack.c.h.b16 %v3837
    %v3950 = vunpack.c.l.b16 %v3838
    %v3951 = vunpack.c.h.b16 %v3838
    %v3952 = vunpack.c.l.b16 %v3839
    %v3953 = vunpack.c.h.b16 %v3839
    %v3954 = vunpack.c.l.b16 %v3840
    %v3955 = vunpack.c.h.b16 %v3840
    %v3956 = vunpack.c.l.b16 %v3841
    %v3957 = vunpack.c.h.b16 %v3841
    %v3958 = vunpack.c.l.b16 %v3842
    %v3959 = vunpack.c.h.b16 %v3842
    %v3960 = vunpack.c.l.b16 %v3843
    %v3961 = vunpack.c.h.b16 %v3843
    %v3962 = vpack.c.b16 %v3902, %v3898
    %v3963 = vpack.c.b16 %v3903, %v3899
    %v3964 = vpack.c.b16 %v3904, %v3900
    %v3965 = vpack.c.b16 %v3905, %v3901
    %v3966 = vpack.c.b16 %v3910, %v3906
    %v3967 = vpack.c.b16 %v3911, %v3907
    %v3968 = vpack.c.b16 %v3912, %v3908
    %v3969 = vpack.c.b16 %v3913, %v3909
    %v3970 = vpack.c.b16 %v3918, %v3914
    %v3971 = vpack.c.b16 %v3919, %v3915
    %v3972 = vpack.c.b16 %v3920, %v3916
    %v3973 = vpack.c.b16 %v3921, %v3917
    %v3974 = vpack.c.b16 %v3926, %v3922
    %v3975 = vpack.c.b16 %v3927, %v3923
    %v3976 = vpack.c.b16 %v3928, %v3924
    %v3977 = vpack.c.b16 %v3929, %v3925
    %v3978 = vpack.c.b16 %v3934, %v3930
    %v3979 = vpack.c.b16 %v3935, %v3931
    %v3980 = vpack.c.b16 %v3936, %v3932
    %v3981 = vpack.c.b16 %v3937, %v3933
    %v3982 = vpack.c.b16 %v3942, %v3938
    %v3983 = vpack.c.b16 %v3943, %v3939
    %v3984 = vpack.c.b16 %v3944, %v3940
    %v3985 = vpack.c.b16 %v3945, %v3941
    %v3986 = vpack.c.b16 %v3950, %v3946
    %v3987 = vpack.c.b16 %v3951, %v3947
    %v3988 = vpack.c.b16 %v3952, %v3948
    %v3989 = vpack.c.b16 %v3953, %v3949
    %v3990 = vpack.c.b16 %v3958, %v3954
    %v3991 = vpack.c.b16 %v3959, %v3955
    %v3992 = vpack.c.b16 %v3960, %v3956
    %v3993 = vpack.c.b16 %v3961, %v3957
    %4026 = vmatprep.subr.bf16.mxu0 %v3991
    %4027 = vmatpush1.bf16.msra.mxu0 %v3990
    %4028 = vmatprep.subr.bf16.mxu0 %v3987
    %4029 = vmatpush1.bf16.msra.mxu0 %v3986
    %4030 = vmatprep.subr.bf16.mxu0 %v3983
    %4031 = vmatpush1.bf16.msra.mxu0 %v3982
    %4032 = vmatprep.subr.bf16.mxu0 %v3979
    %4033 = vmatpush1.bf16.msra.mxu0 %v3978
    %4034 = vmatprep.subr.bf16.mxu0 %v3975
    %4035 = vmatpush1.bf16.msra.mxu0 %v3974
    %4036 = vmatprep.subr.bf16.mxu0 %v3971
    %4037 = vmatpush1.bf16.msra.mxu0 %v3970
    %4038 = vmatprep.subr.bf16.mxu0 %v3967
    %4039 = vmatpush1.bf16.msra.mxu0 %v3966
    %4040 = vmatprep.subr.bf16.mxu0 %v3963
    %4041 = vmatpush1.bf16.msra.mxu0 %v3962
    %4042 = vmatprep.subr.bf16.mxu0 0
    %4043 = vmatpush2.bf16.msra.mxu0 0
    %4044 = vmatprep.subr.bf16.mxu0 0
    %4045 = vmatpush2.bf16.msra.mxu0 0
    %4046 = vmatprep.subr.bf16.mxu0 0
    %4047 = vmatpush2.bf16.msra.mxu0 0
    %4048 = vmatprep.subr.bf16.mxu0 0
    %4049 = vmatpush2.bf16.msra.mxu0 0
    %4050 = vmatprep.subr.bf16.mxu0 0
    %4051 = vmatpush2.bf16.msra.mxu0 0
    %4052 = vmatprep.subr.bf16.mxu0 0
    %4053 = vmatpush2.bf16.msra.mxu0 0
    %4054 = vmatprep.subr.bf16.mxu0 0
    %4055 = vmatpush2.bf16.msra.mxu0 0
    %4056 = vmatprep.subr.bf16.mxu0 0
    %4057 = vmatpush2.bf16.msra.mxu0 0
    %4058 = vmatprep.mubr.bf16.mxu0 0
    %4059 = vmatmul.mubr.bf16.gmra.mxu0 %v3811
    %v4060 = vpop.f32.mrf.mxu0
    %v4061 = vadd.f32 %v3849, %v4060
    %v4062 = vpop.f32.mrf.mxu0
    %v4063 = vadd.f32 %v3853, %v4062
    %v4064 = vpop.f32.mrf.mxu0
    %v4065 = vpop.f32.mrf.mxu0
    %4066 = vdwg.mxu0
    %4067 = vmatprep.subr.bf16.mxu0 %v3993
    %4068 = vmatpush1.bf16.msra.mxu0 %v3992
    %4069 = vmatprep.subr.bf16.mxu0 %v3989
    %4070 = vmatpush1.bf16.msra.mxu0 %v3988
    %4071 = vmatprep.subr.bf16.mxu0 %v3985
    %4072 = vmatpush1.bf16.msra.mxu0 %v3984
    %4073 = vmatprep.subr.bf16.mxu0 %v3981
    %4074 = vmatpush1.bf16.msra.mxu0 %v3980
    %4075 = vmatprep.subr.bf16.mxu0 %v3977
    %4076 = vmatpush1.bf16.msra.mxu0 %v3976
    %4077 = vmatprep.subr.bf16.mxu0 %v3973
    %4078 = vmatpush1.bf16.msra.mxu0 %v3972
    %4079 = vmatprep.subr.bf16.mxu0 %v3969
    %4080 = vmatpush1.bf16.msra.mxu0 %v3968
    %4081 = vmatprep.subr.bf16.mxu0 %v3965
    %4082 = vmatpush1.bf16.msra.mxu0 %v3964
    %4083 = vmatprep.subr.bf16.mxu0 0
    %4084 = vmatpush2.bf16.msra.mxu0 0
    %4085 = vmatprep.subr.bf16.mxu0 0
    %4086 = vmatpush2.bf16.msra.mxu0 0
    %4087 = vmatprep.subr.bf16.mxu0 0
    %4088 = vmatpush2.bf16.msra.mxu0 0
    %4089 = vmatprep.subr.bf16.mxu0 0
    %4090 = vmatpush2.bf16.msra.mxu0 0
    %4091 = vmatprep.subr.bf16.mxu0 0
    %4092 = vmatpush2.bf16.msra.mxu0 0
    %4093 = vmatprep.subr.bf16.mxu0 0
    %4094 = vmatpush2.bf16.msra.mxu0 0
    %4095 = vmatprep.subr.bf16.mxu0 0
    %4096 = vmatpush2.bf16.msra.mxu0 0
    %4097 = vmatprep.subr.bf16.mxu0 0
    %4098 = vmatpush2.bf16.msra.mxu0 0
    %4099 = vmatprep.mubr.bf16.mxu0 0
    %4100 = vmatmul.mubr.bf16.gmra.mxu0 %v3811
    %v4101 = vpop.f32.mrf.mxu0
    %v4102 = vadd.f32 %v3857, %v4101
    %v4103 = vpop.f32.mrf.mxu0
    %v4104 = vadd.f32 %v3861, %v4103
    %v4105 = vpop.f32.mrf.mxu0
    %v4106 = vpop.f32.mrf.mxu0
    %4107 = vdwg.mxu0
    %v4112 = vcombine.low %v4061, %v4063
    %v4113 = vcombine.low %v4102, %v4104
    %v4115 = vunpack.c.l.s4 1983009808
    %v4116 = vunpack.c.0.s8 %v4115
    %v4117 = vlaneseq
    %v4118 = vshrl.u32 %v4117, 7
    %v4119 = vsub.s32 %v4116, %v4118
    %v4120 = vrot.slane %v4112, %v4119
    %v4122 = vunpack.c.l.s4 1983009808
    %v4123 = vunpack.c.0.s8 %v4122
    %v4124 = vlaneseq
    %v4125 = vshrl.u32 %v4124, 7
    %v4126 = vsub.s32 %v4123, %v4125
    %v4127 = vrot.slane %v4113, %v4126
    %v4128 = vcombine.low %v4120, %v4127
    %4130 = vst [vmem:[#allocation21] sm:$0xff] %v4128
    // Predicated region
    $region90: #{rnn_forward.1} parent=1 // pred_check
      _
    $region91: #{rnn_forward.1} parent=1 // pred_check_branch
      %4132 = sbr.rel (0) target = $region93
    $region92: #{rnn_forward.1} parent=1 // pred_region
      %s4134 = ssub.s32 128, 128
      %4135 = vsyncadd [#allocation6], %s4134
      %s4137 = sshll.u32 [#allocation21], 4
      %s4138 = int_to_ptr.vmem [resolvable:$true] %s4137
      %4140 = dma.vmem_to_hbm [thread:$0]  %s4138, 128, %s12, [#allocation6]
    $region93: #{rnn_forward.1} parent=1 // pred_fallthru
      _
    // Predicated region
    $region94: #{rnn_forward.1} parent=1 // pred_check
      _
    $region95: #{rnn_forward.1} parent=1 // pred_check_branch
      %4142 = sbr.rel (0) target = $region97
    $region96: #{rnn_forward.1} parent=1 // pred_region
      %s4144 = ssub.s32 64, 64
      %4145 = vsyncadd [#allocation23], %s4144
      %s4146 = sshll.u32 [#allocation22], 4
      %s4147 = int_to_ptr.vmem [resolvable:$true] %s4146
      %4152 = dma.vmem_to_hbm [thread:$0]  %s4147, 64, %s13, [#allocation23], 32, 32, 2
    $region97: #{rnn_forward.1} parent=1 // pred_fallthru
      _
    // Predicated region
    $region98: #{rnn_forward.1} parent=1 // pred_check
      _
    $region99: #{rnn_forward.1} parent=1 // pred_check_branch
      %4154 = sbr.rel (0) target = $region101
    $region100: #{rnn_forward.1} parent=1 // pred_region
      %s4156 = ssub.s32 64, 64
      %4157 = vsyncadd [#allocation23], %s4156
      %s4158 = sshll.u32 [#allocation24], 4
      %s4159 = int_to_ptr.vmem [resolvable:$true] %s4158
      %4164 = dma.vmem_to_hbm [thread:$0]  %s4159, 64, %s14, [#allocation23], 32, 32, 2
    $region101: #{rnn_forward.1} parent=1 // pred_fallthru
      _
    // Predicated region
    $region102: #{rnn_forward.1} parent=1 // pred_check
      _
    $region103: #{rnn_forward.1} parent=1 // pred_check_branch
      %4166 = sbr.rel (0) target = $region105
    $region104: #{rnn_forward.1} parent=1 // pred_region
      %4167 = dma.done [#allocation6], 128
    $region105: #{rnn_forward.1} parent=1 // pred_fallthru
      _
    // Predicated region
    $region106: #{rnn_forward.1} parent=1 // pred_check
      _
    $region107: #{rnn_forward.1} parent=1 // pred_check_branch
      %4169 = sbr.rel (0) target = $region109
    $region108: #{rnn_forward.1} parent=1 // pred_region
      %4170 = dma.done [#allocation23], 64
    $region109: #{rnn_forward.1} parent=1 // pred_fallthru
      _
    // Predicated region
    $region110: #{rnn_forward.1} parent=1 // pred_check
      _
    $region111: #{rnn_forward.1} parent=1 // pred_check_branch
      %4172 = sbr.rel (0) target = $region113
    $region112: #{rnn_forward.1} parent=1 // pred_region
      %4173 = dma.done [#allocation23], 64
    $region113: #{rnn_forward.1} parent=1 // pred_fallthru
      _
    %4174 = vsyncpa [#allocation5], 1
    %4175 = vsyncpa [#allocation10], 1
    %4176 = vsyncpa [#allocation13], 1
    %4177 = vsyncpa [#allocation16], 1
    %4178 = vsyncpa [#allocation19], 1
    %4179 = vsyncpa [#allocation6], 1
    %4180 = vsyncpa [#allocation23], 1
    %4181 = vsyncpa [#allocation7], 1

</llo_original>
